<compile_context>
chip_gen: v5e
topology: v5e:2x2
jax: 0.10.0
libtpu: 0.0.40
codegen_flags: <defaults>
</compile_context>

<pallas_src>
import functools

import jax
import jax.numpy as jnp
from jax import lax
from jax.experimental import pallas as pl
from jax.experimental.pallas import tpu as pltpu

VOCAB = 30522


# ---------------------------------------------------------------------------
# Pallas kernels
# ---------------------------------------------------------------------------
def gates_proj_kernel(x_ref, w_ref, b_ref, o_ref):
    """Batched input projection for BOTH directions: (TM, 2D) @ (2D, 8H) + bias.

    x is [x_fwd | x_bwd_reversed] concatenated on features, W is block-diagonal and
    gate-interleaved, so the output already has the combined-gate layout used by the
    recurrence kernel.  bf16 operands, f32 accumulation.
    """
    o_ref[...] = (jnp.dot(x_ref[...], w_ref[...], preferred_element_type=jnp.float32)
                  + b_ref[...])


def bilstm_kernel(gx_ref, len_ref, whh_ref, out_ref, h_sc, c_sc, *, hidden, time_tile):
    """Fused bidirectional LSTM recurrence over one time tile.

    gx_ref:  (TT, B, 8H) precomputed x-projection (+bias), combined-gate layout
             [i_f, i_b, f_f, f_b, g_f, g_b, o_f, o_b] each of width H.
    len_ref: (B, 1) int32 valid lengths (descending-sorted batch).
    whh_ref: (2H, 8H) bf16 block-structured recurrent weights (rows 0:H = h_fwd,
             rows H:2H = h_bwd; columns in the combined-gate layout).
    out_ref: (TT, B, 2H) per-step [h_fwd | h_bwd_reversed] (zero beyond each length).
    h_sc/c_sc: (B, 2H) f32 state, carried across the T-grid.
    """
    H = hidden
    H2 = 2 * H

    @pl.when(pl.program_id(0) == 0)
    def _():
        h_sc[...] = jnp.zeros_like(h_sc)
        c_sc[...] = jnp.zeros_like(c_sc)

    lens = len_ref[...]                       # (B, 1) int32
    t_base = pl.program_id(0) * time_tile

    def step(s, carry):
        # Only the recurrent matmul lives on the serial critical path.
        gates = gx_ref[s] + jnp.dot(h_sc[...].astype(jnp.bfloat16), whh_ref[...],
                                    preferred_element_type=jnp.float32)   # (B, 8H)
        # Gate slices land on 2H-lane boundaries (128 lanes when dim is a multiple of 32).
        i_g = jax.nn.sigmoid(gates[:, 0 * H2:1 * H2])
        f_g = jax.nn.sigmoid(gates[:, 1 * H2:2 * H2])
        g_g = jnp.tanh(gates[:, 2 * H2:3 * H2])
        o_g = jax.nn.sigmoid(gates[:, 3 * H2:4 * H2])
        c_new = f_g * c_sc[...] + i_g * g_g
        h_new = o_g * jnp.tanh(c_new)
        mask = (t_base + s) < lens            # (B, 1) bool, packed-sequence masking
        h_sc[...] = jnp.where(mask, h_new, h_sc[...])
        c_sc[...] = jnp.where(mask, c_new, c_sc[...])
        # Lane-dense (B, 2H) store: padded timesteps are exactly zero (pack/pad semantics).
        out_ref[s] = jnp.where(mask, h_new, jnp.zeros_like(h_new))
        return carry

    lax.fori_loop(0, time_tile, step, 0, unroll=True)


# ---------------------------------------------------------------------------
# Wrappers around pallas_call
# ---------------------------------------------------------------------------
def run_gates_projection(x_flat_bf16, w_ih_cat_bf16, b_cat_f32):
    """(M, 2D) bf16 @ (2D, 8H) bf16 + (1, 8H) f32 -> (M, 8H) f32, tiled over M."""
    M, K = x_flat_bf16.shape
    G = w_ih_cat_bf16.shape[1]
    TM = 256 if (M % 256 == 0) else M          # 256-row tiles for the MXU at real sizes
    return pl.pallas_call(
        gates_proj_kernel,
        out_shape=jax.ShapeDtypeStruct((M, G), jnp.float32),
        grid=(M // TM,),
        in_specs=[
            pl.BlockSpec((TM, K), lambda i: (i, 0)),
            pl.BlockSpec((K, G), lambda i: (0, 0)),
            pl.BlockSpec((1, G), lambda i: (0, 0)),
        ],
        out_specs=pl.BlockSpec((TM, G), lambda i: (i, 0)),
        compiler_params=pltpu.CompilerParams(dimension_semantics=("parallel",)),
    )(x_flat_bf16, w_ih_cat_bf16, b_cat_f32)


def _time_tile(T):
    for tt in (32, 16, 8):
        if T % tt == 0:
            return tt
    return T


def run_bilstm(gx_tm, lengths, w_hh_cat_bf16, hidden):
    """gx_tm: (T, B, 8H) f32, lengths: (B,) int32 -> (T, B, 2H) f32 ([fwd | bwd_rev])."""
    T, B, G = gx_tm.shape
    H = hidden
    H2 = 2 * H
    TT = _time_tile(T)
    kernel = functools.partial(bilstm_kernel, hidden=H, time_tile=TT)
    lens2d = lengths.astype(jnp.int32).reshape(B, 1)
    return pl.pallas_call(
        kernel,
        out_shape=jax.ShapeDtypeStruct((T, B, H2), jnp.float32),
        grid=(T // TT,),
        in_specs=[
            pl.BlockSpec((TT, B, G), lambda i: (i, 0, 0)),
            pl.BlockSpec((B, 1), lambda i: (0, 0)),
            pl.BlockSpec((H2, G), lambda i: (0, 0)),
        ],
        out_specs=pl.BlockSpec((TT, B, H2), lambda i: (i, 0, 0)),
        scratch_shapes=[
            pltpu.VMEM((B, H2), jnp.float32),   # h state (both directions)
            pltpu.VMEM((B, H2), jnp.float32),   # c state (both directions)
        ],
        compiler_params=pltpu.CompilerParams(dimension_semantics=("arbitrary",)),
    )(gx_tm, lens2d, w_hh_cat_bf16)


# ---------------------------------------------------------------------------
# Weight repacking (combined, gate-interleaved layout)
# ---------------------------------------------------------------------------
def _combined_weights(params, dim):
    """Build the fused-direction weight layout.

    Combined gate columns (width 8H): [i_f, i_b, f_f, f_b, g_f, g_b, o_f, o_b], each H wide.
    W_ih_cat is (2D, 8H) block-diagonal (rows 0:D feed fwd blocks, rows D:2D feed bwd blocks)
    so a single matmul on [x_fwd | x_bwd_rev] produces both directions' gate inputs.
    W_hh_cat is (2H, 8H) with rows 0:H = h_fwd, rows H:2H = h_bwd.
    """
    D = dim
    H = 2 * dim

    wih_f = params["wih_f"].T.reshape(D, 4, H)           # (D, gate, H)
    wih_b = params["wih_b"].T.reshape(D, 4, H)
    z_ih = jnp.zeros_like(wih_f)
    w_ih_top = jnp.stack([wih_f, z_ih], axis=2).reshape(D, 8 * H)
    w_ih_bot = jnp.stack([z_ih, wih_b], axis=2).reshape(D, 8 * H)
    w_ih_cat = jnp.concatenate([w_ih_top, w_ih_bot], axis=0).astype(jnp.bfloat16)

    b_cat = jnp.stack([params["b_f"].reshape(4, H),
                       params["b_b"].reshape(4, H)], axis=1).reshape(1, 8 * H)
    b_cat = b_cat.astype(jnp.float32)

    whh_f = params["whh_f"].T.reshape(H, 4, H)
    whh_b = params["whh_b"].T.reshape(H, 4, H)
    z_hh = jnp.zeros_like(whh_f)
    w_hh_top = jnp.stack([whh_f, z_hh], axis=2).reshape(H, 8 * H)
    w_hh_bot = jnp.stack([z_hh, whh_b], axis=2).reshape(H, 8 * H)
    w_hh_cat = jnp.concatenate([w_hh_top, w_hh_bot], axis=0).astype(jnp.bfloat16)

    return w_ih_cat, b_cat, w_hh_cat


# ---------------------------------------------------------------------------
# Parameters (deterministic synthetic init; matches PyTorch module's shapes)
# ---------------------------------------------------------------------------
def init_params(key, dim):
    H = dim * 2
    ks = jax.random.split(key, 11)
    k = 1.0 / (H ** 0.5)

    def unif(kk, shape, scale):
        return jax.random.uniform(kk, shape, jnp.float32, -scale, scale)

    params = {
        "embedding": jax.random.normal(ks[0], (VOCAB, dim), jnp.float32),
        # forward direction (gate order i, f, g, o, PyTorch convention)
        "wih_f": unif(ks[1], (4 * H, dim), k),
        "whh_f": unif(ks[2], (4 * H, H), k),
        "b_f": unif(ks[3], (4 * H,), k) + unif(ks[4], (4 * H,), k),
        # backward direction
        "wih_b": unif(ks[5], (4 * H, dim), k),
        "whh_b": unif(ks[6], (4 * H, H), k),
        "b_b": unif(ks[7], (4 * H,), k) + unif(ks[8], (4 * H,), k),
        # qa_outputs: Linear(4*dim, 2)
        "w_qa": unif(ks[9], (2, 4 * dim), 0.1),
        "b_qa": unif(ks[10], (2,), 0.1),
    }
    return params


# ---------------------------------------------------------------------------
# Forward pass (glue + Pallas kernels) — fully jittable (no host sync)
# ---------------------------------------------------------------------------
@jax.jit
def lstm_model_forward(params, input_ids, attention_mask=None, token_type_ids=None):
    # attention_mask / token_type_ids are unused, as in the PyTorch forward.
    B, T = input_ids.shape
    dim = params["embedding"].shape[1]
    H = 2 * dim          # LSTM hidden size
    H2 = 2 * H           # bidirectional output width (= 4*dim)

    # lengths / sort descending (pack_padded_sequence prep)
    lengths = jnp.sum(jnp.where(input_ids != 0, 1, 0), axis=1)
    sort_idx = jnp.argsort(-lengths)
    sorted_lengths = lengths[sort_idx]
    ids_sorted = input_ids[sort_idx]

    # embedding gather (XLA glue)
    embeds = params["embedding"][ids_sorted]                      # (B, T, D)

    # per-sequence reversed copy for the backward direction (ends aligned to t=0)
    t_idx = jnp.arange(T)[None, :]                                # (1, T)
    rev_idx = jnp.clip(sorted_lengths[:, None] - 1 - t_idx, 0, T - 1)   # (B, T)
    rev_idx3 = jnp.broadcast_to(rev_idx[:, :, None], (B, T, dim))
    embeds_rev = jnp.take_along_axis(embeds, rev_idx3, axis=1)

    # time-major, feature-concat [fwd | bwd_rev] for the single fused input projection
    x_cat = jnp.concatenate([embeds, embeds_rev], axis=-1)        # (B, T, 2D)
    x_flat = jnp.transpose(x_cat, (1, 0, 2)).reshape(T * B, 2 * dim).astype(jnp.bfloat16)

    w_ih_cat, b_cat, w_hh_cat = _combined_weights(params, dim)

    # Kernel 1: hoisted input projection for all timesteps and both directions
    gx = run_gates_projection(x_flat, w_ih_cat, b_cat)            # (T*B, 8H) f32
    gx_tm = gx.reshape(T, B, 8 * H)

    # Kernel 2: fused bidirectional recurrence (only h @ W_hh inside the time loop)
    out_tm = run_bilstm(gx_tm, sorted_lengths, w_hh_cat, H)       # (T, B, 2H)
    out = jnp.transpose(out_tm, (1, 0, 2))                        # (B, T, 2H)

    out_fwd = out[:, :, :H]
    out_bwd_rev = out[:, :, H:]
    # un-reverse backward outputs to original time order, zero padded steps
    rev_idx3h = jnp.broadcast_to(rev_idx[:, :, None], (B, T, H))
    out_bwd = jnp.take_along_axis(out_bwd_rev, rev_idx3h, axis=1)
    valid = (t_idx < sorted_lengths[:, None])[:, :, None]
    out_bwd = jnp.where(valid, out_bwd, 0.0)

    # bidirectional concat, dropout == identity (eval)
    h_bi = jnp.concatenate([out_fwd, out_bwd], axis=-1)           # (B, T, 4*dim)

    # qa_outputs: tiny (4*dim, 2) projection — plain XLA dot beats a Pallas call here.
    logits = jnp.einsum("btf,fo->bto", h_bi, params["w_qa"].T) + params["b_qa"]
    start_logits = logits[..., 0]
    end_logits = logits[..., 1]

    # NOTE: PyTorch pad_packed_sequence truncates to the max in-batch length; we return
    # full-T logits (padded positions carry only the qa bias) so the forward stays
    # jittable with no device->host sync.  Rows are in descending-length sorted order,
    # exactly like the PyTorch forward (which never unsorts).
    return start_logits, end_logits


# ---------------------------------------------------------------------------
if __name__ == "__main__":
    dim = 32           # hidden_size = 64, bidirectional output = 128, qa in_features = 128
    B, T = 2, 8

    key = jax.random.PRNGKey(0)
    k_params, k_ids = jax.random.split(key)
    params = init_params(k_params, dim)

    # input_ids: row 0 has length 8, row 1 has length 5 (0 == padding token)
    ids = jax.random.randint(k_ids, (B, T), 1, VOCAB, dtype=jnp.int32)
    pad_mask = jnp.array([[1, 1, 1, 1, 1, 1, 1, 1],
                          [1, 1, 1, 1, 1, 0, 0, 0]], dtype=jnp.int32)
    input_ids = ids * pad_mask
    attention_mask = pad_mask
    token_type_ids = jnp.zeros((B, T), dtype=jnp.int32)

    start_logits, end_logits = lstm_model_forward(
        params, input_ids, attention_mask, token_type_ids)
    jax.block_until_ready((start_logits, end_logits))
    print("KERNEL_OK")
</pallas_src>

<mosaic_0001>
module attributes {stable_mosaic.version = 11 : i64} {
  func.func @gates_proj_kernel(%arg0: i32, %arg1: memref<16x64xbf16, #tpu.memory_space<vmem>>, %arg2: memref<64x512xbf16, #tpu.memory_space<vmem>>, %arg3: memref<1x512xf32, #tpu.memory_space<vmem>>, %arg4: memref<16x512xf32, #tpu.memory_space<vmem>>) attributes {dimension_semantics = [#tpu.dimension_semantics<parallel>], iteration_bounds = array<i64: 1>, scalar_prefetch = 0 : i64, scratch_operands = 0 : i64, tpu.core_type = #tpu.core_type<tc>, window_params = [{transform_indices = @transform_0, window_bounds = array<i64: 16, 64>}, {pipeline_mode = #tpu.pipeline_mode<synchronous>, transform_indices = @transform_1, window_bounds = array<i64: 64, 512>}, {pipeline_mode = #tpu.pipeline_mode<synchronous>, transform_indices = @transform_2, window_bounds = array<i64: 1, 512>}, {transform_indices = @transform_3, window_bounds = array<i64: 16, 512>}]} {
    %c0 = arith.constant 0 : index
    %c0_0 = arith.constant 0 : index
    %0 = vector.load %arg1[%c0, %c0_0] : memref<16x64xbf16, #tpu.memory_space<vmem>>, vector<16x64xbf16>
    %c0_1 = arith.constant 0 : index
    %c0_2 = arith.constant 0 : index
    %1 = vector.load %arg2[%c0_1, %c0_2] : memref<64x512xbf16, #tpu.memory_space<vmem>>, vector<64x512xbf16>
    %cst = arith.constant dense<0.000000e+00> : vector<16x512xf32>
    %2 = tpu.matmul %0, %1, %cst {dimension_numbers = #tpu.dot_dimension_numbers<[1], [0], [0], [1], [0, 0, 1, 1], [], []>} : vector<16x64xbf16>, vector<64x512xbf16>, vector<16x512xf32> -> vector<16x512xf32>
    %c0_3 = arith.constant 0 : index
    %c0_4 = arith.constant 0 : index
    %3 = vector.load %arg3[%c0_3, %c0_4] : memref<1x512xf32, #tpu.memory_space<vmem>>, vector<1x512xf32>
    %4 = vector.broadcast %3 : vector<1x512xf32> to vector<16x512xf32>
    %5 = arith.addf %2, %4 : vector<16x512xf32>
    %c0_5 = arith.constant 0 : index
    %c0_6 = arith.constant 0 : index
    %6 = vector.load %arg4[%c0_5, %c0_6] : memref<16x512xf32, #tpu.memory_space<vmem>>, vector<16x512xf32>
    tpu.vector_store %arg4[%c0_5, %c0_6], %5 {strides = array<i32>} : memref<16x512xf32, #tpu.memory_space<vmem>>, vector<16x512xf32>,
    return
  }
  func.func @transform_0(%arg0: i32) -> (i32, i32) {
    %c0_i32 = arith.constant 0 : i32
    %c0_i32_0 = arith.constant 0 : i32
    return %arg0, %c0_i32 : i32, i32
  }
  func.func @transform_1(%arg0: i32) -> (i32, i32) {
    %c0_i32 = arith.constant 0 : i32
    %c0_i32_0 = arith.constant 0 : i32
    %c0_i32_1 = arith.constant 0 : i32
    return %c0_i32, %c0_i32_0 : i32, i32
  }
  func.func @transform_2(%arg0: i32) -> (i32, i32) {
    %c0_i32 = arith.constant 0 : i32
    %c0_i32_0 = arith.constant 0 : i32
    %c0_i32_1 = arith.constant 0 : i32
    return %c0_i32, %c0_i32_0 : i32, i32
  }
  func.func @transform_3(%arg0: i32) -> (i32, i32) {
    %c0_i32 = arith.constant 0 : i32
    %c0_i32_0 = arith.constant 0 : i32
    return %arg0, %c0_i32 : i32, i32
  }
}

module attributes {stable_mosaic.version = 11 : i64} {
  func.func @bilstm_kernel(%arg0: i32, %arg1: memref<8x2x512xf32, #tpu.memory_space<vmem>>, %arg2: memref<2x1xi32, #tpu.memory_space<vmem>>, %arg3: memref<128x512xbf16, #tpu.memory_space<vmem>>, %arg4: memref<8x2x128xf32, #tpu.memory_space<vmem>>, %arg5: memref<2x128xf32, #tpu.memory_space<vmem>>, %arg6: memref<2x128xf32, #tpu.memory_space<vmem>>) attributes {dimension_semantics = [#tpu.dimension_semantics<arbitrary>], iteration_bounds = array<i64: 1>, scalar_prefetch = 0 : i64, scratch_operands = 2 : i64, tpu.core_type = #tpu.core_type<tc>, window_params = [{transform_indices = @transform_0, window_bounds = array<i64: 8, 2, 512>}, {pipeline_mode = #tpu.pipeline_mode<synchronous>, transform_indices = @transform_1, window_bounds = array<i64: 2, 1>}, {pipeline_mode = #tpu.pipeline_mode<synchronous>, transform_indices = @transform_2, window_bounds = array<i64: 128, 512>}, {transform_indices = @transform_3, window_bounds = array<i64: 8, 2, 128>}]} {
    %c0_i32 = arith.constant 0 : i32
    %0 = arith.cmpi eq, %arg0, %c0_i32 : i32
    %1 = arith.extui %0 : i1 to i32
    %c0_i32_0 = arith.constant 0 : i32
    %2 = arith.cmpi ne, %1, %c0_i32_0 : i32
    scf.if %2 {
      %cst_187 = arith.constant 0.000000e+00 : f32
      %445 = vector.broadcast %cst_187 : f32 to vector<2x128xf32>
      %c0_188 = arith.constant 0 : index
      %c0_189 = arith.constant 0 : index
      %446 = vector.load %arg5[%c0_188, %c0_189] : memref<2x128xf32, #tpu.memory_space<vmem>>, vector<2x128xf32>
      tpu.vector_store %arg5[%c0_188, %c0_189], %445 {strides = array<i32>} : memref<2x128xf32, #tpu.memory_space<vmem>>, vector<2x128xf32>,
      %cst_190 = arith.constant 0.000000e+00 : f32
      %447 = vector.broadcast %cst_190 : f32 to vector<2x128xf32>
      %c0_191 = arith.constant 0 : index
      %c0_192 = arith.constant 0 : index
      %448 = vector.load %arg6[%c0_191, %c0_192] : memref<2x128xf32, #tpu.memory_space<vmem>>, vector<2x128xf32>
      tpu.vector_store %arg6[%c0_191, %c0_192], %447 {strides = array<i32>} : memref<2x128xf32, #tpu.memory_space<vmem>>, vector<2x128xf32>,
    } else {
    }
    %c0 = arith.constant 0 : index
    %c0_1 = arith.constant 0 : index
    %3 = vector.load %arg2[%c0, %c0_1] : memref<2x1xi32, #tpu.memory_space<vmem>>, vector<2x1xi32>
    %c8_i32 = arith.constant 8 : i32
    %4 = arith.muli %arg0, %c8_i32 : i32
    %c0_i32_2 = arith.constant 0 : i32
    %5 = arith.index_cast %c0_i32_2 : i32 to index
    %c0_3 = arith.constant 0 : index
    %c0_4 = arith.constant 0 : index
    %6 = vector.load %arg1[%5, %c0_3, %c0_4] : memref<8x2x512xf32, #tpu.memory_space<vmem>>, vector<1x2x512xf32>
    %7 = vector.shape_cast %6 : vector<1x2x512xf32> to vector<2x512xf32>
    %c0_5 = arith.constant 0 : index
    %c0_6 = arith.constant 0 : index
    %8 = vector.load %arg5[%c0_5, %c0_6] : memref<2x128xf32, #tpu.memory_space<vmem>>, vector<2x128xf32>
    %9 = arith.truncf %8 : vector<2x128xf32> to vector<2x128xbf16>
    %c0_7 = arith.constant 0 : index
    %c0_8 = arith.constant 0 : index
    %10 = vector.load %arg3[%c0_7, %c0_8] : memref<128x512xbf16, #tpu.memory_space<vmem>>, vector<128x512xbf16>
    %cst = arith.constant dense<0.000000e+00> : vector<2x512xf32>
    %11 = tpu.matmul %9, %10, %cst {dimension_numbers = #tpu.dot_dimension_numbers<[1], [0], [0], [1], [0, 0, 1, 1], [], []>} : vector<2x128xbf16>, vector<128x512xbf16>, vector<2x512xf32> -> vector<2x512xf32>
    %12 = arith.addf %7, %11 : vector<2x512xf32>
    %13 = vector.extract_strided_slice %12 {offsets = [0, 0], sizes = [2, 128], strides = [1, 1]} : vector<2x512xf32> to vector<2x128xf32>
    %14 = arith.negf %13 : vector<2x128xf32>
    %15 = math.exp %14 : vector<2x128xf32>
    %cst_9 = arith.constant 1.000000e+00 : f32
    %16 = vector.broadcast %cst_9 : f32 to vector<2x128xf32>
    %17 = arith.addf %16, %15 : vector<2x128xf32>
    %18 = arith.divf %16, %17 : vector<2x128xf32>
    %19 = vector.extract_strided_slice %12 {offsets = [0, 128], sizes = [2, 128], strides = [1, 1]} : vector<2x512xf32> to vector<2x128xf32>
    %20 = arith.negf %19 : vector<2x128xf32>
    %21 = math.exp %20 : vector<2x128xf32>
    %cst_10 = arith.constant 1.000000e+00 : f32
    %22 = vector.broadcast %cst_10 : f32 to vector<2x128xf32>
    %23 = arith.addf %22, %21 : vector<2x128xf32>
    %24 = arith.divf %22, %23 : vector<2x128xf32>
    %25 = vector.extract_strided_slice %12 {offsets = [0, 256], sizes = [2, 128], strides = [1, 1]} : vector<2x512xf32> to vector<2x128xf32>
    %26 = math.tanh %25 : vector<2x128xf32>
    %27 = vector.extract_strided_slice %12 {offsets = [0, 384], sizes = [2, 128], strides = [1, 1]} : vector<2x512xf32> to vector<2x128xf32>
    %28 = arith.negf %27 : vector<2x128xf32>
    %29 = math.exp %28 : vector<2x128xf32>
    %cst_11 = arith.constant 1.000000e+00 : f32
    %30 = vector.broadcast %cst_11 : f32 to vector<2x128xf32>
    %31 = arith.addf %30, %29 : vector<2x128xf32>
    %32 = arith.divf %30, %31 : vector<2x128xf32>
    %c0_12 = arith.constant 0 : index
    %c0_13 = arith.constant 0 : index
    %33 = vector.load %arg6[%c0_12, %c0_13] : memref<2x128xf32, #tpu.memory_space<vmem>>, vector<2x128xf32>
    %34 = arith.mulf %24, %33 : vector<2x128xf32>
    %35 = arith.mulf %18, %26 : vector<2x128xf32>
    %36 = arith.addf %34, %35 : vector<2x128xf32>
    %37 = math.tanh %36 : vector<2x128xf32>
    %38 = arith.mulf %32, %37 : vector<2x128xf32>
    %39 = arith.addi %4, %c0_i32_2 : i32
    %40 = vector.broadcast %39 : i32 to vector<2x1xi32>
    %41 = arith.cmpi slt, %40, %3 : vector<2x1xi32>
    %c0_14 = arith.constant 0 : index
    %c0_15 = arith.constant 0 : index
    %42 = vector.load %arg5[%c0_14, %c0_15] : memref<2x128xf32, #tpu.memory_space<vmem>>, vector<2x128xf32>
    %43 = vector.shape_cast %41 : vector<2x1xi1> to vector<2x1xi1>
    %44 = vector.broadcast %43 : vector<2x1xi1> to vector<2x128xi1>
    %45 = arith.select %44, %38, %42 : vector<2x128xi1>, vector<2x128xf32>
    %c0_16 = arith.constant 0 : index
    %c0_17 = arith.constant 0 : index
    %46 = vector.load %arg5[%c0_16, %c0_17] : memref<2x128xf32, #tpu.memory_space<vmem>>, vector<2x128xf32>
    tpu.vector_store %arg5[%c0_16, %c0_17], %45 {strides = array<i32>} : memref<2x128xf32, #tpu.memory_space<vmem>>, vector<2x128xf32>,
    %c0_18 = arith.constant 0 : index
    %c0_19 = arith.constant 0 : index
    %47 = vector.load %arg6[%c0_18, %c0_19] : memref<2x128xf32, #tpu.memory_space<vmem>>, vector<2x128xf32>
    %48 = vector.shape_cast %41 : vector<2x1xi1> to vector<2x1xi1>
    %49 = vector.broadcast %48 : vector<2x1xi1> to vector<2x128xi1>
    %50 = arith.select %49, %36, %47 : vector<2x128xi1>, vector<2x128xf32>
    %c0_20 = arith.constant 0 : index
    %c0_21 = arith.constant 0 : index
    %51 = vector.load %arg6[%c0_20, %c0_21] : memref<2x128xf32, #tpu.memory_space<vmem>>, vector<2x128xf32>
    tpu.vector_store %arg6[%c0_20, %c0_21], %50 {strides = array<i32>} : memref<2x128xf32, #tpu.memory_space<vmem>>, vector<2x128xf32>,
    %cst_22 = arith.constant 0.000000e+00 : f32
    %52 = vector.broadcast %cst_22 : f32 to vector<2x128xf32>
    %53 = vector.shape_cast %41 : vector<2x1xi1> to vector<2x1xi1>
    %54 = vector.broadcast %53 : vector<2x1xi1> to vector<2x128xi1>
    %55 = arith.select %54, %38, %52 : vector<2x128xi1>, vector<2x128xf32>
    %56 = arith.index_cast %c0_i32_2 : i32 to index
    %c0_23 = arith.constant 0 : index
    %c0_24 = arith.constant 0 : index
    %57 = vector.load %arg4[%56, %c0_23, %c0_24] : memref<8x2x128xf32, #tpu.memory_space<vmem>>, vector<1x2x128xf32>
    %58 = vector.shape_cast %57 : vector<1x2x128xf32> to vector<2x128xf32>
    %59 = vector.shape_cast %55 : vector<2x128xf32> to vector<1x2x128xf32>
    tpu.vector_store %arg4[%56, %c0_23, %c0_24], %59 {strides = array<i32>} : memref<8x2x128xf32, #tpu.memory_space<vmem>>, vector<1x2x128xf32>,
    %c1_i32 = arith.constant 1 : i32
    %60 = arith.index_cast %c1_i32 : i32 to index
    %c0_25 = arith.constant 0 : index
    %c0_26 = arith.constant 0 : index
    %61 = vector.load %arg1[%60, %c0_25, %c0_26] : memref<8x2x512xf32, #tpu.memory_space<vmem>>, vector<1x2x512xf32>
    %62 = vector.shape_cast %61 : vector<1x2x512xf32> to vector<2x512xf32>
    %c0_27 = arith.constant 0 : index
    %c0_28 = arith.constant 0 : index
    %63 = vector.load %arg5[%c0_27, %c0_28] : memref<2x128xf32, #tpu.memory_space<vmem>>, vector<2x128xf32>
    %64 = arith.truncf %63 : vector<2x128xf32> to vector<2x128xbf16>
    %c0_29 = arith.constant 0 : index
    %c0_30 = arith.constant 0 : index
    %65 = vector.load %arg3[%c0_29, %c0_30] : memref<128x512xbf16, #tpu.memory_space<vmem>>, vector<128x512xbf16>
    %cst_31 = arith.constant dense<0.000000e+00> : vector<2x512xf32>
    %66 = tpu.matmul %64, %65, %cst_31 {dimension_numbers = #tpu.dot_dimension_numbers<[1], [0], [0], [1], [0, 0, 1, 1], [], []>} : vector<2x128xbf16>, vector<128x512xbf16>, vector<2x512xf32> -> vector<2x512xf32>
    %67 = arith.addf %62, %66 : vector<2x512xf32>
    %68 = vector.extract_strided_slice %67 {offsets = [0, 0], sizes = [2, 128], strides = [1, 1]} : vector<2x512xf32> to vector<2x128xf32>
    %69 = arith.negf %68 : vector<2x128xf32>
    %70 = math.exp %69 : vector<2x128xf32>
    %cst_32 = arith.constant 1.000000e+00 : f32
    %71 = vector.broadcast %cst_32 : f32 to vector<2x128xf32>
    %72 = arith.addf %71, %70 : vector<2x128xf32>
    %73 = arith.divf %71, %72 : vector<2x128xf32>
    %74 = vector.extract_strided_slice %67 {offsets = [0, 128], sizes = [2, 128], strides = [1, 1]} : vector<2x512xf32> to vector<2x128xf32>
    %75 = arith.negf %74 : vector<2x128xf32>
    %76 = math.exp %75 : vector<2x128xf32>
    %cst_33 = arith.constant 1.000000e+00 : f32
    %77 = vector.broadcast %cst_33 : f32 to vector<2x128xf32>
    %78 = arith.addf %77, %76 : vector<2x128xf32>
    %79 = arith.divf %77, %78 : vector<2x128xf32>
    %80 = vector.extract_strided_slice %67 {offsets = [0, 256], sizes = [2, 128], strides = [1, 1]} : vector<2x512xf32> to vector<2x128xf32>
    %81 = math.tanh %80 : vector<2x128xf32>
    %82 = vector.extract_strided_slice %67 {offsets = [0, 384], sizes = [2, 128], strides = [1, 1]} : vector<2x512xf32> to vector<2x128xf32>
    %83 = arith.negf %82 : vector<2x128xf32>
    %84 = math.exp %83 : vector<2x128xf32>
    %cst_34 = arith.constant 1.000000e+00 : f32
    %85 = vector.broadcast %cst_34 : f32 to vector<2x128xf32>
    %86 = arith.addf %85, %84 : vector<2x128xf32>
    %87 = arith.divf %85, %86 : vector<2x128xf32>
    %c0_35 = arith.constant 0 : index
    %c0_36 = arith.constant 0 : index
    %88 = vector.load %arg6[%c0_35, %c0_36] : memref<2x128xf32, #tpu.memory_space<vmem>>, vector<2x128xf32>
    %89 = arith.mulf %79, %88 : vector<2x128xf32>
    %90 = arith.mulf %73, %81 : vector<2x128xf32>
    %91 = arith.addf %89, %90 : vector<2x128xf32>
    %92 = math.tanh %91 : vector<2x128xf32>
    %93 = arith.mulf %87, %92 : vector<2x128xf32>
    %94 = arith.addi %4, %c1_i32 : i32
    %95 = vector.broadcast %94 : i32 to vector<2x1xi32>
    %96 = arith.cmpi slt, %95, %3 : vector<2x1xi32>
    %c0_37 = arith.constant 0 : index
    %c0_38 = arith.constant 0 : index
    %97 = vector.load %arg5[%c0_37, %c0_38] : memref<2x128xf32, #tpu.memory_space<vmem>>, vector<2x128xf32>
    %98 = vector.shape_cast %96 : vector<2x1xi1> to vector<2x1xi1>
    %99 = vector.broadcast %98 : vector<2x1xi1> to vector<2x128xi1>
    %100 = arith.select %99, %93, %97 : vector<2x128xi1>, vector<2x128xf32>
    %c0_39 = arith.constant 0 : index
    %c0_40 = arith.constant 0 : index
    %101 = vector.load %arg5[%c0_39, %c0_40] : memref<2x128xf32, #tpu.memory_space<vmem>>, vector<2x128xf32>
    tpu.vector_store %arg5[%c0_39, %c0_40], %100 {strides = array<i32>} : memref<2x128xf32, #tpu.memory_space<vmem>>, vector<2x128xf32>,
    %c0_41 = arith.constant 0 : index
    %c0_42 = arith.constant 0 : index
    %102 = vector.load %arg6[%c0_41, %c0_42] : memref<2x128xf32, #tpu.memory_space<vmem>>, vector<2x128xf32>
    %103 = vector.shape_cast %96 : vector<2x1xi1> to vector<2x1xi1>
    %104 = vector.broadcast %103 : vector<2x1xi1> to vector<2x128xi1>
    %105 = arith.select %104, %91, %102 : vector<2x128xi1>, vector<2x128xf32>
    %c0_43 = arith.constant 0 : index
    %c0_44 = arith.constant 0 : index
    %106 = vector.load %arg6[%c0_43, %c0_44] : memref<2x128xf32, #tpu.memory_space<vmem>>, vector<2x128xf32>
    tpu.vector_store %arg6[%c0_43, %c0_44], %105 {strides = array<i32>} : memref<2x128xf32, #tpu.memory_space<vmem>>, vector<2x128xf32>,
    %cst_45 = arith.constant 0.000000e+00 : f32
    %107 = vector.broadcast %cst_45 : f32 to vector<2x128xf32>
    %108 = vector.shape_cast %96 : vector<2x1xi1> to vector<2x1xi1>
    %109 = vector.broadcast %108 : vector<2x1xi1> to vector<2x128xi1>
    %110 = arith.select %109, %93, %107 : vector<2x128xi1>, vector<2x128xf32>
    %111 = arith.index_cast %c1_i32 : i32 to index
    %c0_46 = arith.constant 0 : index
    %c0_47 = arith.constant 0 : index
    %112 = vector.load %arg4[%111, %c0_46, %c0_47] : memref<8x2x128xf32, #tpu.memory_space<vmem>>, vector<1x2x128xf32>
    %113 = vector.shape_cast %112 : vector<1x2x128xf32> to vector<2x128xf32>
    %114 = vector.shape_cast %110 : vector<2x128xf32> to vector<1x2x128xf32>
    tpu.vector_store %arg4[%111, %c0_46, %c0_47], %114 {strides = array<i32>} : memref<8x2x128xf32, #tpu.memory_space<vmem>>, vector<1x2x128xf32>,
    %c2_i32 = arith.constant 2 : i32
    %115 = arith.index_cast %c2_i32 : i32 to index
    %c0_48 = arith.constant 0 : index
    %c0_49 = arith.constant 0 : index
    %116 = vector.load %arg1[%115, %c0_48, %c0_49] : memref<8x2x512xf32, #tpu.memory_space<vmem>>, vector<1x2x512xf32>
    %117 = vector.shape_cast %116 : vector<1x2x512xf32> to vector<2x512xf32>
    %c0_50 = arith.constant 0 : index
    %c0_51 = arith.constant 0 : index
    %118 = vector.load %arg5[%c0_50, %c0_51] : memref<2x128xf32, #tpu.memory_space<vmem>>, vector<2x128xf32>
    %119 = arith.truncf %118 : vector<2x128xf32> to vector<2x128xbf16>
    %c0_52 = arith.constant 0 : index
    %c0_53 = arith.constant 0 : index
    %120 = vector.load %arg3[%c0_52, %c0_53] : memref<128x512xbf16, #tpu.memory_space<vmem>>, vector<128x512xbf16>
    %cst_54 = arith.constant dense<0.000000e+00> : vector<2x512xf32>
    %121 = tpu.matmul %119, %120, %cst_54 {dimension_numbers = #tpu.dot_dimension_numbers<[1], [0], [0], [1], [0, 0, 1, 1], [], []>} : vector<2x128xbf16>, vector<128x512xbf16>, vector<2x512xf32> -> vector<2x512xf32>
    %122 = arith.addf %117, %121 : vector<2x512xf32>
    %123 = vector.extract_strided_slice %122 {offsets = [0, 0], sizes = [2, 128], strides = [1, 1]} : vector<2x512xf32> to vector<2x128xf32>
    %124 = arith.negf %123 : vector<2x128xf32>
    %125 = math.exp %124 : vector<2x128xf32>
    %cst_55 = arith.constant 1.000000e+00 : f32
    %126 = vector.broadcast %cst_55 : f32 to vector<2x128xf32>
    %127 = arith.addf %126, %125 : vector<2x128xf32>
    %128 = arith.divf %126, %127 : vector<2x128xf32>
    %129 = vector.extract_strided_slice %122 {offsets = [0, 128], sizes = [2, 128], strides = [1, 1]} : vector<2x512xf32> to vector<2x128xf32>
    %130 = arith.negf %129 : vector<2x128xf32>
    %131 = math.exp %130 : vector<2x128xf32>
    %cst_56 = arith.constant 1.000000e+00 : f32
    %132 = vector.broadcast %cst_56 : f32 to vector<2x128xf32>
    %133 = arith.addf %132, %131 : vector<2x128xf32>
    %134 = arith.divf %132, %133 : vector<2x128xf32>
    %135 = vector.extract_strided_slice %122 {offsets = [0, 256], sizes = [2, 128], strides = [1, 1]} : vector<2x512xf32> to vector<2x128xf32>
    %136 = math.tanh %135 : vector<2x128xf32>
    %137 = vector.extract_strided_slice %122 {offsets = [0, 384], sizes = [2, 128], strides = [1, 1]} : vector<2x512xf32> to vector<2x128xf32>
    %138 = arith.negf %137 : vector<2x128xf32>
    %139 = math.exp %138 : vector<2x128xf32>
    %cst_57 = arith.constant 1.000000e+00 : f32
    %140 = vector.broadcast %cst_57 : f32 to vector<2x128xf32>
    %141 = arith.addf %140, %139 : vector<2x128xf32>
    %142 = arith.divf %140, %141 : vector<2x128xf32>
    %c0_58 = arith.constant 0 : index
    %c0_59 = arith.constant 0 : index
    %143 = vector.load %arg6[%c0_58, %c0_59] : memref<2x128xf32, #tpu.memory_space<vmem>>, vector<2x128xf32>
    %144 = arith.mulf %134, %143 : vector<2x128xf32>
    %145 = arith.mulf %128, %136 : vector<2x128xf32>
    %146 = arith.addf %144, %145 : vector<2x128xf32>
    %147 = math.tanh %146 : vector<2x128xf32>
    %148 = arith.mulf %142, %147 : vector<2x128xf32>
    %149 = arith.addi %4, %c2_i32 : i32
    %150 = vector.broadcast %149 : i32 to vector<2x1xi32>
    %151 = arith.cmpi slt, %150, %3 : vector<2x1xi32>
    %c0_60 = arith.constant 0 : index
    %c0_61 = arith.constant 0 : index
    %152 = vector.load %arg5[%c0_60, %c0_61] : memref<2x128xf32, #tpu.memory_space<vmem>>, vector<2x128xf32>
    %153 = vector.shape_cast %151 : vector<2x1xi1> to vector<2x1xi1>
    %154 = vector.broadcast %153 : vector<2x1xi1> to vector<2x128xi1>
    %155 = arith.select %154, %148, %152 : vector<2x128xi1>, vector<2x128xf32>
    %c0_62 = arith.constant 0 : index
    %c0_63 = arith.constant 0 : index
    %156 = vector.load %arg5[%c0_62, %c0_63] : memref<2x128xf32, #tpu.memory_space<vmem>>, vector<2x128xf32>
    tpu.vector_store %arg5[%c0_62, %c0_63], %155 {strides = array<i32>} : memref<2x128xf32, #tpu.memory_space<vmem>>, vector<2x128xf32>,
    %c0_64 = arith.constant 0 : index
    %c0_65 = arith.constant 0 : index
    %157 = vector.load %arg6[%c0_64, %c0_65] : memref<2x128xf32, #tpu.memory_space<vmem>>, vector<2x128xf32>
    %158 = vector.shape_cast %151 : vector<2x1xi1> to vector<2x1xi1>
    %159 = vector.broadcast %158 : vector<2x1xi1> to vector<2x128xi1>
    %160 = arith.select %159, %146, %157 : vector<2x128xi1>, vector<2x128xf32>
    %c0_66 = arith.constant 0 : index
    %c0_67 = arith.constant 0 : index
    %161 = vector.load %arg6[%c0_66, %c0_67] : memref<2x128xf32, #tpu.memory_space<vmem>>, vector<2x128xf32>
    tpu.vector_store %arg6[%c0_66, %c0_67], %160 {strides = array<i32>} : memref<2x128xf32, #tpu.memory_space<vmem>>, vector<2x128xf32>,
    %cst_68 = arith.constant 0.000000e+00 : f32
    %162 = vector.broadcast %cst_68 : f32 to vector<2x128xf32>
    %163 = vector.shape_cast %151 : vector<2x1xi1> to vector<2x1xi1>
    %164 = vector.broadcast %163 : vector<2x1xi1> to vector<2x128xi1>
    %165 = arith.select %164, %148, %162 : vector<2x128xi1>, vector<2x128xf32>
    %166 = arith.index_cast %c2_i32 : i32 to index
    %c0_69 = arith.constant 0 : index
    %c0_70 = arith.constant 0 : index
    %167 = vector.load %arg4[%166, %c0_69, %c0_70] : memref<8x2x128xf32, #tpu.memory_space<vmem>>, vector<1x2x128xf32>
    %168 = vector.shape_cast %167 : vector<1x2x128xf32> to vector<2x128xf32>
    %169 = vector.shape_cast %165 : vector<2x128xf32> to vector<1x2x128xf32>
    tpu.vector_store %arg4[%166, %c0_69, %c0_70], %169 {strides = array<i32>} : memref<8x2x128xf32, #tpu.memory_space<vmem>>, vector<1x2x128xf32>,
    %c3_i32 = arith.constant 3 : i32
    %170 = arith.index_cast %c3_i32 : i32 to index
    %c0_71 = arith.constant 0 : index
    %c0_72 = arith.constant 0 : index
    %171 = vector.load %arg1[%170, %c0_71, %c0_72] : memref<8x2x512xf32, #tpu.memory_space<vmem>>, vector<1x2x512xf32>
    %172 = vector.shape_cast %171 : vector<1x2x512xf32> to vector<2x512xf32>
    %c0_73 = arith.constant 0 : index
    %c0_74 = arith.constant 0 : index
    %173 = vector.load %arg5[%c0_73, %c0_74] : memref<2x128xf32, #tpu.memory_space<vmem>>, vector<2x128xf32>
    %174 = arith.truncf %173 : vector<2x128xf32> to vector<2x128xbf16>
    %c0_75 = arith.constant 0 : index
    %c0_76 = arith.constant 0 : index
    %175 = vector.load %arg3[%c0_75, %c0_76] : memref<128x512xbf16, #tpu.memory_space<vmem>>, vector<128x512xbf16>
    %cst_77 = arith.constant dense<0.000000e+00> : vector<2x512xf32>
    %176 = tpu.matmul %174, %175, %cst_77 {dimension_numbers = #tpu.dot_dimension_numbers<[1], [0], [0], [1], [0, 0, 1, 1], [], []>} : vector<2x128xbf16>, vector<128x512xbf16>, vector<2x512xf32> -> vector<2x512xf32>
    %177 = arith.addf %172, %176 : vector<2x512xf32>
    %178 = vector.extract_strided_slice %177 {offsets = [0, 0], sizes = [2, 128], strides = [1, 1]} : vector<2x512xf32> to vector<2x128xf32>
    %179 = arith.negf %178 : vector<2x128xf32>
    %180 = math.exp %179 : vector<2x128xf32>
    %cst_78 = arith.constant 1.000000e+00 : f32
    %181 = vector.broadcast %cst_78 : f32 to vector<2x128xf32>
    %182 = arith.addf %181, %180 : vector<2x128xf32>
    %183 = arith.divf %181, %182 : vector<2x128xf32>
    %184 = vector.extract_strided_slice %177 {offsets = [0, 128], sizes = [2, 128], strides = [1, 1]} : vector<2x512xf32> to vector<2x128xf32>
    %185 = arith.negf %184 : vector<2x128xf32>
    %186 = math.exp %185 : vector<2x128xf32>
    %cst_79 = arith.constant 1.000000e+00 : f32
    %187 = vector.broadcast %cst_79 : f32 to vector<2x128xf32>
    %188 = arith.addf %187, %186 : vector<2x128xf32>
    %189 = arith.divf %187, %188 : vector<2x128xf32>
    %190 = vector.extract_strided_slice %177 {offsets = [0, 256], sizes = [2, 128], strides = [1, 1]} : vector<2x512xf32> to vector<2x128xf32>
    %191 = math.tanh %190 : vector<2x128xf32>
    %192 = vector.extract_strided_slice %177 {offsets = [0, 384], sizes = [2, 128], strides = [1, 1]} : vector<2x512xf32> to vector<2x128xf32>
    %193 = arith.negf %192 : vector<2x128xf32>
    %194 = math.exp %193 : vector<2x128xf32>
    %cst_80 = arith.constant 1.000000e+00 : f32
    %195 = vector.broadcast %cst_80 : f32 to vector<2x128xf32>
    %196 = arith.addf %195, %194 : vector<2x128xf32>
    %197 = arith.divf %195, %196 : vector<2x128xf32>
    %c0_81 = arith.constant 0 : index
    %c0_82 = arith.constant 0 : index
    %198 = vector.load %arg6[%c0_81, %c0_82] : memref<2x128xf32, #tpu.memory_space<vmem>>, vector<2x128xf32>
    %199 = arith.mulf %189, %198 : vector<2x128xf32>
    %200 = arith.mulf %183, %191 : vector<2x128xf32>
    %201 = arith.addf %199, %200 : vector<2x128xf32>
    %202 = math.tanh %201 : vector<2x128xf32>
    %203 = arith.mulf %197, %202 : vector<2x128xf32>
    %204 = arith.addi %4, %c3_i32 : i32
    %205 = vector.broadcast %204 : i32 to vector<2x1xi32>
    %206 = arith.cmpi slt, %205, %3 : vector<2x1xi32>
    %c0_83 = arith.constant 0 : index
    %c0_84 = arith.constant 0 : index
    %207 = vector.load %arg5[%c0_83, %c0_84] : memref<2x128xf32, #tpu.memory_space<vmem>>, vector<2x128xf32>
    %208 = vector.shape_cast %206 : vector<2x1xi1> to vector<2x1xi1>
    %209 = vector.broadcast %208 : vector<2x1xi1> to vector<2x128xi1>
    %210 = arith.select %209, %203, %207 : vector<2x128xi1>, vector<2x128xf32>
    %c0_85 = arith.constant 0 : index
    %c0_86 = arith.constant 0 : index
    %211 = vector.load %arg5[%c0_85, %c0_86] : memref<2x128xf32, #tpu.memory_space<vmem>>, vector<2x128xf32>
    tpu.vector_store %arg5[%c0_85, %c0_86], %210 {strides = array<i32>} : memref<2x128xf32, #tpu.memory_space<vmem>>, vector<2x128xf32>,
    %c0_87 = arith.constant 0 : index
    %c0_88 = arith.constant 0 : index
    %212 = vector.load %arg6[%c0_87, %c0_88] : memref<2x128xf32, #tpu.memory_space<vmem>>, vector<2x128xf32>
    %213 = vector.shape_cast %206 : vector<2x1xi1> to vector<2x1xi1>
    %214 = vector.broadcast %213 : vector<2x1xi1> to vector<2x128xi1>
    %215 = arith.select %214, %201, %212 : vector<2x128xi1>, vector<2x128xf32>
    %c0_89 = arith.constant 0 : index
    %c0_90 = arith.constant 0 : index
    %216 = vector.load %arg6[%c0_89, %c0_90] : memref<2x128xf32, #tpu.memory_space<vmem>>, vector<2x128xf32>
    tpu.vector_store %arg6[%c0_89, %c0_90], %215 {strides = array<i32>} : memref<2x128xf32, #tpu.memory_space<vmem>>, vector<2x128xf32>,
    %cst_91 = arith.constant 0.000000e+00 : f32
    %217 = vector.broadcast %cst_91 : f32 to vector<2x128xf32>
    %218 = vector.shape_cast %206 : vector<2x1xi1> to vector<2x1xi1>
    %219 = vector.broadcast %218 : vector<2x1xi1> to vector<2x128xi1>
    %220 = arith.select %219, %203, %217 : vector<2x128xi1>, vector<2x128xf32>
    %221 = arith.index_cast %c3_i32 : i32 to index
    %c0_92 = arith.constant 0 : index
    %c0_93 = arith.constant 0 : index
    %222 = vector.load %arg4[%221, %c0_92, %c0_93] : memref<8x2x128xf32, #tpu.memory_space<vmem>>, vector<1x2x128xf32>
    %223 = vector.shape_cast %222 : vector<1x2x128xf32> to vector<2x128xf32>
    %224 = vector.shape_cast %220 : vector<2x128xf32> to vector<1x2x128xf32>
    tpu.vector_store %arg4[%221, %c0_92, %c0_93], %224 {strides = array<i32>} : memref<8x2x128xf32, #tpu.memory_space<vmem>>, vector<1x2x128xf32>,
    %c4_i32 = arith.constant 4 : i32
    %225 = arith.index_cast %c4_i32 : i32 to index
    %c0_94 = arith.constant 0 : index
    %c0_95 = arith.constant 0 : index
    %226 = vector.load %arg1[%225, %c0_94, %c0_95] : memref<8x2x512xf32, #tpu.memory_space<vmem>>, vector<1x2x512xf32>
    %227 = vector.shape_cast %226 : vector<1x2x512xf32> to vector<2x512xf32>
    %c0_96 = arith.constant 0 : index
    %c0_97 = arith.constant 0 : index
    %228 = vector.load %arg5[%c0_96, %c0_97] : memref<2x128xf32, #tpu.memory_space<vmem>>, vector<2x128xf32>
    %229 = arith.truncf %228 : vector<2x128xf32> to vector<2x128xbf16>
    %c0_98 = arith.constant 0 : index
    %c0_99 = arith.constant 0 : index
    %230 = vector.load %arg3[%c0_98, %c0_99] : memref<128x512xbf16, #tpu.memory_space<vmem>>, vector<128x512xbf16>
    %cst_100 = arith.constant dense<0.000000e+00> : vector<2x512xf32>
    %231 = tpu.matmul %229, %230, %cst_100 {dimension_numbers = #tpu.dot_dimension_numbers<[1], [0], [0], [1], [0, 0, 1, 1], [], []>} : vector<2x128xbf16>, vector<128x512xbf16>, vector<2x512xf32> -> vector<2x512xf32>
    %232 = arith.addf %227, %231 : vector<2x512xf32>
    %233 = vector.extract_strided_slice %232 {offsets = [0, 0], sizes = [2, 128], strides = [1, 1]} : vector<2x512xf32> to vector<2x128xf32>
    %234 = arith.negf %233 : vector<2x128xf32>
    %235 = math.exp %234 : vector<2x128xf32>
    %cst_101 = arith.constant 1.000000e+00 : f32
    %236 = vector.broadcast %cst_101 : f32 to vector<2x128xf32>
    %237 = arith.addf %236, %235 : vector<2x128xf32>
    %238 = arith.divf %236, %237 : vector<2x128xf32>
    %239 = vector.extract_strided_slice %232 {offsets = [0, 128], sizes = [2, 128], strides = [1, 1]} : vector<2x512xf32> to vector<2x128xf32>
    %240 = arith.negf %239 : vector<2x128xf32>
    %241 = math.exp %240 : vector<2x128xf32>
    %cst_102 = arith.constant 1.000000e+00 : f32
    %242 = vector.broadcast %cst_102 : f32 to vector<2x128xf32>
    %243 = arith.addf %242, %241 : vector<2x128xf32>
    %244 = arith.divf %242, %243 : vector<2x128xf32>
    %245 = vector.extract_strided_slice %232 {offsets = [0, 256], sizes = [2, 128], strides = [1, 1]} : vector<2x512xf32> to vector<2x128xf32>
    %246 = math.tanh %245 : vector<2x128xf32>
    %247 = vector.extract_strided_slice %232 {offsets = [0, 384], sizes = [2, 128], strides = [1, 1]} : vector<2x512xf32> to vector<2x128xf32>
    %248 = arith.negf %247 : vector<2x128xf32>
    %249 = math.exp %248 : vector<2x128xf32>
    %cst_103 = arith.constant 1.000000e+00 : f32
    %250 = vector.broadcast %cst_103 : f32 to vector<2x128xf32>
    %251 = arith.addf %250, %249 : vector<2x128xf32>
    %252 = arith.divf %250, %251 : vector<2x128xf32>
    %c0_104 = arith.constant 0 : index
    %c0_105 = arith.constant 0 : index
    %253 = vector.load %arg6[%c0_104, %c0_105] : memref<2x128xf32, #tpu.memory_space<vmem>>, vector<2x128xf32>
    %254 = arith.mulf %244, %253 : vector<2x128xf32>
    %255 = arith.mulf %238, %246 : vector<2x128xf32>
    %256 = arith.addf %254, %255 : vector<2x128xf32>
    %257 = math.tanh %256 : vector<2x128xf32>
    %258 = arith.mulf %252, %257 : vector<2x128xf32>
    %259 = arith.addi %4, %c4_i32 : i32
    %260 = vector.broadcast %259 : i32 to vector<2x1xi32>
    %261 = arith.cmpi slt, %260, %3 : vector<2x1xi32>
    %c0_106 = arith.constant 0 : index
    %c0_107 = arith.constant 0 : index
    %262 = vector.load %arg5[%c0_106, %c0_107] : memref<2x128xf32, #tpu.memory_space<vmem>>, vector<2x128xf32>
    %263 = vector.shape_cast %261 : vector<2x1xi1> to vector<2x1xi1>
    %264 = vector.broadcast %263 : vector<2x1xi1> to vector<2x128xi1>
    %265 = arith.select %264, %258, %262 : vector<2x128xi1>, vector<2x128xf32>
    %c0_108 = arith.constant 0 : index
    %c0_109 = arith.constant 0 : index
    %266 = vector.load %arg5[%c0_108, %c0_109] : memref<2x128xf32, #tpu.memory_space<vmem>>, vector<2x128xf32>
    tpu.vector_store %arg5[%c0_108, %c0_109], %265 {strides = array<i32>} : memref<2x128xf32, #tpu.memory_space<vmem>>, vector<2x128xf32>,
    %c0_110 = arith.constant 0 : index
    %c0_111 = arith.constant 0 : index
    %267 = vector.load %arg6[%c0_110, %c0_111] : memref<2x128xf32, #tpu.memory_space<vmem>>, vector<2x128xf32>
    %268 = vector.shape_cast %261 : vector<2x1xi1> to vector<2x1xi1>
    %269 = vector.broadcast %268 : vector<2x1xi1> to vector<2x128xi1>
    %270 = arith.select %269, %256, %267 : vector<2x128xi1>, vector<2x128xf32>
    %c0_112 = arith.constant 0 : index
    %c0_113 = arith.constant 0 : index
    %271 = vector.load %arg6[%c0_112, %c0_113] : memref<2x128xf32, #tpu.memory_space<vmem>>, vector<2x128xf32>
    tpu.vector_store %arg6[%c0_112, %c0_113], %270 {strides = array<i32>} : memref<2x128xf32, #tpu.memory_space<vmem>>, vector<2x128xf32>,
    %cst_114 = arith.constant 0.000000e+00 : f32
    %272 = vector.broadcast %cst_114 : f32 to vector<2x128xf32>
    %273 = vector.shape_cast %261 : vector<2x1xi1> to vector<2x1xi1>
    %274 = vector.broadcast %273 : vector<2x1xi1> to vector<2x128xi1>
    %275 = arith.select %274, %258, %272 : vector<2x128xi1>, vector<2x128xf32>
    %276 = arith.index_cast %c4_i32 : i32 to index
    %c0_115 = arith.constant 0 : index
    %c0_116 = arith.constant 0 : index
    %277 = vector.load %arg4[%276, %c0_115, %c0_116] : memref<8x2x128xf32, #tpu.memory_space<vmem>>, vector<1x2x128xf32>
    %278 = vector.shape_cast %277 : vector<1x2x128xf32> to vector<2x128xf32>
    %279 = vector.shape_cast %275 : vector<2x128xf32> to vector<1x2x128xf32>
    tpu.vector_store %arg4[%276, %c0_115, %c0_116], %279 {strides = array<i32>} : memref<8x2x128xf32, #tpu.memory_space<vmem>>, vector<1x2x128xf32>,
    %c5_i32 = arith.constant 5 : i32
    %280 = arith.index_cast %c5_i32 : i32 to index
    %c0_117 = arith.constant 0 : index
    %c0_118 = arith.constant 0 : index
    %281 = vector.load %arg1[%280, %c0_117, %c0_118] : memref<8x2x512xf32, #tpu.memory_space<vmem>>, vector<1x2x512xf32>
    %282 = vector.shape_cast %281 : vector<1x2x512xf32> to vector<2x512xf32>
    %c0_119 = arith.constant 0 : index
    %c0_120 = arith.constant 0 : index
    %283 = vector.load %arg5[%c0_119, %c0_120] : memref<2x128xf32, #tpu.memory_space<vmem>>, vector<2x128xf32>
    %284 = arith.truncf %283 : vector<2x128xf32> to vector<2x128xbf16>
    %c0_121 = arith.constant 0 : index
    %c0_122 = arith.constant 0 : index
    %285 = vector.load %arg3[%c0_121, %c0_122] : memref<128x512xbf16, #tpu.memory_space<vmem>>, vector<128x512xbf16>
    %cst_123 = arith.constant dense<0.000000e+00> : vector<2x512xf32>
    %286 = tpu.matmul %284, %285, %cst_123 {dimension_numbers = #tpu.dot_dimension_numbers<[1], [0], [0], [1], [0, 0, 1, 1], [], []>} : vector<2x128xbf16>, vector<128x512xbf16>, vector<2x512xf32> -> vector<2x512xf32>
    %287 = arith.addf %282, %286 : vector<2x512xf32>
    %288 = vector.extract_strided_slice %287 {offsets = [0, 0], sizes = [2, 128], strides = [1, 1]} : vector<2x512xf32> to vector<2x128xf32>
    %289 = arith.negf %288 : vector<2x128xf32>
    %290 = math.exp %289 : vector<2x128xf32>
    %cst_124 = arith.constant 1.000000e+00 : f32
    %291 = vector.broadcast %cst_124 : f32 to vector<2x128xf32>
    %292 = arith.addf %291, %290 : vector<2x128xf32>
    %293 = arith.divf %291, %292 : vector<2x128xf32>
    %294 = vector.extract_strided_slice %287 {offsets = [0, 128], sizes = [2, 128], strides = [1, 1]} : vector<2x512xf32> to vector<2x128xf32>
    %295 = arith.negf %294 : vector<2x128xf32>
    %296 = math.exp %295 : vector<2x128xf32>
    %cst_125 = arith.constant 1.000000e+00 : f32
    %297 = vector.broadcast %cst_125 : f32 to vector<2x128xf32>
    %298 = arith.addf %297, %296 : vector<2x128xf32>
    %299 = arith.divf %297, %298 : vector<2x128xf32>
    %300 = vector.extract_strided_slice %287 {offsets = [0, 256], sizes = [2, 128], strides = [1, 1]} : vector<2x512xf32> to vector<2x128xf32>
    %301 = math.tanh %300 : vector<2x128xf32>
    %302 = vector.extract_strided_slice %287 {offsets = [0, 384], sizes = [2, 128], strides = [1, 1]} : vector<2x512xf32> to vector<2x128xf32>
    %303 = arith.negf %302 : vector<2x128xf32>
    %304 = math.exp %303 : vector<2x128xf32>
    %cst_126 = arith.constant 1.000000e+00 : f32
    %305 = vector.broadcast %cst_126 : f32 to vector<2x128xf32>
    %306 = arith.addf %305, %304 : vector<2x128xf32>
    %307 = arith.divf %305, %306 : vector<2x128xf32>
    %c0_127 = arith.constant 0 : index
    %c0_128 = arith.constant 0 : index
    %308 = vector.load %arg6[%c0_127, %c0_128] : memref<2x128xf32, #tpu.memory_space<vmem>>, vector<2x128xf32>
    %309 = arith.mulf %299, %308 : vector<2x128xf32>
    %310 = arith.mulf %293, %301 : vector<2x128xf32>
    %311 = arith.addf %309, %310 : vector<2x128xf32>
    %312 = math.tanh %311 : vector<2x128xf32>
    %313 = arith.mulf %307, %312 : vector<2x128xf32>
    %314 = arith.addi %4, %c5_i32 : i32
    %315 = vector.broadcast %314 : i32 to vector<2x1xi32>
    %316 = arith.cmpi slt, %315, %3 : vector<2x1xi32>
    %c0_129 = arith.constant 0 : index
    %c0_130 = arith.constant 0 : index
    %317 = vector.load %arg5[%c0_129, %c0_130] : memref<2x128xf32, #tpu.memory_space<vmem>>, vector<2x128xf32>
    %318 = vector.shape_cast %316 : vector<2x1xi1> to vector<2x1xi1>
    %319 = vector.broadcast %318 : vector<2x1xi1> to vector<2x128xi1>
    %320 = arith.select %319, %313, %317 : vector<2x128xi1>, vector<2x128xf32>
    %c0_131 = arith.constant 0 : index
    %c0_132 = arith.constant 0 : index
    %321 = vector.load %arg5[%c0_131, %c0_132] : memref<2x128xf32, #tpu.memory_space<vmem>>, vector<2x128xf32>
    tpu.vector_store %arg5[%c0_131, %c0_132], %320 {strides = array<i32>} : memref<2x128xf32, #tpu.memory_space<vmem>>, vector<2x128xf32>,
    %c0_133 = arith.constant 0 : index
    %c0_134 = arith.constant 0 : index
    %322 = vector.load %arg6[%c0_133, %c0_134] : memref<2x128xf32, #tpu.memory_space<vmem>>, vector<2x128xf32>
    %323 = vector.shape_cast %316 : vector<2x1xi1> to vector<2x1xi1>
    %324 = vector.broadcast %323 : vector<2x1xi1> to vector<2x128xi1>
    %325 = arith.select %324, %311, %322 : vector<2x128xi1>, vector<2x128xf32>
    %c0_135 = arith.constant 0 : index
    %c0_136 = arith.constant 0 : index
    %326 = vector.load %arg6[%c0_135, %c0_136] : memref<2x128xf32, #tpu.memory_space<vmem>>, vector<2x128xf32>
    tpu.vector_store %arg6[%c0_135, %c0_136], %325 {strides = array<i32>} : memref<2x128xf32, #tpu.memory_space<vmem>>, vector<2x128xf32>,
    %cst_137 = arith.constant 0.000000e+00 : f32
    %327 = vector.broadcast %cst_137 : f32 to vector<2x128xf32>
    %328 = vector.shape_cast %316 : vector<2x1xi1> to vector<2x1xi1>
    %329 = vector.broadcast %328 : vector<2x1xi1> to vector<2x128xi1>
    %330 = arith.select %329, %313, %327 : vector<2x128xi1>, vector<2x128xf32>
    %331 = arith.index_cast %c5_i32 : i32 to index
    %c0_138 = arith.constant 0 : index
    %c0_139 = arith.constant 0 : index
    %332 = vector.load %arg4[%331, %c0_138, %c0_139] : memref<8x2x128xf32, #tpu.memory_space<vmem>>, vector<1x2x128xf32>
    %333 = vector.shape_cast %332 : vector<1x2x128xf32> to vector<2x128xf32>
    %334 = vector.shape_cast %330 : vector<2x128xf32> to vector<1x2x128xf32>
    tpu.vector_store %arg4[%331, %c0_138, %c0_139], %334 {strides = array<i32>} : memref<8x2x128xf32, #tpu.memory_space<vmem>>, vector<1x2x128xf32>,
    %c6_i32 = arith.constant 6 : i32
    %335 = arith.index_cast %c6_i32 : i32 to index
    %c0_140 = arith.constant 0 : index
    %c0_141 = arith.constant 0 : index
    %336 = vector.load %arg1[%335, %c0_140, %c0_141] : memref<8x2x512xf32, #tpu.memory_space<vmem>>, vector<1x2x512xf32>
    %337 = vector.shape_cast %336 : vector<1x2x512xf32> to vector<2x512xf32>
    %c0_142 = arith.constant 0 : index
    %c0_143 = arith.constant 0 : index
    %338 = vector.load %arg5[%c0_142, %c0_143] : memref<2x128xf32, #tpu.memory_space<vmem>>, vector<2x128xf32>
    %339 = arith.truncf %338 : vector<2x128xf32> to vector<2x128xbf16>
    %c0_144 = arith.constant 0 : index
    %c0_145 = arith.constant 0 : index
    %340 = vector.load %arg3[%c0_144, %c0_145] : memref<128x512xbf16, #tpu.memory_space<vmem>>, vector<128x512xbf16>
    %cst_146 = arith.constant dense<0.000000e+00> : vector<2x512xf32>
    %341 = tpu.matmul %339, %340, %cst_146 {dimension_numbers = #tpu.dot_dimension_numbers<[1], [0], [0], [1], [0, 0, 1, 1], [], []>} : vector<2x128xbf16>, vector<128x512xbf16>, vector<2x512xf32> -> vector<2x512xf32>
    %342 = arith.addf %337, %341 : vector<2x512xf32>
    %343 = vector.extract_strided_slice %342 {offsets = [0, 0], sizes = [2, 128], strides = [1, 1]} : vector<2x512xf32> to vector<2x128xf32>
    %344 = arith.negf %343 : vector<2x128xf32>
    %345 = math.exp %344 : vector<2x128xf32>
    %cst_147 = arith.constant 1.000000e+00 : f32
    %346 = vector.broadcast %cst_147 : f32 to vector<2x128xf32>
    %347 = arith.addf %346, %345 : vector<2x128xf32>
    %348 = arith.divf %346, %347 : vector<2x128xf32>
    %349 = vector.extract_strided_slice %342 {offsets = [0, 128], sizes = [2, 128], strides = [1, 1]} : vector<2x512xf32> to vector<2x128xf32>
    %350 = arith.negf %349 : vector<2x128xf32>
    %351 = math.exp %350 : vector<2x128xf32>
    %cst_148 = arith.constant 1.000000e+00 : f32
    %352 = vector.broadcast %cst_148 : f32 to vector<2x128xf32>
    %353 = arith.addf %352, %351 : vector<2x128xf32>
    %354 = arith.divf %352, %353 : vector<2x128xf32>
    %355 = vector.extract_strided_slice %342 {offsets = [0, 256], sizes = [2, 128], strides = [1, 1]} : vector<2x512xf32> to vector<2x128xf32>
    %356 = math.tanh %355 : vector<2x128xf32>
    %357 = vector.extract_strided_slice %342 {offsets = [0, 384], sizes = [2, 128], strides = [1, 1]} : vector<2x512xf32> to vector<2x128xf32>
    %358 = arith.negf %357 : vector<2x128xf32>
    %359 = math.exp %358 : vector<2x128xf32>
    %cst_149 = arith.constant 1.000000e+00 : f32
    %360 = vector.broadcast %cst_149 : f32 to vector<2x128xf32>
    %361 = arith.addf %360, %359 : vector<2x128xf32>
    %362 = arith.divf %360, %361 : vector<2x128xf32>
    %c0_150 = arith.constant 0 : index
    %c0_151 = arith.constant 0 : index
    %363 = vector.load %arg6[%c0_150, %c0_151] : memref<2x128xf32, #tpu.memory_space<vmem>>, vector<2x128xf32>
    %364 = arith.mulf %354, %363 : vector<2x128xf32>
    %365 = arith.mulf %348, %356 : vector<2x128xf32>
    %366 = arith.addf %364, %365 : vector<2x128xf32>
    %367 = math.tanh %366 : vector<2x128xf32>
    %368 = arith.mulf %362, %367 : vector<2x128xf32>
    %369 = arith.addi %4, %c6_i32 : i32
    %370 = vector.broadcast %369 : i32 to vector<2x1xi32>
    %371 = arith.cmpi slt, %370, %3 : vector<2x1xi32>
    %c0_152 = arith.constant 0 : index
    %c0_153 = arith.constant 0 : index
    %372 = vector.load %arg5[%c0_152, %c0_153] : memref<2x128xf32, #tpu.memory_space<vmem>>, vector<2x128xf32>
    %373 = vector.shape_cast %371 : vector<2x1xi1> to vector<2x1xi1>
    %374 = vector.broadcast %373 : vector<2x1xi1> to vector<2x128xi1>
    %375 = arith.select %374, %368, %372 : vector<2x128xi1>, vector<2x128xf32>
    %c0_154 = arith.constant 0 : index
    %c0_155 = arith.constant 0 : index
    %376 = vector.load %arg5[%c0_154, %c0_155] : memref<2x128xf32, #tpu.memory_space<vmem>>, vector<2x128xf32>
    tpu.vector_store %arg5[%c0_154, %c0_155], %375 {strides = array<i32>} : memref<2x128xf32, #tpu.memory_space<vmem>>, vector<2x128xf32>,
    %c0_156 = arith.constant 0 : index
    %c0_157 = arith.constant 0 : index
    %377 = vector.load %arg6[%c0_156, %c0_157] : memref<2x128xf32, #tpu.memory_space<vmem>>, vector<2x128xf32>
    %378 = vector.shape_cast %371 : vector<2x1xi1> to vector<2x1xi1>
    %379 = vector.broadcast %378 : vector<2x1xi1> to vector<2x128xi1>
    %380 = arith.select %379, %366, %377 : vector<2x128xi1>, vector<2x128xf32>
    %c0_158 = arith.constant 0 : index
    %c0_159 = arith.constant 0 : index
    %381 = vector.load %arg6[%c0_158, %c0_159] : memref<2x128xf32, #tpu.memory_space<vmem>>, vector<2x128xf32>
    tpu.vector_store %arg6[%c0_158, %c0_159], %380 {strides = array<i32>} : memref<2x128xf32, #tpu.memory_space<vmem>>, vector<2x128xf32>,
    %cst_160 = arith.constant 0.000000e+00 : f32
    %382 = vector.broadcast %cst_160 : f32 to vector<2x128xf32>
    %383 = vector.shape_cast %371 : vector<2x1xi1> to vector<2x1xi1>
    %384 = vector.broadcast %383 : vector<2x1xi1> to vector<2x128xi1>
    %385 = arith.select %384, %368, %382 : vector<2x128xi1>, vector<2x128xf32>
    %386 = arith.index_cast %c6_i32 : i32 to index
    %c0_161 = arith.constant 0 : index
    %c0_162 = arith.constant 0 : index
    %387 = vector.load %arg4[%386, %c0_161, %c0_162] : memref<8x2x128xf32, #tpu.memory_space<vmem>>, vector<1x2x128xf32>
    %388 = vector.shape_cast %387 : vector<1x2x128xf32> to vector<2x128xf32>
    %389 = vector.shape_cast %385 : vector<2x128xf32> to vector<1x2x128xf32>
    tpu.vector_store %arg4[%386, %c0_161, %c0_162], %389 {strides = array<i32>} : memref<8x2x128xf32, #tpu.memory_space<vmem>>, vector<1x2x128xf32>,
    %c7_i32 = arith.constant 7 : i32
    %390 = arith.index_cast %c7_i32 : i32 to index
    %c0_163 = arith.constant 0 : index
    %c0_164 = arith.constant 0 : index
    %391 = vector.load %arg1[%390, %c0_163, %c0_164] : memref<8x2x512xf32, #tpu.memory_space<vmem>>, vector<1x2x512xf32>
    %392 = vector.shape_cast %391 : vector<1x2x512xf32> to vector<2x512xf32>
    %c0_165 = arith.constant 0 : index
    %c0_166 = arith.constant 0 : index
    %393 = vector.load %arg5[%c0_165, %c0_166] : memref<2x128xf32, #tpu.memory_space<vmem>>, vector<2x128xf32>
    %394 = arith.truncf %393 : vector<2x128xf32> to vector<2x128xbf16>
    %c0_167 = arith.constant 0 : index
    %c0_168 = arith.constant 0 : index
    %395 = vector.load %arg3[%c0_167, %c0_168] : memref<128x512xbf16, #tpu.memory_space<vmem>>, vector<128x512xbf16>
    %cst_169 = arith.constant dense<0.000000e+00> : vector<2x512xf32>
    %396 = tpu.matmul %394, %395, %cst_169 {dimension_numbers = #tpu.dot_dimension_numbers<[1], [0], [0], [1], [0, 0, 1, 1], [], []>} : vector<2x128xbf16>, vector<128x512xbf16>, vector<2x512xf32> -> vector<2x512xf32>
    %397 = arith.addf %392, %396 : vector<2x512xf32>
    %398 = vector.extract_strided_slice %397 {offsets = [0, 0], sizes = [2, 128], strides = [1, 1]} : vector<2x512xf32> to vector<2x128xf32>
    %399 = arith.negf %398 : vector<2x128xf32>
    %400 = math.exp %399 : vector<2x128xf32>
    %cst_170 = arith.constant 1.000000e+00 : f32
    %401 = vector.broadcast %cst_170 : f32 to vector<2x128xf32>
    %402 = arith.addf %401, %400 : vector<2x128xf32>
    %403 = arith.divf %401, %402 : vector<2x128xf32>
    %404 = vector.extract_strided_slice %397 {offsets = [0, 128], sizes = [2, 128], strides = [1, 1]} : vector<2x512xf32> to vector<2x128xf32>
    %405 = arith.negf %404 : vector<2x128xf32>
    %406 = math.exp %405 : vector<2x128xf32>
    %cst_171 = arith.constant 1.000000e+00 : f32
    %407 = vector.broadcast %cst_171 : f32 to vector<2x128xf32>
    %408 = arith.addf %407, %406 : vector<2x128xf32>
    %409 = arith.divf %407, %408 : vector<2x128xf32>
    %410 = vector.extract_strided_slice %397 {offsets = [0, 256], sizes = [2, 128], strides = [1, 1]} : vector<2x512xf32> to vector<2x128xf32>
    %411 = math.tanh %410 : vector<2x128xf32>
    %412 = vector.extract_strided_slice %397 {offsets = [0, 384], sizes = [2, 128], strides = [1, 1]} : vector<2x512xf32> to vector<2x128xf32>
    %413 = arith.negf %412 : vector<2x128xf32>
    %414 = math.exp %413 : vector<2x128xf32>
    %cst_172 = arith.constant 1.000000e+00 : f32
    %415 = vector.broadcast %cst_172 : f32 to vector<2x128xf32>
    %416 = arith.addf %415, %414 : vector<2x128xf32>
    %417 = arith.divf %415, %416 : vector<2x128xf32>
    %c0_173 = arith.constant 0 : index
    %c0_174 = arith.constant 0 : index
    %418 = vector.load %arg6[%c0_173, %c0_174] : memref<2x128xf32, #tpu.memory_space<vmem>>, vector<2x128xf32>
    %419 = arith.mulf %409, %418 : vector<2x128xf32>
    %420 = arith.mulf %403, %411 : vector<2x128xf32>
    %421 = arith.addf %419, %420 : vector<2x128xf32>
    %422 = math.tanh %421 : vector<2x128xf32>
    %423 = arith.mulf %417, %422 : vector<2x128xf32>
    %424 = arith.addi %4, %c7_i32 : i32
    %425 = vector.broadcast %424 : i32 to vector<2x1xi32>
    %426 = arith.cmpi slt, %425, %3 : vector<2x1xi32>
    %c0_175 = arith.constant 0 : index
    %c0_176 = arith.constant 0 : index
    %427 = vector.load %arg5[%c0_175, %c0_176] : memref<2x128xf32, #tpu.memory_space<vmem>>, vector<2x128xf32>
    %428 = vector.shape_cast %426 : vector<2x1xi1> to vector<2x1xi1>
    %429 = vector.broadcast %428 : vector<2x1xi1> to vector<2x128xi1>
    %430 = arith.select %429, %423, %427 : vector<2x128xi1>, vector<2x128xf32>
    %c0_177 = arith.constant 0 : index
    %c0_178 = arith.constant 0 : index
    %431 = vector.load %arg5[%c0_177, %c0_178] : memref<2x128xf32, #tpu.memory_space<vmem>>, vector<2x128xf32>
    tpu.vector_store %arg5[%c0_177, %c0_178], %430 {strides = array<i32>} : memref<2x128xf32, #tpu.memory_space<vmem>>, vector<2x128xf32>,
    %c0_179 = arith.constant 0 : index
    %c0_180 = arith.constant 0 : index
    %432 = vector.load %arg6[%c0_179, %c0_180] : memref<2x128xf32, #tpu.memory_space<vmem>>, vector<2x128xf32>
    %433 = vector.shape_cast %426 : vector<2x1xi1> to vector<2x1xi1>
    %434 = vector.broadcast %433 : vector<2x1xi1> to vector<2x128xi1>
    %435 = arith.select %434, %421, %432 : vector<2x128xi1>, vector<2x128xf32>
    %c0_181 = arith.constant 0 : index
    %c0_182 = arith.constant 0 : index
    %436 = vector.load %arg6[%c0_181, %c0_182] : memref<2x128xf32, #tpu.memory_space<vmem>>, vector<2x128xf32>
    tpu.vector_store %arg6[%c0_181, %c0_182], %435 {strides = array<i32>} : memref<2x128xf32, #tpu.memory_space<vmem>>, vector<2x128xf32>,
    %cst_183 = arith.constant 0.000000e+00 : f32
    %437 = vector.broadcast %cst_183 : f32 to vector<2x128xf32>
    %438 = vector.shape_cast %426 : vector<2x1xi1> to vector<2x1xi1>
    %439 = vector.broadcast %438 : vector<2x1xi1> to vector<2x128xi1>
    %440 = arith.select %439, %423, %437 : vector<2x128xi1>, vector<2x128xf32>
    %441 = arith.index_cast %c7_i32 : i32 to index
    %c0_184 = arith.constant 0 : index
    %c0_185 = arith.constant 0 : index
    %442 = vector.load %arg4[%441, %c0_184, %c0_185] : memref<8x2x128xf32, #tpu.memory_space<vmem>>, vector<1x2x128xf32>
    %443 = vector.shape_cast %442 : vector<1x2x128xf32> to vector<2x128xf32>
    %444 = vector.shape_cast %440 : vector<2x128xf32> to vector<1x2x128xf32>
    tpu.vector_store %arg4[%441, %c0_184, %c0_185], %444 {strides = array<i32>} : memref<8x2x128xf32, #tpu.memory_space<vmem>>, vector<1x2x128xf32>,
    %c8_i32_186 = arith.constant 8 : i32
    return
  }
  func.func @transform_0(%arg0: i32) -> (i32, i32, i32) {
    %c0_i32 = arith.constant 0 : i32
    %c0_i32_0 = arith.constant 0 : i32
    %c0_i32_1 = arith.constant 0 : i32
    return %arg0, %c0_i32, %c0_i32_0 : i32, i32, i32
  }
  func.func @transform_1(%arg0: i32) -> (i32, i32) {
    %c0_i32 = arith.constant 0 : i32
    %c0_i32_0 = arith.constant 0 : i32
    %c0_i32_1 = arith.constant 0 : i32
    return %c0_i32, %c0_i32_0 : i32, i32
  }
  func.func @transform_2(%arg0: i32) -> (i32, i32) {
    %c0_i32 = arith.constant 0 : i32
    %c0_i32_0 = arith.constant 0 : i32
    %c0_i32_1 = arith.constant 0 : i32
    return %c0_i32, %c0_i32_0 : i32, i32
  }
  func.func @transform_3(%arg0: i32) -> (i32, i32, i32) {
    %c0_i32 = arith.constant 0 : i32
    %c0_i32_0 = arith.constant 0 : i32
    %c0_i32_1 = arith.constant 0 : i32
    return %arg0, %c0_i32, %c0_i32_0 : i32, i32, i32
  }
}

</mosaic_0001>

<llo_original>
// kernel: neg.1
$region0: #{neg.1}
  #allocation0 [shape = 's32[1]{0}', space=sflag, size = 0x4, scoped, tag = 'scoped memory for neg.1']
  %s0 = inlined_call_operand.vmem [shape: s32[2], index: 0, kind: input, shape index: {}]
  %s1 = inlined_call_operand.vmem [shape: s32[2], index: 1, kind: output, shape index: {}]
  %v2 = vld [vmem:[%s0] sm:$0x1]
  %3 = xla_tuple %v2
  %4 = xla_tuple %3
  %v5 = vsub.s32 0, %v2
  %6 = xla_tuple %v5
  %7 = vst [vmem:[%s1] sm:$0x1] %v5

// kernel: lstm_model_forward.2
$region0: #{lstm_model_forward.2}
  #allocation0 [shape = 'u32[]', space=smem, size = 0x4, offset = 0x4, fixed_abs, tag = 'smem constant byte address 0x4 - core index']
  #allocation1 [shape = 'u32[72,128]{1,0:T(1,128)}', space=vmem, size = 0x9000, scoped, tag = 'internal scratch']
  %s0 = inlined_call_operand.vmem [shape: bf16[16,64], index: 0, kind: input, shape index: {}]
  %s1 = inlined_call_operand.vmem [shape: bf16[64,512], index: 1, kind: input, shape index: {}]
  %s2 = inlined_call_operand.vmem [shape: f32[1,512], index: 2, kind: input, shape index: {}]
  %s3 = inlined_call_operand.vmem [shape: f32[16,512], index: 3, kind: output, shape index: {}]
  %s4 = sld [smem:[#allocation0]]
  $region22: #{lstm_model_forward.2} parent=0
    _
  %s6 = ssub.s32 1, %s4
  %s7 = scalar_select 0, %s6, %s4
  // Predicated region
  $region2: #{lstm_model_forward.2} parent=0 // pred_check
    _
  $region3: #{lstm_model_forward.2} parent=0 // pred_check_branch
    %9 = sbr.rel (0) target = $region5
  $region4: #{lstm_model_forward.2} parent=0 // pred_region
    _
  $region5: #{lstm_model_forward.2} parent=0 // pred_fallthru
    _
  // Predicated region
  $region6: #{lstm_model_forward.2} parent=0 // pred_check
    _
  $region7: #{lstm_model_forward.2} parent=0 // pred_check_branch
    %11 = sbr.rel (0) target = $region9
  $region8: #{lstm_model_forward.2} parent=0 // pred_region
    _
  $region9: #{lstm_model_forward.2} parent=0 // pred_fallthru
    _
  // Predicated region
  $region10: #{lstm_model_forward.2} parent=0 // pred_check
    _
  $region11: #{lstm_model_forward.2} parent=0 // pred_check_branch
    %13 = sbr.rel (0) target = $region13
  $region12: #{lstm_model_forward.2} parent=0 // pred_region
    _
  $region13: #{lstm_model_forward.2} parent=0 // pred_fallthru
    _
  %v15 = vld [vmem:[%s0] sm:$0xf]
  %v16 = vld [vmem:[%s0 + $0x4] sm:$0xf]
  %v17 = vld [vmem:[%s1] sm:$0xff]
  %v18 = vld [vmem:[%s1 + $0x8] sm:$0xff]
  %v19 = vld [vmem:[%s1 + $0x10] sm:$0xff]
  %v20 = vld [vmem:[%s1 + $0x18] sm:$0xff]
  %v21 = vld [vmem:[%s1 + $0x20] sm:$0xff]
  %v22 = vld [vmem:[%s1 + $0x28] sm:$0xff]
  %v23 = vld [vmem:[%s1 + $0x30] sm:$0xff]
  %v24 = vld [vmem:[%s1 + $0x38] sm:$0xff]
  %v25 = vld [vmem:[%s1 + $0x40] sm:$0xff]
  %v26 = vld [vmem:[%s1 + $0x48] sm:$0xff]
  %v27 = vld [vmem:[%s1 + $0x50] sm:$0xff]
  %v28 = vld [vmem:[%s1 + $0x58] sm:$0xff]
  %v29 = vld [vmem:[%s1 + $0x60] sm:$0xff]
  %v30 = vld [vmem:[%s1 + $0x68] sm:$0xff]
  %v31 = vld [vmem:[%s1 + $0x70] sm:$0xff]
  %v32 = vld [vmem:[%s1 + $0x78] sm:$0xff]
  %v33 = vld [vmem:[%s2] sm:$0xf]
  %v35 = vperm.slane %v33, 0
  %v36 = vperm.slane %v33, 1
  %v37 = vperm.slane %v33, 2
  %v38 = vperm.slane %v33, 3
  %v45 = vunpack.c.l.b16 %v15
  %v46 = vunpack.c.l.b16 %v16
  %v47 = vpack.c.b16 %v46, %v45
  %v64 = vunpack.c.l.b16 %v17
  %v65 = vunpack.c.h.b16 %v17
  %v66 = vunpack.c.l.b16 %v18
  %v67 = vunpack.c.h.b16 %v18
  %v68 = vunpack.c.l.b16 %v19
  %v69 = vunpack.c.h.b16 %v19
  %v70 = vunpack.c.l.b16 %v20
  %v71 = vunpack.c.h.b16 %v20
  %v72 = vunpack.c.l.b16 %v21
  %v73 = vunpack.c.h.b16 %v21
  %v74 = vunpack.c.l.b16 %v22
  %v75 = vunpack.c.h.b16 %v22
  %v76 = vunpack.c.l.b16 %v23
  %v77 = vunpack.c.h.b16 %v23
  %v78 = vunpack.c.l.b16 %v24
  %v79 = vunpack.c.h.b16 %v24
  %v80 = vunpack.c.l.b16 %v25
  %v81 = vunpack.c.h.b16 %v25
  %v82 = vunpack.c.l.b16 %v26
  %v83 = vunpack.c.h.b16 %v26
  %v84 = vunpack.c.l.b16 %v27
  %v85 = vunpack.c.h.b16 %v27
  %v86 = vunpack.c.l.b16 %v28
  %v87 = vunpack.c.h.b16 %v28
  %v88 = vunpack.c.l.b16 %v29
  %v89 = vunpack.c.h.b16 %v29
  %v90 = vunpack.c.l.b16 %v30
  %v91 = vunpack.c.h.b16 %v30
  %v92 = vunpack.c.l.b16 %v31
  %v93 = vunpack.c.h.b16 %v31
  %v94 = vunpack.c.l.b16 %v32
  %v95 = vunpack.c.h.b16 %v32
  %v96 = vpack.c.b16 %v68, %v64
  %v97 = vpack.c.b16 %v69, %v65
  %v98 = vpack.c.b16 %v70, %v66
  %v99 = vpack.c.b16 %v71, %v67
  %v100 = vpack.c.b16 %v76, %v72
  %v101 = vpack.c.b16 %v77, %v73
  %v102 = vpack.c.b16 %v78, %v74
  %v103 = vpack.c.b16 %v79, %v75
  %v104 = vpack.c.b16 %v84, %v80
  %v105 = vpack.c.b16 %v85, %v81
  %v106 = vpack.c.b16 %v86, %v82
  %v107 = vpack.c.b16 %v87, %v83
  %v108 = vpack.c.b16 %v92, %v88
  %v109 = vpack.c.b16 %v93, %v89
  %v110 = vpack.c.b16 %v94, %v90
  %v111 = vpack.c.b16 %v95, %v91
  %vm128 = vcmask 523264
  %v130 = vsel %vm128, %v47, 0
  %132 = vmatpush.bf16.msra.mxu0 0
  %133 = vmatpush.bf16.msra.mxu0 0
  %134 = vmatpush.bf16.msra.mxu0 0
  %135 = vmatpush.bf16.msra.mxu0 0
  %136 = vmatpush.bf16.msra.mxu0 %v108
  %137 = vmatpush.bf16.msra.mxu0 %v104
  %138 = vmatpush.bf16.msra.mxu0 %v100
  %139 = vmatpush.bf16.msra.mxu0 %v96
  %140 = vmatmul.bf16.gmra.mxu0 %v130
  %v141 = vpop.f32.mrf.mxu0
  %v142 = vadd.f32 %v35, %v141
  %v143 = vpop.f32.mrf.mxu0
  %v144 = vadd.f32 %v35, %v143
  %145 = vdwg.mxu0
  %146 = vmatpush.bf16.msra.mxu0 0
  %147 = vmatpush.bf16.msra.mxu0 0
  %148 = vmatpush.bf16.msra.mxu0 0
  %149 = vmatpush.bf16.msra.mxu0 0
  %150 = vmatpush.bf16.msra.mxu0 %v109
  %151 = vmatpush.bf16.msra.mxu0 %v105
  %152 = vmatpush.bf16.msra.mxu0 %v101
  %153 = vmatpush.bf16.msra.mxu0 %v97
  %154 = vmatmul.bf16.gmra.mxu0 %v130
  %v155 = vpop.f32.mrf.mxu0
  %v156 = vadd.f32 %v36, %v155
  %v157 = vpop.f32.mrf.mxu0
  %v158 = vadd.f32 %v36, %v157
  %159 = vdwg.mxu0
  %160 = vmatpush.bf16.msra.mxu0 0
  %161 = vmatpush.bf16.msra.mxu0 0
  %162 = vmatpush.bf16.msra.mxu0 0
  %163 = vmatpush.bf16.msra.mxu0 0
  %164 = vmatpush.bf16.msra.mxu0 %v110
  %165 = vmatpush.bf16.msra.mxu0 %v106
  %166 = vmatpush.bf16.msra.mxu0 %v102
  %167 = vmatpush.bf16.msra.mxu0 %v98
  %168 = vmatmul.bf16.gmra.mxu0 %v130
  %v169 = vpop.f32.mrf.mxu0
  %v170 = vadd.f32 %v37, %v169
  %v171 = vpop.f32.mrf.mxu0
  %v172 = vadd.f32 %v37, %v171
  %173 = vdwg.mxu0
  %174 = vmatpush.bf16.msra.mxu0 0
  %175 = vmatpush.bf16.msra.mxu0 0
  %176 = vmatpush.bf16.msra.mxu0 0
  %177 = vmatpush.bf16.msra.mxu0 0
  %178 = vmatpush.bf16.msra.mxu0 %v111
  %179 = vmatpush.bf16.msra.mxu0 %v107
  %180 = vmatpush.bf16.msra.mxu0 %v103
  %181 = vmatpush.bf16.msra.mxu0 %v99
  %182 = vmatmul.bf16.gmra.mxu0 %v130
  %v183 = vpop.f32.mrf.mxu0
  %v184 = vadd.f32 %v38, %v183
  %v185 = vpop.f32.mrf.mxu0
  %v186 = vadd.f32 %v38, %v185
  %187 = vdwg.mxu0
  %188 = vst [vmem:[%s3] sm:$0xff] %v142
  %189 = vst [vmem:[%s3 + $0x8] sm:$0xff] %v156
  %190 = vst [vmem:[%s3 + $0x10] sm:$0xff] %v170
  %191 = vst [vmem:[%s3 + $0x18] sm:$0xff] %v184
  %192 = vst [vmem:[%s3 + $0x20] sm:$0xff] %v144
  %193 = vst [vmem:[%s3 + $0x28] sm:$0xff] %v158
  %194 = vst [vmem:[%s3 + $0x30] sm:$0xff] %v172
  %195 = vst [vmem:[%s3 + $0x38] sm:$0xff] %v186
  // Predicated region
  $region14: #{lstm_model_forward.2} parent=0 // pred_check
    _
  $region15: #{lstm_model_forward.2} parent=0 // pred_check_branch
    %197 = sbr.rel (0) target = $region17
  $region16: #{lstm_model_forward.2} parent=0 // pred_region
    _
  $region17: #{lstm_model_forward.2} parent=0 // pred_fallthru
    _
  // Predicated region
  $region18: #{lstm_model_forward.2} parent=0 // pred_check
    _
  $region19: #{lstm_model_forward.2} parent=0 // pred_check_branch
    %199 = sbr.rel (0) target = $region21
  $region20: #{lstm_model_forward.2} parent=0 // pred_region
    _
  $region21: #{lstm_model_forward.2} parent=0 // pred_fallthru
    _

// kernel: lstm_model_forward.3
$region0: #{lstm_model_forward.3}
  #allocation0 [shape = 'u32[]', space=smem, size = 0x4, offset = 0x4, fixed_abs, tag = 'smem constant byte address 0x4 - core index']
  #allocation1 [shape = 'u32[72,128]{1,0:T(1,128)}', space=vmem, size = 0x9000, scoped, tag = 'internal scratch']
  #allocation2 [shape = 'f32[2,128]{1,0:T(2,128)}', space=vmem, size = 0x400, scoped, tag = 'scratch operand']
  #allocation3 [shape = 'f32[2,128]{1,0:T(2,128)}', space=vmem, size = 0x400, scoped, tag = 'scratch operand']
  %s0 = inlined_call_operand.vmem [shape: f32[8,2,512], index: 0, kind: input, shape index: {}]
  %s1 = inlined_call_operand.vmem [shape: s32[2,1], index: 1, kind: input, shape index: {}]
  %s2 = inlined_call_operand.vmem [shape: bf16[128,512], index: 2, kind: input, shape index: {}]
  %s3 = inlined_call_operand.vmem [shape: f32[8,2,128], index: 3, kind: output, shape index: {}]
  %s4 = sld [smem:[#allocation0]]
  $region26: #{lstm_model_forward.3} parent=0
    _
  %s6 = ssub.s32 1, %s4
  %s7 = scalar_select 0, %s6, %s4
  // Predicated region
  $region2: #{lstm_model_forward.3} parent=0 // pred_check
    _
  $region3: #{lstm_model_forward.3} parent=0 // pred_check_branch
    %9 = sbr.rel (0) target = $region5
  $region4: #{lstm_model_forward.3} parent=0 // pred_region
    _
  $region5: #{lstm_model_forward.3} parent=0 // pred_fallthru
    _
  // Predicated region
  $region6: #{lstm_model_forward.3} parent=0 // pred_check
    _
  $region7: #{lstm_model_forward.3} parent=0 // pred_check_branch
    %11 = sbr.rel (0) target = $region9
  $region8: #{lstm_model_forward.3} parent=0 // pred_region
    _
  $region9: #{lstm_model_forward.3} parent=0 // pred_fallthru
    _
  // Predicated region
  $region10: #{lstm_model_forward.3} parent=0 // pred_check
    _
  $region11: #{lstm_model_forward.3} parent=0 // pred_check_branch
    %13 = sbr.rel (0) target = $region13
  $region12: #{lstm_model_forward.3} parent=0 // pred_region
    _
  $region13: #{lstm_model_forward.3} parent=0 // pred_fallthru
    _
  %p14 = scmp.eq.s32.totalorder 0, 0
  // Predicated region
  $region14: #{lstm_model_forward.3} parent=0 // pred_check
    %p15 = pneg %p14
  $region15: #{lstm_model_forward.3} parent=0 // pred_check_branch
    %17 = sbr.rel (%p15) target = $region17
  $region16: #{lstm_model_forward.3} parent=0 // pred_region
    %18 = vst [vmem:[#allocation2] sm:$0x3] 0.0
    %19 = vst [vmem:[#allocation3] sm:$0x3] 0.0
  $region17: #{lstm_model_forward.3} parent=0 // pred_fallthru
    _
  %v20 = vld [vmem:[%s1] sm:$0x3]
  %s21 = smul.u32 0, 8
  %v22 = vld [vmem:[%s0] sm:$0xff]
  %v23 = vld [vmem:[#allocation2] sm:$0x3]
  %v24 = vpack.c.bf16 %v23, %v23
  %v25 = vld [vmem:[%s2] sm:$0xff]
  %v26 = vld [vmem:[%s2 + $0x8] sm:$0xff]
  %v27 = vld [vmem:[%s2 + $0x10] sm:$0xff]
  %v28 = vld [vmem:[%s2 + $0x18] sm:$0xff]
  %v29 = vld [vmem:[%s2 + $0x20] sm:$0xff]
  %v30 = vld [vmem:[%s2 + $0x28] sm:$0xff]
  %v31 = vld [vmem:[%s2 + $0x30] sm:$0xff]
  %v32 = vld [vmem:[%s2 + $0x38] sm:$0xff]
  %v33 = vld [vmem:[%s2 + $0x40] sm:$0xff]
  %v34 = vld [vmem:[%s2 + $0x48] sm:$0xff]
  %v35 = vld [vmem:[%s2 + $0x50] sm:$0xff]
  %v36 = vld [vmem:[%s2 + $0x58] sm:$0xff]
  %v37 = vld [vmem:[%s2 + $0x60] sm:$0xff]
  %v38 = vld [vmem:[%s2 + $0x68] sm:$0xff]
  %v39 = vld [vmem:[%s2 + $0x70] sm:$0xff]
  %v40 = vld [vmem:[%s2 + $0x78] sm:$0xff]
  %v41 = vld [vmem:[%s2 + $0x80] sm:$0xff]
  %v42 = vld [vmem:[%s2 + $0x88] sm:$0xff]
  %v43 = vld [vmem:[%s2 + $0x90] sm:$0xff]
  %v44 = vld [vmem:[%s2 + $0x98] sm:$0xff]
  %v45 = vld [vmem:[%s2 + $0xa0] sm:$0xff]
  %v46 = vld [vmem:[%s2 + $0xa8] sm:$0xff]
  %v47 = vld [vmem:[%s2 + $0xb0] sm:$0xff]
  %v48 = vld [vmem:[%s2 + $0xb8] sm:$0xff]
  %v49 = vld [vmem:[%s2 + $0xc0] sm:$0xff]
  %v50 = vld [vmem:[%s2 + $0xc8] sm:$0xff]
  %v51 = vld [vmem:[%s2 + $0xd0] sm:$0xff]
  %v52 = vld [vmem:[%s2 + $0xd8] sm:$0xff]
  %v53 = vld [vmem:[%s2 + $0xe0] sm:$0xff]
  %v54 = vld [vmem:[%s2 + $0xe8] sm:$0xff]
  %v55 = vld [vmem:[%s2 + $0xf0] sm:$0xff]
  %v56 = vld [vmem:[%s2 + $0xf8] sm:$0xff]
  %v89 = vunpack.c.l.b16 %v25
  %v90 = vunpack.c.h.b16 %v25
  %v91 = vunpack.c.l.b16 %v26
  %v92 = vunpack.c.h.b16 %v26
  %v93 = vunpack.c.l.b16 %v27
  %v94 = vunpack.c.h.b16 %v27
  %v95 = vunpack.c.l.b16 %v28
  %v96 = vunpack.c.h.b16 %v28
  %v97 = vunpack.c.l.b16 %v29
  %v98 = vunpack.c.h.b16 %v29
  %v99 = vunpack.c.l.b16 %v30
  %v100 = vunpack.c.h.b16 %v30
  %v101 = vunpack.c.l.b16 %v31
  %v102 = vunpack.c.h.b16 %v31
  %v103 = vunpack.c.l.b16 %v32
  %v104 = vunpack.c.h.b16 %v32
  %v105 = vunpack.c.l.b16 %v33
  %v106 = vunpack.c.h.b16 %v33
  %v107 = vunpack.c.l.b16 %v34
  %v108 = vunpack.c.h.b16 %v34
  %v109 = vunpack.c.l.b16 %v35
  %v110 = vunpack.c.h.b16 %v35
  %v111 = vunpack.c.l.b16 %v36
  %v112 = vunpack.c.h.b16 %v36
  %v113 = vunpack.c.l.b16 %v37
  %v114 = vunpack.c.h.b16 %v37
  %v115 = vunpack.c.l.b16 %v38
  %v116 = vunpack.c.h.b16 %v38
  %v117 = vunpack.c.l.b16 %v39
  %v118 = vunpack.c.h.b16 %v39
  %v119 = vunpack.c.l.b16 %v40
  %v120 = vunpack.c.h.b16 %v40
  %v121 = vunpack.c.l.b16 %v41
  %v122 = vunpack.c.h.b16 %v41
  %v123 = vunpack.c.l.b16 %v42
  %v124 = vunpack.c.h.b16 %v42
  %v125 = vunpack.c.l.b16 %v43
  %v126 = vunpack.c.h.b16 %v43
  %v127 = vunpack.c.l.b16 %v44
  %v128 = vunpack.c.h.b16 %v44
  %v129 = vunpack.c.l.b16 %v45
  %v130 = vunpack.c.h.b16 %v45
  %v131 = vunpack.c.l.b16 %v46
  %v132 = vunpack.c.h.b16 %v46
  %v133 = vunpack.c.l.b16 %v47
  %v134 = vunpack.c.h.b16 %v47
  %v135 = vunpack.c.l.b16 %v48
  %v136 = vunpack.c.h.b16 %v48
  %v137 = vunpack.c.l.b16 %v49
  %v138 = vunpack.c.h.b16 %v49
  %v139 = vunpack.c.l.b16 %v50
  %v140 = vunpack.c.h.b16 %v50
  %v141 = vunpack.c.l.b16 %v51
  %v142 = vunpack.c.h.b16 %v51
  %v143 = vunpack.c.l.b16 %v52
  %v144 = vunpack.c.h.b16 %v52
  %v145 = vunpack.c.l.b16 %v53
  %v146 = vunpack.c.h.b16 %v53
  %v147 = vunpack.c.l.b16 %v54
  %v148 = vunpack.c.h.b16 %v54
  %v149 = vunpack.c.l.b16 %v55
  %v150 = vunpack.c.h.b16 %v55
  %v151 = vunpack.c.l.b16 %v56
  %v152 = vunpack.c.h.b16 %v56
  %v153 = vpack.c.b16 %v93, %v89
  %v154 = vpack.c.b16 %v94, %v90
  %v155 = vpack.c.b16 %v95, %v91
  %v156 = vpack.c.b16 %v96, %v92
  %v157 = vpack.c.b16 %v101, %v97
  %v158 = vpack.c.b16 %v102, %v98
  %v159 = vpack.c.b16 %v103, %v99
  %v160 = vpack.c.b16 %v104, %v100
  %v161 = vpack.c.b16 %v109, %v105
  %v162 = vpack.c.b16 %v110, %v106
  %v163 = vpack.c.b16 %v111, %v107
  %v164 = vpack.c.b16 %v112, %v108
  %v165 = vpack.c.b16 %v117, %v113
  %v166 = vpack.c.b16 %v118, %v114
  %v167 = vpack.c.b16 %v119, %v115
  %v168 = vpack.c.b16 %v120, %v116
  %v169 = vpack.c.b16 %v125, %v121
  %v170 = vpack.c.b16 %v126, %v122
  %v171 = vpack.c.b16 %v127, %v123
  %v172 = vpack.c.b16 %v128, %v124
  %v173 = vpack.c.b16 %v133, %v129
  %v174 = vpack.c.b16 %v134, %v130
  %v175 = vpack.c.b16 %v135, %v131
  %v176 = vpack.c.b16 %v136, %v132
  %v177 = vpack.c.b16 %v141, %v137
  %v178 = vpack.c.b16 %v142, %v138
  %v179 = vpack.c.b16 %v143, %v139
  %v180 = vpack.c.b16 %v144, %v140
  %v181 = vpack.c.b16 %v149, %v145
  %v182 = vpack.c.b16 %v150, %v146
  %v183 = vpack.c.b16 %v151, %v147
  %v184 = vpack.c.b16 %v152, %v148
  %217 = vmatpush.bf16.msra.mxu0 %v181
  %218 = vmatpush.bf16.msra.mxu0 %v177
  %219 = vmatpush.bf16.msra.mxu0 %v173
  %220 = vmatpush.bf16.msra.mxu0 %v169
  %221 = vmatpush.bf16.msra.mxu0 %v165
  %222 = vmatpush.bf16.msra.mxu0 %v161
  %223 = vmatpush.bf16.msra.mxu0 %v157
  %224 = vmatpush.bf16.msra.mxu0 %v153
  %225 = vmatmul.bf16.gmra.mxu0 %v24
  %v226 = vpop.f32.mrf.mxu0
  %v227 = vadd.f32 0.0, %v226
  %v228 = vpop.f32.mrf.mxu0
  %229 = vdwg.mxu0
  %230 = vmatpush.bf16.msra.mxu0 %v182
  %231 = vmatpush.bf16.msra.mxu0 %v178
  %232 = vmatpush.bf16.msra.mxu0 %v174
  %233 = vmatpush.bf16.msra.mxu0 %v170
  %234 = vmatpush.bf16.msra.mxu0 %v166
  %235 = vmatpush.bf16.msra.mxu0 %v162
  %236 = vmatpush.bf16.msra.mxu0 %v158
  %237 = vmatpush.bf16.msra.mxu0 %v154
  %238 = vmatmul.bf16.gmra.mxu0 %v24
  %v239 = vpop.f32.mrf.mxu0
  %v240 = vadd.f32 0.0, %v239
  %v241 = vpop.f32.mrf.mxu0
  %242 = vdwg.mxu0
  %243 = vmatpush.bf16.msra.mxu0 %v183
  %244 = vmatpush.bf16.msra.mxu0 %v179
  %245 = vmatpush.bf16.msra.mxu0 %v175
  %246 = vmatpush.bf16.msra.mxu0 %v171
  %247 = vmatpush.bf16.msra.mxu0 %v167
  %248 = vmatpush.bf16.msra.mxu0 %v163
  %249 = vmatpush.bf16.msra.mxu0 %v159
  %250 = vmatpush.bf16.msra.mxu0 %v155
  %251 = vmatmul.bf16.gmra.mxu0 %v24
  %v252 = vpop.f32.mrf.mxu0
  %v253 = vadd.f32 0.0, %v252
  %v254 = vpop.f32.mrf.mxu0
  %255 = vdwg.mxu0
  %256 = vmatpush.bf16.msra.mxu0 %v184
  %257 = vmatpush.bf16.msra.mxu0 %v180
  %258 = vmatpush.bf16.msra.mxu0 %v176
  %259 = vmatpush.bf16.msra.mxu0 %v172
  %260 = vmatpush.bf16.msra.mxu0 %v168
  %261 = vmatpush.bf16.msra.mxu0 %v164
  %262 = vmatpush.bf16.msra.mxu0 %v160
  %263 = vmatpush.bf16.msra.mxu0 %v156
  %264 = vmatmul.bf16.gmra.mxu0 %v24
  %v265 = vpop.f32.mrf.mxu0
  %v266 = vadd.f32 0.0, %v265
  %v267 = vpop.f32.mrf.mxu0
  %268 = vdwg.mxu0
  %v273 = vrot.slane %v240, 6
  %v274 = vrot.slane %v253, 4
  %v275 = vrot.slane %v266, 2
  %vm276 = vcmask 1041408
  %v277 = vsel %vm276, %v227, %v273
  %vm278 = vcmask 1045508
  %v279 = vsel %vm278, %v274, %v275
  %vm280 = vcmask 1043456
  %v281 = vsel %vm280, %v277, %v279
  %v283 = vadd.f32 %v22, %v281
  %v284 = vxor.u32 %v283, 2147483648
  %v285 = vmul.f32 %v284, 1.442695
  %v286 = vpow.pop %v285
  %v287 = vadd.f32 %v286, 1.0
  %v288 = vrcp.pop %v287
  %v289 = vmul.f32 %v287, %v288
  %v290 = vsub.f32 1.0, %v289
  %v291 = vmul.f32 %v288, %v290
  %v292 = vadd.f32 %v288, %v291
  %vm293 = vweird.f32 %v287
  %vm294 = vweird.f32 %v288
  %vm295 = vmor %vm293, %vm294
  %v296 = vsel %vm295, %v288, %v292
  %v297 = vand.u32 2147483647, %v287
  %vm298 = vcmp.eq.f32.partialorder %v297, 8.507059e+37
  %v299 = vand.u32 %v287, 2147483648
  %v300 = vor.u32 1.1754944e-38, %v299
  %v301 = vsel %vm298, %v300, %v296
  %v302 = vmul.f32 1.0, %v301
  %v304 = vrot.slane %v283, 2
  %v306 = vxor.u32 %v304, 2147483648
  %v307 = vmul.f32 %v306, 1.442695
  %v308 = vpow.pop %v307
  %v309 = vadd.f32 %v308, 1.0
  %v310 = vrcp.pop %v309
  %v311 = vmul.f32 %v309, %v310
  %v312 = vsub.f32 1.0, %v311
  %v313 = vmul.f32 %v310, %v312
  %v314 = vadd.f32 %v310, %v313
  %vm315 = vweird.f32 %v309
  %vm316 = vweird.f32 %v310
  %vm317 = vmor %vm315, %vm316
  %v318 = vsel %vm317, %v310, %v314
  %v319 = vand.u32 2147483647, %v309
  %vm320 = vcmp.eq.f32.partialorder %v319, 8.507059e+37
  %v321 = vand.u32 %v309, 2147483648
  %v322 = vor.u32 1.1754944e-38, %v321
  %v323 = vsel %vm320, %v322, %v318
  %v324 = vmul.f32 1.0, %v323
  %v325 = vrot.slane %v283, 4
  %v327 = vtanh.pop %v325
  %v328 = vrot.slane %v283, 6
  %v330 = vxor.u32 %v328, 2147483648
  %v331 = vmul.f32 %v330, 1.442695
  %v332 = vpow.pop %v331
  %v333 = vadd.f32 %v332, 1.0
  %v334 = vrcp.pop %v333
  %v335 = vmul.f32 %v333, %v334
  %v336 = vsub.f32 1.0, %v335
  %v337 = vmul.f32 %v334, %v336
  %v338 = vadd.f32 %v334, %v337
  %vm339 = vweird.f32 %v333
  %vm340 = vweird.f32 %v334
  %vm341 = vmor %vm339, %vm340
  %v342 = vsel %vm341, %v334, %v338
  %v343 = vand.u32 2147483647, %v333
  %vm344 = vcmp.eq.f32.partialorder %v343, 8.507059e+37
  %v345 = vand.u32 %v333, 2147483648
  %v346 = vor.u32 1.1754944e-38, %v345
  %v347 = vsel %vm344, %v346, %v342
  %v348 = vmul.f32 1.0, %v347
  %v349 = vld [vmem:[#allocation3] sm:$0x3]
  %v350 = vmul.f32 %v324, %v349
  %v351 = vmul.f32 %v302, %v327
  %v352 = vadd.f32 %v350, %v351
  %v353 = vtanh.pop %v352
  %v354 = vmul.f32 %v348, %v353
  %v355 = vstv %s21
  %vm356 = vcmp.lt.s32.totalorder %v355, %v20
  %v357 = vsel %vm356, 1, 0
  %358 = vset.pattern.permute.xlu0 0
  %359 = vperm.xlu0 %358, %v357
  %v360 = vpop.permute.xlu0 %359
  %vm361 = vcmp.eq.s32.totalorder %v360, 1
  %v362 = vsel %vm361, %v354, %v23
  %363 = vst [vmem:[#allocation2] sm:$0x3] %v362
  %v364 = vld [vmem:[#allocation3] sm:$0x3]
  %v365 = vsel %vm361, %v352, %v364
  %366 = vst [vmem:[#allocation3] sm:$0x3] %v365
  %v367 = vsel %vm361, %v354, 0.0
  %368 = vst [vmem:[%s3] sm:$0x3] %v367
  %s369 = scalar_lea.vmem %s0, 8
  %v370 = vld [vmem:[%s369] sm:$0xff]
  %v371 = vld [vmem:[#allocation2] sm:$0x3]
  %v372 = vpack.c.bf16 %v371, %v371
  %v373 = vld [vmem:[%s2] sm:$0xff]
  %v374 = vld [vmem:[%s2 + $0x8] sm:$0xff]
  %v375 = vld [vmem:[%s2 + $0x10] sm:$0xff]
  %v376 = vld [vmem:[%s2 + $0x18] sm:$0xff]
  %v377 = vld [vmem:[%s2 + $0x20] sm:$0xff]
  %v378 = vld [vmem:[%s2 + $0x28] sm:$0xff]
  %v379 = vld [vmem:[%s2 + $0x30] sm:$0xff]
  %v380 = vld [vmem:[%s2 + $0x38] sm:$0xff]
  %v381 = vld [vmem:[%s2 + $0x40] sm:$0xff]
  %v382 = vld [vmem:[%s2 + $0x48] sm:$0xff]
  %v383 = vld [vmem:[%s2 + $0x50] sm:$0xff]
  %v384 = vld [vmem:[%s2 + $0x58] sm:$0xff]
  %v385 = vld [vmem:[%s2 + $0x60] sm:$0xff]
  %v386 = vld [vmem:[%s2 + $0x68] sm:$0xff]
  %v387 = vld [vmem:[%s2 + $0x70] sm:$0xff]
  %v388 = vld [vmem:[%s2 + $0x78] sm:$0xff]
  %v389 = vld [vmem:[%s2 + $0x80] sm:$0xff]
  %v390 = vld [vmem:[%s2 + $0x88] sm:$0xff]
  %v391 = vld [vmem:[%s2 + $0x90] sm:$0xff]
  %v392 = vld [vmem:[%s2 + $0x98] sm:$0xff]
  %v393 = vld [vmem:[%s2 + $0xa0] sm:$0xff]
  %v394 = vld [vmem:[%s2 + $0xa8] sm:$0xff]
  %v395 = vld [vmem:[%s2 + $0xb0] sm:$0xff]
  %v396 = vld [vmem:[%s2 + $0xb8] sm:$0xff]
  %v397 = vld [vmem:[%s2 + $0xc0] sm:$0xff]
  %v398 = vld [vmem:[%s2 + $0xc8] sm:$0xff]
  %v399 = vld [vmem:[%s2 + $0xd0] sm:$0xff]
  %v400 = vld [vmem:[%s2 + $0xd8] sm:$0xff]
  %v401 = vld [vmem:[%s2 + $0xe0] sm:$0xff]
  %v402 = vld [vmem:[%s2 + $0xe8] sm:$0xff]
  %v403 = vld [vmem:[%s2 + $0xf0] sm:$0xff]
  %v404 = vld [vmem:[%s2 + $0xf8] sm:$0xff]
  %v437 = vunpack.c.l.b16 %v373
  %v438 = vunpack.c.h.b16 %v373
  %v439 = vunpack.c.l.b16 %v374
  %v440 = vunpack.c.h.b16 %v374
  %v441 = vunpack.c.l.b16 %v375
  %v442 = vunpack.c.h.b16 %v375
  %v443 = vunpack.c.l.b16 %v376
  %v444 = vunpack.c.h.b16 %v376
  %v445 = vunpack.c.l.b16 %v377
  %v446 = vunpack.c.h.b16 %v377
  %v447 = vunpack.c.l.b16 %v378
  %v448 = vunpack.c.h.b16 %v378
  %v449 = vunpack.c.l.b16 %v379
  %v450 = vunpack.c.h.b16 %v379
  %v451 = vunpack.c.l.b16 %v380
  %v452 = vunpack.c.h.b16 %v380
  %v453 = vunpack.c.l.b16 %v381
  %v454 = vunpack.c.h.b16 %v381
  %v455 = vunpack.c.l.b16 %v382
  %v456 = vunpack.c.h.b16 %v382
  %v457 = vunpack.c.l.b16 %v383
  %v458 = vunpack.c.h.b16 %v383
  %v459 = vunpack.c.l.b16 %v384
  %v460 = vunpack.c.h.b16 %v384
  %v461 = vunpack.c.l.b16 %v385
  %v462 = vunpack.c.h.b16 %v385
  %v463 = vunpack.c.l.b16 %v386
  %v464 = vunpack.c.h.b16 %v386
  %v465 = vunpack.c.l.b16 %v387
  %v466 = vunpack.c.h.b16 %v387
  %v467 = vunpack.c.l.b16 %v388
  %v468 = vunpack.c.h.b16 %v388
  %v469 = vunpack.c.l.b16 %v389
  %v470 = vunpack.c.h.b16 %v389
  %v471 = vunpack.c.l.b16 %v390
  %v472 = vunpack.c.h.b16 %v390
  %v473 = vunpack.c.l.b16 %v391
  %v474 = vunpack.c.h.b16 %v391
  %v475 = vunpack.c.l.b16 %v392
  %v476 = vunpack.c.h.b16 %v392
  %v477 = vunpack.c.l.b16 %v393
  %v478 = vunpack.c.h.b16 %v393
  %v479 = vunpack.c.l.b16 %v394
  %v480 = vunpack.c.h.b16 %v394
  %v481 = vunpack.c.l.b16 %v395
  %v482 = vunpack.c.h.b16 %v395
  %v483 = vunpack.c.l.b16 %v396
  %v484 = vunpack.c.h.b16 %v396
  %v485 = vunpack.c.l.b16 %v397
  %v486 = vunpack.c.h.b16 %v397
  %v487 = vunpack.c.l.b16 %v398
  %v488 = vunpack.c.h.b16 %v398
  %v489 = vunpack.c.l.b16 %v399
  %v490 = vunpack.c.h.b16 %v399
  %v491 = vunpack.c.l.b16 %v400
  %v492 = vunpack.c.h.b16 %v400
  %v493 = vunpack.c.l.b16 %v401
  %v494 = vunpack.c.h.b16 %v401
  %v495 = vunpack.c.l.b16 %v402
  %v496 = vunpack.c.h.b16 %v402
  %v497 = vunpack.c.l.b16 %v403
  %v498 = vunpack.c.h.b16 %v403
  %v499 = vunpack.c.l.b16 %v404
  %v500 = vunpack.c.h.b16 %v404
  %v501 = vpack.c.b16 %v441, %v437
  %v502 = vpack.c.b16 %v442, %v438
  %v503 = vpack.c.b16 %v443, %v439
  %v504 = vpack.c.b16 %v444, %v440
  %v505 = vpack.c.b16 %v449, %v445
  %v506 = vpack.c.b16 %v450, %v446
  %v507 = vpack.c.b16 %v451, %v447
  %v508 = vpack.c.b16 %v452, %v448
  %v509 = vpack.c.b16 %v457, %v453
  %v510 = vpack.c.b16 %v458, %v454
  %v511 = vpack.c.b16 %v459, %v455
  %v512 = vpack.c.b16 %v460, %v456
  %v513 = vpack.c.b16 %v465, %v461
  %v514 = vpack.c.b16 %v466, %v462
  %v515 = vpack.c.b16 %v467, %v463
  %v516 = vpack.c.b16 %v468, %v464
  %v517 = vpack.c.b16 %v473, %v469
  %v518 = vpack.c.b16 %v474, %v470
  %v519 = vpack.c.b16 %v475, %v471
  %v520 = vpack.c.b16 %v476, %v472
  %v521 = vpack.c.b16 %v481, %v477
  %v522 = vpack.c.b16 %v482, %v478
  %v523 = vpack.c.b16 %v483, %v479
  %v524 = vpack.c.b16 %v484, %v480
  %v525 = vpack.c.b16 %v489, %v485
  %v526 = vpack.c.b16 %v490, %v486
  %v527 = vpack.c.b16 %v491, %v487
  %v528 = vpack.c.b16 %v492, %v488
  %v529 = vpack.c.b16 %v497, %v493
  %v530 = vpack.c.b16 %v498, %v494
  %v531 = vpack.c.b16 %v499, %v495
  %v532 = vpack.c.b16 %v500, %v496
  %565 = vmatpush.bf16.msra.mxu0 %v529
  %566 = vmatpush.bf16.msra.mxu0 %v525
  %567 = vmatpush.bf16.msra.mxu0 %v521
  %568 = vmatpush.bf16.msra.mxu0 %v517
  %569 = vmatpush.bf16.msra.mxu0 %v513
  %570 = vmatpush.bf16.msra.mxu0 %v509
  %571 = vmatpush.bf16.msra.mxu0 %v505
  %572 = vmatpush.bf16.msra.mxu0 %v501
  %573 = vmatmul.bf16.gmra.mxu0 %v372
  %v574 = vpop.f32.mrf.mxu0
  %v575 = vadd.f32 0.0, %v574
  %v576 = vpop.f32.mrf.mxu0
  %577 = vdwg.mxu0
  %578 = vmatpush.bf16.msra.mxu0 %v530
  %579 = vmatpush.bf16.msra.mxu0 %v526
  %580 = vmatpush.bf16.msra.mxu0 %v522
  %581 = vmatpush.bf16.msra.mxu0 %v518
  %582 = vmatpush.bf16.msra.mxu0 %v514
  %583 = vmatpush.bf16.msra.mxu0 %v510
  %584 = vmatpush.bf16.msra.mxu0 %v506
  %585 = vmatpush.bf16.msra.mxu0 %v502
  %586 = vmatmul.bf16.gmra.mxu0 %v372
  %v587 = vpop.f32.mrf.mxu0
  %v588 = vadd.f32 0.0, %v587
  %v589 = vpop.f32.mrf.mxu0
  %590 = vdwg.mxu0
  %591 = vmatpush.bf16.msra.mxu0 %v531
  %592 = vmatpush.bf16.msra.mxu0 %v527
  %593 = vmatpush.bf16.msra.mxu0 %v523
  %594 = vmatpush.bf16.msra.mxu0 %v519
  %595 = vmatpush.bf16.msra.mxu0 %v515
  %596 = vmatpush.bf16.msra.mxu0 %v511
  %597 = vmatpush.bf16.msra.mxu0 %v507
  %598 = vmatpush.bf16.msra.mxu0 %v503
  %599 = vmatmul.bf16.gmra.mxu0 %v372
  %v600 = vpop.f32.mrf.mxu0
  %v601 = vadd.f32 0.0, %v600
  %v602 = vpop.f32.mrf.mxu0
  %603 = vdwg.mxu0
  %604 = vmatpush.bf16.msra.mxu0 %v532
  %605 = vmatpush.bf16.msra.mxu0 %v528
  %606 = vmatpush.bf16.msra.mxu0 %v524
  %607 = vmatpush.bf16.msra.mxu0 %v520
  %608 = vmatpush.bf16.msra.mxu0 %v516
  %609 = vmatpush.bf16.msra.mxu0 %v512
  %610 = vmatpush.bf16.msra.mxu0 %v508
  %611 = vmatpush.bf16.msra.mxu0 %v504
  %612 = vmatmul.bf16.gmra.mxu0 %v372
  %v613 = vpop.f32.mrf.mxu0
  %v614 = vadd.f32 0.0, %v613
  %v615 = vpop.f32.mrf.mxu0
  %616 = vdwg.mxu0
  %v621 = vrot.slane %v588, 6
  %v622 = vrot.slane %v601, 4
  %v623 = vrot.slane %v614, 2
  %v624 = vsel %vm276, %v575, %v621
  %v625 = vsel %vm278, %v622, %v623
  %v626 = vsel %vm280, %v624, %v625
  %v628 = vadd.f32 %v370, %v626
  %v629 = vxor.u32 %v628, 2147483648
  %v630 = vmul.f32 %v629, 1.442695
  %v631 = vpow.pop %v630
  %v632 = vadd.f32 %v631, 1.0
  %v633 = vrcp.pop %v632
  %v634 = vmul.f32 %v632, %v633
  %v635 = vsub.f32 1.0, %v634
  %v636 = vmul.f32 %v633, %v635
  %v637 = vadd.f32 %v633, %v636
  %vm638 = vweird.f32 %v632
  %vm639 = vweird.f32 %v633
  %vm640 = vmor %vm638, %vm639
  %v641 = vsel %vm640, %v633, %v637
  %v642 = vand.u32 2147483647, %v632
  %vm643 = vcmp.eq.f32.partialorder %v642, 8.507059e+37
  %v644 = vand.u32 %v632, 2147483648
  %v645 = vor.u32 1.1754944e-38, %v644
  %v646 = vsel %vm643, %v645, %v641
  %v647 = vmul.f32 1.0, %v646
  %v649 = vrot.slane %v628, 2
  %v651 = vxor.u32 %v649, 2147483648
  %v652 = vmul.f32 %v651, 1.442695
  %v653 = vpow.pop %v652
  %v654 = vadd.f32 %v653, 1.0
  %v655 = vrcp.pop %v654
  %v656 = vmul.f32 %v654, %v655
  %v657 = vsub.f32 1.0, %v656
  %v658 = vmul.f32 %v655, %v657
  %v659 = vadd.f32 %v655, %v658
  %vm660 = vweird.f32 %v654
  %vm661 = vweird.f32 %v655
  %vm662 = vmor %vm660, %vm661
  %v663 = vsel %vm662, %v655, %v659
  %v664 = vand.u32 2147483647, %v654
  %vm665 = vcmp.eq.f32.partialorder %v664, 8.507059e+37
  %v666 = vand.u32 %v654, 2147483648
  %v667 = vor.u32 1.1754944e-38, %v666
  %v668 = vsel %vm665, %v667, %v663
  %v669 = vmul.f32 1.0, %v668
  %v670 = vrot.slane %v628, 4
  %v672 = vtanh.pop %v670
  %v673 = vrot.slane %v628, 6
  %v675 = vxor.u32 %v673, 2147483648
  %v676 = vmul.f32 %v675, 1.442695
  %v677 = vpow.pop %v676
  %v678 = vadd.f32 %v677, 1.0
  %v679 = vrcp.pop %v678
  %v680 = vmul.f32 %v678, %v679
  %v681 = vsub.f32 1.0, %v680
  %v682 = vmul.f32 %v679, %v681
  %v683 = vadd.f32 %v679, %v682
  %vm684 = vweird.f32 %v678
  %vm685 = vweird.f32 %v679
  %vm686 = vmor %vm684, %vm685
  %v687 = vsel %vm686, %v679, %v683
  %v688 = vand.u32 2147483647, %v678
  %vm689 = vcmp.eq.f32.partialorder %v688, 8.507059e+37
  %v690 = vand.u32 %v678, 2147483648
  %v691 = vor.u32 1.1754944e-38, %v690
  %v692 = vsel %vm689, %v691, %v687
  %v693 = vmul.f32 1.0, %v692
  %v694 = vld [vmem:[#allocation3] sm:$0x3]
  %v695 = vmul.f32 %v669, %v694
  %v696 = vmul.f32 %v647, %v672
  %v697 = vadd.f32 %v695, %v696
  %v698 = vtanh.pop %v697
  %v699 = vmul.f32 %v693, %v698
  %s700 = sadd.s32 %s21, 1
  %v701 = vstv %s700
  %vm702 = vcmp.lt.s32.totalorder %v701, %v20
  %v703 = vsel %vm702, 1, 0
  %704 = vset.pattern.permute.xlu0 0
  %705 = vperm.xlu0 %704, %v703
  %v706 = vpop.permute.xlu0 %705
  %vm707 = vcmp.eq.s32.totalorder %v706, 1
  %v708 = vsel %vm707, %v699, %v371
  %709 = vst [vmem:[#allocation2] sm:$0x3] %v708
  %v710 = vld [vmem:[#allocation3] sm:$0x3]
  %v711 = vsel %vm707, %v697, %v710
  %712 = vst [vmem:[#allocation3] sm:$0x3] %v711
  %v713 = vsel %vm707, %v699, 0.0
  %s714 = scalar_lea.vmem %s3, 2
  %715 = vst [vmem:[%s714] sm:$0x3] %v713
  %s716 = scalar_lea.vmem %s0, 16
  %v717 = vld [vmem:[%s716] sm:$0xff]
  %v718 = vld [vmem:[#allocation2] sm:$0x3]
  %v719 = vpack.c.bf16 %v718, %v718
  %v720 = vld [vmem:[%s2] sm:$0xff]
  %v721 = vld [vmem:[%s2 + $0x8] sm:$0xff]
  %v722 = vld [vmem:[%s2 + $0x10] sm:$0xff]
  %v723 = vld [vmem:[%s2 + $0x18] sm:$0xff]
  %v724 = vld [vmem:[%s2 + $0x20] sm:$0xff]
  %v725 = vld [vmem:[%s2 + $0x28] sm:$0xff]
  %v726 = vld [vmem:[%s2 + $0x30] sm:$0xff]
  %v727 = vld [vmem:[%s2 + $0x38] sm:$0xff]
  %v728 = vld [vmem:[%s2 + $0x40] sm:$0xff]
  %v729 = vld [vmem:[%s2 + $0x48] sm:$0xff]
  %v730 = vld [vmem:[%s2 + $0x50] sm:$0xff]
  %v731 = vld [vmem:[%s2 + $0x58] sm:$0xff]
  %v732 = vld [vmem:[%s2 + $0x60] sm:$0xff]
  %v733 = vld [vmem:[%s2 + $0x68] sm:$0xff]
  %v734 = vld [vmem:[%s2 + $0x70] sm:$0xff]
  %v735 = vld [vmem:[%s2 + $0x78] sm:$0xff]
  %v736 = vld [vmem:[%s2 + $0x80] sm:$0xff]
  %v737 = vld [vmem:[%s2 + $0x88] sm:$0xff]
  %v738 = vld [vmem:[%s2 + $0x90] sm:$0xff]
  %v739 = vld [vmem:[%s2 + $0x98] sm:$0xff]
  %v740 = vld [vmem:[%s2 + $0xa0] sm:$0xff]
  %v741 = vld [vmem:[%s2 + $0xa8] sm:$0xff]
  %v742 = vld [vmem:[%s2 + $0xb0] sm:$0xff]
  %v743 = vld [vmem:[%s2 + $0xb8] sm:$0xff]
  %v744 = vld [vmem:[%s2 + $0xc0] sm:$0xff]
  %v745 = vld [vmem:[%s2 + $0xc8] sm:$0xff]
  %v746 = vld [vmem:[%s2 + $0xd0] sm:$0xff]
  %v747 = vld [vmem:[%s2 + $0xd8] sm:$0xff]
  %v748 = vld [vmem:[%s2 + $0xe0] sm:$0xff]
  %v749 = vld [vmem:[%s2 + $0xe8] sm:$0xff]
  %v750 = vld [vmem:[%s2 + $0xf0] sm:$0xff]
  %v751 = vld [vmem:[%s2 + $0xf8] sm:$0xff]
  %v784 = vunpack.c.l.b16 %v720
  %v785 = vunpack.c.h.b16 %v720
  %v786 = vunpack.c.l.b16 %v721
  %v787 = vunpack.c.h.b16 %v721
  %v788 = vunpack.c.l.b16 %v722
  %v789 = vunpack.c.h.b16 %v722
  %v790 = vunpack.c.l.b16 %v723
  %v791 = vunpack.c.h.b16 %v723
  %v792 = vunpack.c.l.b16 %v724
  %v793 = vunpack.c.h.b16 %v724
  %v794 = vunpack.c.l.b16 %v725
  %v795 = vunpack.c.h.b16 %v725
  %v796 = vunpack.c.l.b16 %v726
  %v797 = vunpack.c.h.b16 %v726
  %v798 = vunpack.c.l.b16 %v727
  %v799 = vunpack.c.h.b16 %v727
  %v800 = vunpack.c.l.b16 %v728
  %v801 = vunpack.c.h.b16 %v728
  %v802 = vunpack.c.l.b16 %v729
  %v803 = vunpack.c.h.b16 %v729
  %v804 = vunpack.c.l.b16 %v730
  %v805 = vunpack.c.h.b16 %v730
  %v806 = vunpack.c.l.b16 %v731
  %v807 = vunpack.c.h.b16 %v731
  %v808 = vunpack.c.l.b16 %v732
  %v809 = vunpack.c.h.b16 %v732
  %v810 = vunpack.c.l.b16 %v733
  %v811 = vunpack.c.h.b16 %v733
  %v812 = vunpack.c.l.b16 %v734
  %v813 = vunpack.c.h.b16 %v734
  %v814 = vunpack.c.l.b16 %v735
  %v815 = vunpack.c.h.b16 %v735
  %v816 = vunpack.c.l.b16 %v736
  %v817 = vunpack.c.h.b16 %v736
  %v818 = vunpack.c.l.b16 %v737
  %v819 = vunpack.c.h.b16 %v737
  %v820 = vunpack.c.l.b16 %v738
  %v821 = vunpack.c.h.b16 %v738
  %v822 = vunpack.c.l.b16 %v739
  %v823 = vunpack.c.h.b16 %v739
  %v824 = vunpack.c.l.b16 %v740
  %v825 = vunpack.c.h.b16 %v740
  %v826 = vunpack.c.l.b16 %v741
  %v827 = vunpack.c.h.b16 %v741
  %v828 = vunpack.c.l.b16 %v742
  %v829 = vunpack.c.h.b16 %v742
  %v830 = vunpack.c.l.b16 %v743
  %v831 = vunpack.c.h.b16 %v743
  %v832 = vunpack.c.l.b16 %v744
  %v833 = vunpack.c.h.b16 %v744
  %v834 = vunpack.c.l.b16 %v745
  %v835 = vunpack.c.h.b16 %v745
  %v836 = vunpack.c.l.b16 %v746
  %v837 = vunpack.c.h.b16 %v746
  %v838 = vunpack.c.l.b16 %v747
  %v839 = vunpack.c.h.b16 %v747
  %v840 = vunpack.c.l.b16 %v748
  %v841 = vunpack.c.h.b16 %v748
  %v842 = vunpack.c.l.b16 %v749
  %v843 = vunpack.c.h.b16 %v749
  %v844 = vunpack.c.l.b16 %v750
  %v845 = vunpack.c.h.b16 %v750
  %v846 = vunpack.c.l.b16 %v751
  %v847 = vunpack.c.h.b16 %v751
  %v848 = vpack.c.b16 %v788, %v784
  %v849 = vpack.c.b16 %v789, %v785
  %v850 = vpack.c.b16 %v790, %v786
  %v851 = vpack.c.b16 %v791, %v787
  %v852 = vpack.c.b16 %v796, %v792
  %v853 = vpack.c.b16 %v797, %v793
  %v854 = vpack.c.b16 %v798, %v794
  %v855 = vpack.c.b16 %v799, %v795
  %v856 = vpack.c.b16 %v804, %v800
  %v857 = vpack.c.b16 %v805, %v801
  %v858 = vpack.c.b16 %v806, %v802
  %v859 = vpack.c.b16 %v807, %v803
  %v860 = vpack.c.b16 %v812, %v808
  %v861 = vpack.c.b16 %v813, %v809
  %v862 = vpack.c.b16 %v814, %v810
  %v863 = vpack.c.b16 %v815, %v811
  %v864 = vpack.c.b16 %v820, %v816
  %v865 = vpack.c.b16 %v821, %v817
  %v866 = vpack.c.b16 %v822, %v818
  %v867 = vpack.c.b16 %v823, %v819
  %v868 = vpack.c.b16 %v828, %v824
  %v869 = vpack.c.b16 %v829, %v825
  %v870 = vpack.c.b16 %v830, %v826
  %v871 = vpack.c.b16 %v831, %v827
  %v872 = vpack.c.b16 %v836, %v832
  %v873 = vpack.c.b16 %v837, %v833
  %v874 = vpack.c.b16 %v838, %v834
  %v875 = vpack.c.b16 %v839, %v835
  %v876 = vpack.c.b16 %v844, %v840
  %v877 = vpack.c.b16 %v845, %v841
  %v878 = vpack.c.b16 %v846, %v842
  %v879 = vpack.c.b16 %v847, %v843
  %912 = vmatpush.bf16.msra.mxu0 %v876
  %913 = vmatpush.bf16.msra.mxu0 %v872
  %914 = vmatpush.bf16.msra.mxu0 %v868
  %915 = vmatpush.bf16.msra.mxu0 %v864
  %916 = vmatpush.bf16.msra.mxu0 %v860
  %917 = vmatpush.bf16.msra.mxu0 %v856
  %918 = vmatpush.bf16.msra.mxu0 %v852
  %919 = vmatpush.bf16.msra.mxu0 %v848
  %920 = vmatmul.bf16.gmra.mxu0 %v719
  %v921 = vpop.f32.mrf.mxu0
  %v922 = vadd.f32 0.0, %v921
  %v923 = vpop.f32.mrf.mxu0
  %924 = vdwg.mxu0
  %925 = vmatpush.bf16.msra.mxu0 %v877
  %926 = vmatpush.bf16.msra.mxu0 %v873
  %927 = vmatpush.bf16.msra.mxu0 %v869
  %928 = vmatpush.bf16.msra.mxu0 %v865
  %929 = vmatpush.bf16.msra.mxu0 %v861
  %930 = vmatpush.bf16.msra.mxu0 %v857
  %931 = vmatpush.bf16.msra.mxu0 %v853
  %932 = vmatpush.bf16.msra.mxu0 %v849
  %933 = vmatmul.bf16.gmra.mxu0 %v719
  %v934 = vpop.f32.mrf.mxu0
  %v935 = vadd.f32 0.0, %v934
  %v936 = vpop.f32.mrf.mxu0
  %937 = vdwg.mxu0
  %938 = vmatpush.bf16.msra.mxu0 %v878
  %939 = vmatpush.bf16.msra.mxu0 %v874
  %940 = vmatpush.bf16.msra.mxu0 %v870
  %941 = vmatpush.bf16.msra.mxu0 %v866
  %942 = vmatpush.bf16.msra.mxu0 %v862
  %943 = vmatpush.bf16.msra.mxu0 %v858
  %944 = vmatpush.bf16.msra.mxu0 %v854
  %945 = vmatpush.bf16.msra.mxu0 %v850
  %946 = vmatmul.bf16.gmra.mxu0 %v719
  %v947 = vpop.f32.mrf.mxu0
  %v948 = vadd.f32 0.0, %v947
  %v949 = vpop.f32.mrf.mxu0
  %950 = vdwg.mxu0
  %951 = vmatpush.bf16.msra.mxu0 %v879
  %952 = vmatpush.bf16.msra.mxu0 %v875
  %953 = vmatpush.bf16.msra.mxu0 %v871
  %954 = vmatpush.bf16.msra.mxu0 %v867
  %955 = vmatpush.bf16.msra.mxu0 %v863
  %956 = vmatpush.bf16.msra.mxu0 %v859
  %957 = vmatpush.bf16.msra.mxu0 %v855
  %958 = vmatpush.bf16.msra.mxu0 %v851
  %959 = vmatmul.bf16.gmra.mxu0 %v719
  %v960 = vpop.f32.mrf.mxu0
  %v961 = vadd.f32 0.0, %v960
  %v962 = vpop.f32.mrf.mxu0
  %963 = vdwg.mxu0
  %v968 = vrot.slane %v935, 6
  %v969 = vrot.slane %v948, 4
  %v970 = vrot.slane %v961, 2
  %v971 = vsel %vm276, %v922, %v968
  %v972 = vsel %vm278, %v969, %v970
  %v973 = vsel %vm280, %v971, %v972
  %v975 = vadd.f32 %v717, %v973
  %v976 = vxor.u32 %v975, 2147483648
  %v977 = vmul.f32 %v976, 1.442695
  %v978 = vpow.pop %v977
  %v979 = vadd.f32 %v978, 1.0
  %v980 = vrcp.pop %v979
  %v981 = vmul.f32 %v979, %v980
  %v982 = vsub.f32 1.0, %v981
  %v983 = vmul.f32 %v980, %v982
  %v984 = vadd.f32 %v980, %v983
  %vm985 = vweird.f32 %v979
  %vm986 = vweird.f32 %v980
  %vm987 = vmor %vm985, %vm986
  %v988 = vsel %vm987, %v980, %v984
  %v989 = vand.u32 2147483647, %v979
  %vm990 = vcmp.eq.f32.partialorder %v989, 8.507059e+37
  %v991 = vand.u32 %v979, 2147483648
  %v992 = vor.u32 1.1754944e-38, %v991
  %v993 = vsel %vm990, %v992, %v988
  %v994 = vmul.f32 1.0, %v993
  %v996 = vrot.slane %v975, 2
  %v998 = vxor.u32 %v996, 2147483648
  %v999 = vmul.f32 %v998, 1.442695
  %v1000 = vpow.pop %v999
  %v1001 = vadd.f32 %v1000, 1.0
  %v1002 = vrcp.pop %v1001
  %v1003 = vmul.f32 %v1001, %v1002
  %v1004 = vsub.f32 1.0, %v1003
  %v1005 = vmul.f32 %v1002, %v1004
  %v1006 = vadd.f32 %v1002, %v1005
  %vm1007 = vweird.f32 %v1001
  %vm1008 = vweird.f32 %v1002
  %vm1009 = vmor %vm1007, %vm1008
  %v1010 = vsel %vm1009, %v1002, %v1006
  %v1011 = vand.u32 2147483647, %v1001
  %vm1012 = vcmp.eq.f32.partialorder %v1011, 8.507059e+37
  %v1013 = vand.u32 %v1001, 2147483648
  %v1014 = vor.u32 1.1754944e-38, %v1013
  %v1015 = vsel %vm1012, %v1014, %v1010
  %v1016 = vmul.f32 1.0, %v1015
  %v1017 = vrot.slane %v975, 4
  %v1019 = vtanh.pop %v1017
  %v1020 = vrot.slane %v975, 6
  %v1022 = vxor.u32 %v1020, 2147483648
  %v1023 = vmul.f32 %v1022, 1.442695
  %v1024 = vpow.pop %v1023
  %v1025 = vadd.f32 %v1024, 1.0
  %v1026 = vrcp.pop %v1025
  %v1027 = vmul.f32 %v1025, %v1026
  %v1028 = vsub.f32 1.0, %v1027
  %v1029 = vmul.f32 %v1026, %v1028
  %v1030 = vadd.f32 %v1026, %v1029
  %vm1031 = vweird.f32 %v1025
  %vm1032 = vweird.f32 %v1026
  %vm1033 = vmor %vm1031, %vm1032
  %v1034 = vsel %vm1033, %v1026, %v1030
  %v1035 = vand.u32 2147483647, %v1025
  %vm1036 = vcmp.eq.f32.partialorder %v1035, 8.507059e+37
  %v1037 = vand.u32 %v1025, 2147483648
  %v1038 = vor.u32 1.1754944e-38, %v1037
  %v1039 = vsel %vm1036, %v1038, %v1034
  %v1040 = vmul.f32 1.0, %v1039
  %v1041 = vld [vmem:[#allocation3] sm:$0x3]
  %v1042 = vmul.f32 %v1016, %v1041
  %v1043 = vmul.f32 %v994, %v1019
  %v1044 = vadd.f32 %v1042, %v1043
  %v1045 = vtanh.pop %v1044
  %v1046 = vmul.f32 %v1040, %v1045
  %s1047 = sadd.s32 %s21, 2
  %v1048 = vstv %s1047
  %vm1049 = vcmp.lt.s32.totalorder %v1048, %v20
  %v1050 = vsel %vm1049, 1, 0
  %1051 = vset.pattern.permute.xlu0 0
  %1052 = vperm.xlu0 %1051, %v1050
  %v1053 = vpop.permute.xlu0 %1052
  %vm1054 = vcmp.eq.s32.totalorder %v1053, 1
  %v1055 = vsel %vm1054, %v1046, %v718
  %1056 = vst [vmem:[#allocation2] sm:$0x3] %v1055
  %v1057 = vld [vmem:[#allocation3] sm:$0x3]
  %v1058 = vsel %vm1054, %v1044, %v1057
  %1059 = vst [vmem:[#allocation3] sm:$0x3] %v1058
  %v1060 = vsel %vm1054, %v1046, 0.0
  %s1061 = scalar_lea.vmem %s3, 4
  %1062 = vst [vmem:[%s1061] sm:$0x3] %v1060
  %s1063 = scalar_lea.vmem %s0, 24
  %v1064 = vld [vmem:[%s1063] sm:$0xff]
  %v1065 = vld [vmem:[#allocation2] sm:$0x3]
  %v1066 = vpack.c.bf16 %v1065, %v1065
  %v1067 = vld [vmem:[%s2] sm:$0xff]
  %v1068 = vld [vmem:[%s2 + $0x8] sm:$0xff]
  %v1069 = vld [vmem:[%s2 + $0x10] sm:$0xff]
  %v1070 = vld [vmem:[%s2 + $0x18] sm:$0xff]
  %v1071 = vld [vmem:[%s2 + $0x20] sm:$0xff]
  %v1072 = vld [vmem:[%s2 + $0x28] sm:$0xff]
  %v1073 = vld [vmem:[%s2 + $0x30] sm:$0xff]
  %v1074 = vld [vmem:[%s2 + $0x38] sm:$0xff]
  %v1075 = vld [vmem:[%s2 + $0x40] sm:$0xff]
  %v1076 = vld [vmem:[%s2 + $0x48] sm:$0xff]
  %v1077 = vld [vmem:[%s2 + $0x50] sm:$0xff]
  %v1078 = vld [vmem:[%s2 + $0x58] sm:$0xff]
  %v1079 = vld [vmem:[%s2 + $0x60] sm:$0xff]
  %v1080 = vld [vmem:[%s2 + $0x68] sm:$0xff]
  %v1081 = vld [vmem:[%s2 + $0x70] sm:$0xff]
  %v1082 = vld [vmem:[%s2 + $0x78] sm:$0xff]
  %v1083 = vld [vmem:[%s2 + $0x80] sm:$0xff]
  %v1084 = vld [vmem:[%s2 + $0x88] sm:$0xff]
  %v1085 = vld [vmem:[%s2 + $0x90] sm:$0xff]
  %v1086 = vld [vmem:[%s2 + $0x98] sm:$0xff]
  %v1087 = vld [vmem:[%s2 + $0xa0] sm:$0xff]
  %v1088 = vld [vmem:[%s2 + $0xa8] sm:$0xff]
  %v1089 = vld [vmem:[%s2 + $0xb0] sm:$0xff]
  %v1090 = vld [vmem:[%s2 + $0xb8] sm:$0xff]
  %v1091 = vld [vmem:[%s2 + $0xc0] sm:$0xff]
  %v1092 = vld [vmem:[%s2 + $0xc8] sm:$0xff]
  %v1093 = vld [vmem:[%s2 + $0xd0] sm:$0xff]
  %v1094 = vld [vmem:[%s2 + $0xd8] sm:$0xff]
  %v1095 = vld [vmem:[%s2 + $0xe0] sm:$0xff]
  %v1096 = vld [vmem:[%s2 + $0xe8] sm:$0xff]
  %v1097 = vld [vmem:[%s2 + $0xf0] sm:$0xff]
  %v1098 = vld [vmem:[%s2 + $0xf8] sm:$0xff]
  %v1131 = vunpack.c.l.b16 %v1067
  %v1132 = vunpack.c.h.b16 %v1067
  %v1133 = vunpack.c.l.b16 %v1068
  %v1134 = vunpack.c.h.b16 %v1068
  %v1135 = vunpack.c.l.b16 %v1069
  %v1136 = vunpack.c.h.b16 %v1069
  %v1137 = vunpack.c.l.b16 %v1070
  %v1138 = vunpack.c.h.b16 %v1070
  %v1139 = vunpack.c.l.b16 %v1071
  %v1140 = vunpack.c.h.b16 %v1071
  %v1141 = vunpack.c.l.b16 %v1072
  %v1142 = vunpack.c.h.b16 %v1072
  %v1143 = vunpack.c.l.b16 %v1073
  %v1144 = vunpack.c.h.b16 %v1073
  %v1145 = vunpack.c.l.b16 %v1074
  %v1146 = vunpack.c.h.b16 %v1074
  %v1147 = vunpack.c.l.b16 %v1075
  %v1148 = vunpack.c.h.b16 %v1075
  %v1149 = vunpack.c.l.b16 %v1076
  %v1150 = vunpack.c.h.b16 %v1076
  %v1151 = vunpack.c.l.b16 %v1077
  %v1152 = vunpack.c.h.b16 %v1077
  %v1153 = vunpack.c.l.b16 %v1078
  %v1154 = vunpack.c.h.b16 %v1078
  %v1155 = vunpack.c.l.b16 %v1079
  %v1156 = vunpack.c.h.b16 %v1079
  %v1157 = vunpack.c.l.b16 %v1080
  %v1158 = vunpack.c.h.b16 %v1080
  %v1159 = vunpack.c.l.b16 %v1081
  %v1160 = vunpack.c.h.b16 %v1081
  %v1161 = vunpack.c.l.b16 %v1082
  %v1162 = vunpack.c.h.b16 %v1082
  %v1163 = vunpack.c.l.b16 %v1083
  %v1164 = vunpack.c.h.b16 %v1083
  %v1165 = vunpack.c.l.b16 %v1084
  %v1166 = vunpack.c.h.b16 %v1084
  %v1167 = vunpack.c.l.b16 %v1085
  %v1168 = vunpack.c.h.b16 %v1085
  %v1169 = vunpack.c.l.b16 %v1086
  %v1170 = vunpack.c.h.b16 %v1086
  %v1171 = vunpack.c.l.b16 %v1087
  %v1172 = vunpack.c.h.b16 %v1087
  %v1173 = vunpack.c.l.b16 %v1088
  %v1174 = vunpack.c.h.b16 %v1088
  %v1175 = vunpack.c.l.b16 %v1089
  %v1176 = vunpack.c.h.b16 %v1089
  %v1177 = vunpack.c.l.b16 %v1090
  %v1178 = vunpack.c.h.b16 %v1090
  %v1179 = vunpack.c.l.b16 %v1091
  %v1180 = vunpack.c.h.b16 %v1091
  %v1181 = vunpack.c.l.b16 %v1092
  %v1182 = vunpack.c.h.b16 %v1092
  %v1183 = vunpack.c.l.b16 %v1093
  %v1184 = vunpack.c.h.b16 %v1093
  %v1185 = vunpack.c.l.b16 %v1094
  %v1186 = vunpack.c.h.b16 %v1094
  %v1187 = vunpack.c.l.b16 %v1095
  %v1188 = vunpack.c.h.b16 %v1095
  %v1189 = vunpack.c.l.b16 %v1096
  %v1190 = vunpack.c.h.b16 %v1096
  %v1191 = vunpack.c.l.b16 %v1097
  %v1192 = vunpack.c.h.b16 %v1097
  %v1193 = vunpack.c.l.b16 %v1098
  %v1194 = vunpack.c.h.b16 %v1098
  %v1195 = vpack.c.b16 %v1135, %v1131
  %v1196 = vpack.c.b16 %v1136, %v1132
  %v1197 = vpack.c.b16 %v1137, %v1133
  %v1198 = vpack.c.b16 %v1138, %v1134
  %v1199 = vpack.c.b16 %v1143, %v1139
  %v1200 = vpack.c.b16 %v1144, %v1140
  %v1201 = vpack.c.b16 %v1145, %v1141
  %v1202 = vpack.c.b16 %v1146, %v1142
  %v1203 = vpack.c.b16 %v1151, %v1147
  %v1204 = vpack.c.b16 %v1152, %v1148
  %v1205 = vpack.c.b16 %v1153, %v1149
  %v1206 = vpack.c.b16 %v1154, %v1150
  %v1207 = vpack.c.b16 %v1159, %v1155
  %v1208 = vpack.c.b16 %v1160, %v1156
  %v1209 = vpack.c.b16 %v1161, %v1157
  %v1210 = vpack.c.b16 %v1162, %v1158
  %v1211 = vpack.c.b16 %v1167, %v1163
  %v1212 = vpack.c.b16 %v1168, %v1164
  %v1213 = vpack.c.b16 %v1169, %v1165
  %v1214 = vpack.c.b16 %v1170, %v1166
  %v1215 = vpack.c.b16 %v1175, %v1171
  %v1216 = vpack.c.b16 %v1176, %v1172
  %v1217 = vpack.c.b16 %v1177, %v1173
  %v1218 = vpack.c.b16 %v1178, %v1174
  %v1219 = vpack.c.b16 %v1183, %v1179
  %v1220 = vpack.c.b16 %v1184, %v1180
  %v1221 = vpack.c.b16 %v1185, %v1181
  %v1222 = vpack.c.b16 %v1186, %v1182
  %v1223 = vpack.c.b16 %v1191, %v1187
  %v1224 = vpack.c.b16 %v1192, %v1188
  %v1225 = vpack.c.b16 %v1193, %v1189
  %v1226 = vpack.c.b16 %v1194, %v1190
  %1259 = vmatpush.bf16.msra.mxu0 %v1223
  %1260 = vmatpush.bf16.msra.mxu0 %v1219
  %1261 = vmatpush.bf16.msra.mxu0 %v1215
  %1262 = vmatpush.bf16.msra.mxu0 %v1211
  %1263 = vmatpush.bf16.msra.mxu0 %v1207
  %1264 = vmatpush.bf16.msra.mxu0 %v1203
  %1265 = vmatpush.bf16.msra.mxu0 %v1199
  %1266 = vmatpush.bf16.msra.mxu0 %v1195
  %1267 = vmatmul.bf16.gmra.mxu0 %v1066
  %v1268 = vpop.f32.mrf.mxu0
  %v1269 = vadd.f32 0.0, %v1268
  %v1270 = vpop.f32.mrf.mxu0
  %1271 = vdwg.mxu0
  %1272 = vmatpush.bf16.msra.mxu0 %v1224
  %1273 = vmatpush.bf16.msra.mxu0 %v1220
  %1274 = vmatpush.bf16.msra.mxu0 %v1216
  %1275 = vmatpush.bf16.msra.mxu0 %v1212
  %1276 = vmatpush.bf16.msra.mxu0 %v1208
  %1277 = vmatpush.bf16.msra.mxu0 %v1204
  %1278 = vmatpush.bf16.msra.mxu0 %v1200
  %1279 = vmatpush.bf16.msra.mxu0 %v1196
  %1280 = vmatmul.bf16.gmra.mxu0 %v1066
  %v1281 = vpop.f32.mrf.mxu0
  %v1282 = vadd.f32 0.0, %v1281
  %v1283 = vpop.f32.mrf.mxu0
  %1284 = vdwg.mxu0
  %1285 = vmatpush.bf16.msra.mxu0 %v1225
  %1286 = vmatpush.bf16.msra.mxu0 %v1221
  %1287 = vmatpush.bf16.msra.mxu0 %v1217
  %1288 = vmatpush.bf16.msra.mxu0 %v1213
  %1289 = vmatpush.bf16.msra.mxu0 %v1209
  %1290 = vmatpush.bf16.msra.mxu0 %v1205
  %1291 = vmatpush.bf16.msra.mxu0 %v1201
  %1292 = vmatpush.bf16.msra.mxu0 %v1197
  %1293 = vmatmul.bf16.gmra.mxu0 %v1066
  %v1294 = vpop.f32.mrf.mxu0
  %v1295 = vadd.f32 0.0, %v1294
  %v1296 = vpop.f32.mrf.mxu0
  %1297 = vdwg.mxu0
  %1298 = vmatpush.bf16.msra.mxu0 %v1226
  %1299 = vmatpush.bf16.msra.mxu0 %v1222
  %1300 = vmatpush.bf16.msra.mxu0 %v1218
  %1301 = vmatpush.bf16.msra.mxu0 %v1214
  %1302 = vmatpush.bf16.msra.mxu0 %v1210
  %1303 = vmatpush.bf16.msra.mxu0 %v1206
  %1304 = vmatpush.bf16.msra.mxu0 %v1202
  %1305 = vmatpush.bf16.msra.mxu0 %v1198
  %1306 = vmatmul.bf16.gmra.mxu0 %v1066
  %v1307 = vpop.f32.mrf.mxu0
  %v1308 = vadd.f32 0.0, %v1307
  %v1309 = vpop.f32.mrf.mxu0
  %1310 = vdwg.mxu0
  %v1315 = vrot.slane %v1282, 6
  %v1316 = vrot.slane %v1295, 4
  %v1317 = vrot.slane %v1308, 2
  %v1318 = vsel %vm276, %v1269, %v1315
  %v1319 = vsel %vm278, %v1316, %v1317
  %v1320 = vsel %vm280, %v1318, %v1319
  %v1322 = vadd.f32 %v1064, %v1320
  %v1323 = vxor.u32 %v1322, 2147483648
  %v1324 = vmul.f32 %v1323, 1.442695
  %v1325 = vpow.pop %v1324
  %v1326 = vadd.f32 %v1325, 1.0
  %v1327 = vrcp.pop %v1326
  %v1328 = vmul.f32 %v1326, %v1327
  %v1329 = vsub.f32 1.0, %v1328
  %v1330 = vmul.f32 %v1327, %v1329
  %v1331 = vadd.f32 %v1327, %v1330
  %vm1332 = vweird.f32 %v1326
  %vm1333 = vweird.f32 %v1327
  %vm1334 = vmor %vm1332, %vm1333
  %v1335 = vsel %vm1334, %v1327, %v1331
  %v1336 = vand.u32 2147483647, %v1326
  %vm1337 = vcmp.eq.f32.partialorder %v1336, 8.507059e+37
  %v1338 = vand.u32 %v1326, 2147483648
  %v1339 = vor.u32 1.1754944e-38, %v1338
  %v1340 = vsel %vm1337, %v1339, %v1335
  %v1341 = vmul.f32 1.0, %v1340
  %v1343 = vrot.slane %v1322, 2
  %v1345 = vxor.u32 %v1343, 2147483648
  %v1346 = vmul.f32 %v1345, 1.442695
  %v1347 = vpow.pop %v1346
  %v1348 = vadd.f32 %v1347, 1.0
  %v1349 = vrcp.pop %v1348
  %v1350 = vmul.f32 %v1348, %v1349
  %v1351 = vsub.f32 1.0, %v1350
  %v1352 = vmul.f32 %v1349, %v1351
  %v1353 = vadd.f32 %v1349, %v1352
  %vm1354 = vweird.f32 %v1348
  %vm1355 = vweird.f32 %v1349
  %vm1356 = vmor %vm1354, %vm1355
  %v1357 = vsel %vm1356, %v1349, %v1353
  %v1358 = vand.u32 2147483647, %v1348
  %vm1359 = vcmp.eq.f32.partialorder %v1358, 8.507059e+37
  %v1360 = vand.u32 %v1348, 2147483648
  %v1361 = vor.u32 1.1754944e-38, %v1360
  %v1362 = vsel %vm1359, %v1361, %v1357
  %v1363 = vmul.f32 1.0, %v1362
  %v1364 = vrot.slane %v1322, 4
  %v1366 = vtanh.pop %v1364
  %v1367 = vrot.slane %v1322, 6
  %v1369 = vxor.u32 %v1367, 2147483648
  %v1370 = vmul.f32 %v1369, 1.442695
  %v1371 = vpow.pop %v1370
  %v1372 = vadd.f32 %v1371, 1.0
  %v1373 = vrcp.pop %v1372
  %v1374 = vmul.f32 %v1372, %v1373
  %v1375 = vsub.f32 1.0, %v1374
  %v1376 = vmul.f32 %v1373, %v1375
  %v1377 = vadd.f32 %v1373, %v1376
  %vm1378 = vweird.f32 %v1372
  %vm1379 = vweird.f32 %v1373
  %vm1380 = vmor %vm1378, %vm1379
  %v1381 = vsel %vm1380, %v1373, %v1377
  %v1382 = vand.u32 2147483647, %v1372
  %vm1383 = vcmp.eq.f32.partialorder %v1382, 8.507059e+37
  %v1384 = vand.u32 %v1372, 2147483648
  %v1385 = vor.u32 1.1754944e-38, %v1384
  %v1386 = vsel %vm1383, %v1385, %v1381
  %v1387 = vmul.f32 1.0, %v1386
  %v1388 = vld [vmem:[#allocation3] sm:$0x3]
  %v1389 = vmul.f32 %v1363, %v1388
  %v1390 = vmul.f32 %v1341, %v1366
  %v1391 = vadd.f32 %v1389, %v1390
  %v1392 = vtanh.pop %v1391
  %v1393 = vmul.f32 %v1387, %v1392
  %s1394 = sadd.s32 %s21, 3
  %v1395 = vstv %s1394
  %vm1396 = vcmp.lt.s32.totalorder %v1395, %v20
  %v1397 = vsel %vm1396, 1, 0
  %1398 = vset.pattern.permute.xlu0 0
  %1399 = vperm.xlu0 %1398, %v1397
  %v1400 = vpop.permute.xlu0 %1399
  %vm1401 = vcmp.eq.s32.totalorder %v1400, 1
  %v1402 = vsel %vm1401, %v1393, %v1065
  %1403 = vst [vmem:[#allocation2] sm:$0x3] %v1402
  %v1404 = vld [vmem:[#allocation3] sm:$0x3]
  %v1405 = vsel %vm1401, %v1391, %v1404
  %1406 = vst [vmem:[#allocation3] sm:$0x3] %v1405
  %v1407 = vsel %vm1401, %v1393, 0.0
  %s1408 = scalar_lea.vmem %s3, 6
  %1409 = vst [vmem:[%s1408] sm:$0x3] %v1407
  %s1410 = scalar_lea.vmem %s0, 32
  %v1411 = vld [vmem:[%s1410] sm:$0xff]
  %v1412 = vld [vmem:[#allocation2] sm:$0x3]
  %v1413 = vpack.c.bf16 %v1412, %v1412
  %v1414 = vld [vmem:[%s2] sm:$0xff]
  %v1415 = vld [vmem:[%s2 + $0x8] sm:$0xff]
  %v1416 = vld [vmem:[%s2 + $0x10] sm:$0xff]
  %v1417 = vld [vmem:[%s2 + $0x18] sm:$0xff]
  %v1418 = vld [vmem:[%s2 + $0x20] sm:$0xff]
  %v1419 = vld [vmem:[%s2 + $0x28] sm:$0xff]
  %v1420 = vld [vmem:[%s2 + $0x30] sm:$0xff]
  %v1421 = vld [vmem:[%s2 + $0x38] sm:$0xff]
  %v1422 = vld [vmem:[%s2 + $0x40] sm:$0xff]
  %v1423 = vld [vmem:[%s2 + $0x48] sm:$0xff]
  %v1424 = vld [vmem:[%s2 + $0x50] sm:$0xff]
  %v1425 = vld [vmem:[%s2 + $0x58] sm:$0xff]
  %v1426 = vld [vmem:[%s2 + $0x60] sm:$0xff]
  %v1427 = vld [vmem:[%s2 + $0x68] sm:$0xff]
  %v1428 = vld [vmem:[%s2 + $0x70] sm:$0xff]
  %v1429 = vld [vmem:[%s2 + $0x78] sm:$0xff]
  %v1430 = vld [vmem:[%s2 + $0x80] sm:$0xff]
  %v1431 = vld [vmem:[%s2 + $0x88] sm:$0xff]
  %v1432 = vld [vmem:[%s2 + $0x90] sm:$0xff]
  %v1433 = vld [vmem:[%s2 + $0x98] sm:$0xff]
  %v1434 = vld [vmem:[%s2 + $0xa0] sm:$0xff]
  %v1435 = vld [vmem:[%s2 + $0xa8] sm:$0xff]
  %v1436 = vld [vmem:[%s2 + $0xb0] sm:$0xff]
  %v1437 = vld [vmem:[%s2 + $0xb8] sm:$0xff]
  %v1438 = vld [vmem:[%s2 + $0xc0] sm:$0xff]
  %v1439 = vld [vmem:[%s2 + $0xc8] sm:$0xff]
  %v1440 = vld [vmem:[%s2 + $0xd0] sm:$0xff]
  %v1441 = vld [vmem:[%s2 + $0xd8] sm:$0xff]
  %v1442 = vld [vmem:[%s2 + $0xe0] sm:$0xff]
  %v1443 = vld [vmem:[%s2 + $0xe8] sm:$0xff]
  %v1444 = vld [vmem:[%s2 + $0xf0] sm:$0xff]
  %v1445 = vld [vmem:[%s2 + $0xf8] sm:$0xff]
  %v1478 = vunpack.c.l.b16 %v1414
  %v1479 = vunpack.c.h.b16 %v1414
  %v1480 = vunpack.c.l.b16 %v1415
  %v1481 = vunpack.c.h.b16 %v1415
  %v1482 = vunpack.c.l.b16 %v1416
  %v1483 = vunpack.c.h.b16 %v1416
  %v1484 = vunpack.c.l.b16 %v1417
  %v1485 = vunpack.c.h.b16 %v1417
  %v1486 = vunpack.c.l.b16 %v1418
  %v1487 = vunpack.c.h.b16 %v1418
  %v1488 = vunpack.c.l.b16 %v1419
  %v1489 = vunpack.c.h.b16 %v1419
  %v1490 = vunpack.c.l.b16 %v1420
  %v1491 = vunpack.c.h.b16 %v1420
  %v1492 = vunpack.c.l.b16 %v1421
  %v1493 = vunpack.c.h.b16 %v1421
  %v1494 = vunpack.c.l.b16 %v1422
  %v1495 = vunpack.c.h.b16 %v1422
  %v1496 = vunpack.c.l.b16 %v1423
  %v1497 = vunpack.c.h.b16 %v1423
  %v1498 = vunpack.c.l.b16 %v1424
  %v1499 = vunpack.c.h.b16 %v1424
  %v1500 = vunpack.c.l.b16 %v1425
  %v1501 = vunpack.c.h.b16 %v1425
  %v1502 = vunpack.c.l.b16 %v1426
  %v1503 = vunpack.c.h.b16 %v1426
  %v1504 = vunpack.c.l.b16 %v1427
  %v1505 = vunpack.c.h.b16 %v1427
  %v1506 = vunpack.c.l.b16 %v1428
  %v1507 = vunpack.c.h.b16 %v1428
  %v1508 = vunpack.c.l.b16 %v1429
  %v1509 = vunpack.c.h.b16 %v1429
  %v1510 = vunpack.c.l.b16 %v1430
  %v1511 = vunpack.c.h.b16 %v1430
  %v1512 = vunpack.c.l.b16 %v1431
  %v1513 = vunpack.c.h.b16 %v1431
  %v1514 = vunpack.c.l.b16 %v1432
  %v1515 = vunpack.c.h.b16 %v1432
  %v1516 = vunpack.c.l.b16 %v1433
  %v1517 = vunpack.c.h.b16 %v1433
  %v1518 = vunpack.c.l.b16 %v1434
  %v1519 = vunpack.c.h.b16 %v1434
  %v1520 = vunpack.c.l.b16 %v1435
  %v1521 = vunpack.c.h.b16 %v1435
  %v1522 = vunpack.c.l.b16 %v1436
  %v1523 = vunpack.c.h.b16 %v1436
  %v1524 = vunpack.c.l.b16 %v1437
  %v1525 = vunpack.c.h.b16 %v1437
  %v1526 = vunpack.c.l.b16 %v1438
  %v1527 = vunpack.c.h.b16 %v1438
  %v1528 = vunpack.c.l.b16 %v1439
  %v1529 = vunpack.c.h.b16 %v1439
  %v1530 = vunpack.c.l.b16 %v1440
  %v1531 = vunpack.c.h.b16 %v1440
  %v1532 = vunpack.c.l.b16 %v1441
  %v1533 = vunpack.c.h.b16 %v1441
  %v1534 = vunpack.c.l.b16 %v1442
  %v1535 = vunpack.c.h.b16 %v1442
  %v1536 = vunpack.c.l.b16 %v1443
  %v1537 = vunpack.c.h.b16 %v1443
  %v1538 = vunpack.c.l.b16 %v1444
  %v1539 = vunpack.c.h.b16 %v1444
  %v1540 = vunpack.c.l.b16 %v1445
  %v1541 = vunpack.c.h.b16 %v1445
  %v1542 = vpack.c.b16 %v1482, %v1478
  %v1543 = vpack.c.b16 %v1483, %v1479
  %v1544 = vpack.c.b16 %v1484, %v1480
  %v1545 = vpack.c.b16 %v1485, %v1481
  %v1546 = vpack.c.b16 %v1490, %v1486
  %v1547 = vpack.c.b16 %v1491, %v1487
  %v1548 = vpack.c.b16 %v1492, %v1488
  %v1549 = vpack.c.b16 %v1493, %v1489
  %v1550 = vpack.c.b16 %v1498, %v1494
  %v1551 = vpack.c.b16 %v1499, %v1495
  %v1552 = vpack.c.b16 %v1500, %v1496
  %v1553 = vpack.c.b16 %v1501, %v1497
  %v1554 = vpack.c.b16 %v1506, %v1502
  %v1555 = vpack.c.b16 %v1507, %v1503
  %v1556 = vpack.c.b16 %v1508, %v1504
  %v1557 = vpack.c.b16 %v1509, %v1505
  %v1558 = vpack.c.b16 %v1514, %v1510
  %v1559 = vpack.c.b16 %v1515, %v1511
  %v1560 = vpack.c.b16 %v1516, %v1512
  %v1561 = vpack.c.b16 %v1517, %v1513
  %v1562 = vpack.c.b16 %v1522, %v1518
  %v1563 = vpack.c.b16 %v1523, %v1519
  %v1564 = vpack.c.b16 %v1524, %v1520
  %v1565 = vpack.c.b16 %v1525, %v1521
  %v1566 = vpack.c.b16 %v1530, %v1526
  %v1567 = vpack.c.b16 %v1531, %v1527
  %v1568 = vpack.c.b16 %v1532, %v1528
  %v1569 = vpack.c.b16 %v1533, %v1529
  %v1570 = vpack.c.b16 %v1538, %v1534
  %v1571 = vpack.c.b16 %v1539, %v1535
  %v1572 = vpack.c.b16 %v1540, %v1536
  %v1573 = vpack.c.b16 %v1541, %v1537
  %1606 = vmatpush.bf16.msra.mxu0 %v1570
  %1607 = vmatpush.bf16.msra.mxu0 %v1566
  %1608 = vmatpush.bf16.msra.mxu0 %v1562
  %1609 = vmatpush.bf16.msra.mxu0 %v1558
  %1610 = vmatpush.bf16.msra.mxu0 %v1554
  %1611 = vmatpush.bf16.msra.mxu0 %v1550
  %1612 = vmatpush.bf16.msra.mxu0 %v1546
  %1613 = vmatpush.bf16.msra.mxu0 %v1542
  %1614 = vmatmul.bf16.gmra.mxu0 %v1413
  %v1615 = vpop.f32.mrf.mxu0
  %v1616 = vadd.f32 0.0, %v1615
  %v1617 = vpop.f32.mrf.mxu0
  %1618 = vdwg.mxu0
  %1619 = vmatpush.bf16.msra.mxu0 %v1571
  %1620 = vmatpush.bf16.msra.mxu0 %v1567
  %1621 = vmatpush.bf16.msra.mxu0 %v1563
  %1622 = vmatpush.bf16.msra.mxu0 %v1559
  %1623 = vmatpush.bf16.msra.mxu0 %v1555
  %1624 = vmatpush.bf16.msra.mxu0 %v1551
  %1625 = vmatpush.bf16.msra.mxu0 %v1547
  %1626 = vmatpush.bf16.msra.mxu0 %v1543
  %1627 = vmatmul.bf16.gmra.mxu0 %v1413
  %v1628 = vpop.f32.mrf.mxu0
  %v1629 = vadd.f32 0.0, %v1628
  %v1630 = vpop.f32.mrf.mxu0
  %1631 = vdwg.mxu0
  %1632 = vmatpush.bf16.msra.mxu0 %v1572
  %1633 = vmatpush.bf16.msra.mxu0 %v1568
  %1634 = vmatpush.bf16.msra.mxu0 %v1564
  %1635 = vmatpush.bf16.msra.mxu0 %v1560
  %1636 = vmatpush.bf16.msra.mxu0 %v1556
  %1637 = vmatpush.bf16.msra.mxu0 %v1552
  %1638 = vmatpush.bf16.msra.mxu0 %v1548
  %1639 = vmatpush.bf16.msra.mxu0 %v1544
  %1640 = vmatmul.bf16.gmra.mxu0 %v1413
  %v1641 = vpop.f32.mrf.mxu0
  %v1642 = vadd.f32 0.0, %v1641
  %v1643 = vpop.f32.mrf.mxu0
  %1644 = vdwg.mxu0
  %1645 = vmatpush.bf16.msra.mxu0 %v1573
  %1646 = vmatpush.bf16.msra.mxu0 %v1569
  %1647 = vmatpush.bf16.msra.mxu0 %v1565
  %1648 = vmatpush.bf16.msra.mxu0 %v1561
  %1649 = vmatpush.bf16.msra.mxu0 %v1557
  %1650 = vmatpush.bf16.msra.mxu0 %v1553
  %1651 = vmatpush.bf16.msra.mxu0 %v1549
  %1652 = vmatpush.bf16.msra.mxu0 %v1545
  %1653 = vmatmul.bf16.gmra.mxu0 %v1413
  %v1654 = vpop.f32.mrf.mxu0
  %v1655 = vadd.f32 0.0, %v1654
  %v1656 = vpop.f32.mrf.mxu0
  %1657 = vdwg.mxu0
  %v1662 = vrot.slane %v1629, 6
  %v1663 = vrot.slane %v1642, 4
  %v1664 = vrot.slane %v1655, 2
  %v1665 = vsel %vm276, %v1616, %v1662
  %v1666 = vsel %vm278, %v1663, %v1664
  %v1667 = vsel %vm280, %v1665, %v1666
  %v1669 = vadd.f32 %v1411, %v1667
  %v1670 = vxor.u32 %v1669, 2147483648
  %v1671 = vmul.f32 %v1670, 1.442695
  %v1672 = vpow.pop %v1671
  %v1673 = vadd.f32 %v1672, 1.0
  %v1674 = vrcp.pop %v1673
  %v1675 = vmul.f32 %v1673, %v1674
  %v1676 = vsub.f32 1.0, %v1675
  %v1677 = vmul.f32 %v1674, %v1676
  %v1678 = vadd.f32 %v1674, %v1677
  %vm1679 = vweird.f32 %v1673
  %vm1680 = vweird.f32 %v1674
  %vm1681 = vmor %vm1679, %vm1680
  %v1682 = vsel %vm1681, %v1674, %v1678
  %v1683 = vand.u32 2147483647, %v1673
  %vm1684 = vcmp.eq.f32.partialorder %v1683, 8.507059e+37
  %v1685 = vand.u32 %v1673, 2147483648
  %v1686 = vor.u32 1.1754944e-38, %v1685
  %v1687 = vsel %vm1684, %v1686, %v1682
  %v1688 = vmul.f32 1.0, %v1687
  %v1690 = vrot.slane %v1669, 2
  %v1692 = vxor.u32 %v1690, 2147483648
  %v1693 = vmul.f32 %v1692, 1.442695
  %v1694 = vpow.pop %v1693
  %v1695 = vadd.f32 %v1694, 1.0
  %v1696 = vrcp.pop %v1695
  %v1697 = vmul.f32 %v1695, %v1696
  %v1698 = vsub.f32 1.0, %v1697
  %v1699 = vmul.f32 %v1696, %v1698
  %v1700 = vadd.f32 %v1696, %v1699
  %vm1701 = vweird.f32 %v1695
  %vm1702 = vweird.f32 %v1696
  %vm1703 = vmor %vm1701, %vm1702
  %v1704 = vsel %vm1703, %v1696, %v1700
  %v1705 = vand.u32 2147483647, %v1695
  %vm1706 = vcmp.eq.f32.partialorder %v1705, 8.507059e+37
  %v1707 = vand.u32 %v1695, 2147483648
  %v1708 = vor.u32 1.1754944e-38, %v1707
  %v1709 = vsel %vm1706, %v1708, %v1704
  %v1710 = vmul.f32 1.0, %v1709
  %v1711 = vrot.slane %v1669, 4
  %v1713 = vtanh.pop %v1711
  %v1714 = vrot.slane %v1669, 6
  %v1716 = vxor.u32 %v1714, 2147483648
  %v1717 = vmul.f32 %v1716, 1.442695
  %v1718 = vpow.pop %v1717
  %v1719 = vadd.f32 %v1718, 1.0
  %v1720 = vrcp.pop %v1719
  %v1721 = vmul.f32 %v1719, %v1720
  %v1722 = vsub.f32 1.0, %v1721
  %v1723 = vmul.f32 %v1720, %v1722
  %v1724 = vadd.f32 %v1720, %v1723
  %vm1725 = vweird.f32 %v1719
  %vm1726 = vweird.f32 %v1720
  %vm1727 = vmor %vm1725, %vm1726
  %v1728 = vsel %vm1727, %v1720, %v1724
  %v1729 = vand.u32 2147483647, %v1719
  %vm1730 = vcmp.eq.f32.partialorder %v1729, 8.507059e+37
  %v1731 = vand.u32 %v1719, 2147483648
  %v1732 = vor.u32 1.1754944e-38, %v1731
  %v1733 = vsel %vm1730, %v1732, %v1728
  %v1734 = vmul.f32 1.0, %v1733
  %v1735 = vld [vmem:[#allocation3] sm:$0x3]
  %v1736 = vmul.f32 %v1710, %v1735
  %v1737 = vmul.f32 %v1688, %v1713
  %v1738 = vadd.f32 %v1736, %v1737
  %v1739 = vtanh.pop %v1738
  %v1740 = vmul.f32 %v1734, %v1739
  %s1741 = sadd.s32 %s21, 4
  %v1742 = vstv %s1741
  %vm1743 = vcmp.lt.s32.totalorder %v1742, %v20
  %v1744 = vsel %vm1743, 1, 0
  %1745 = vset.pattern.permute.xlu0 0
  %1746 = vperm.xlu0 %1745, %v1744
  %v1747 = vpop.permute.xlu0 %1746
  %vm1748 = vcmp.eq.s32.totalorder %v1747, 1
  %v1749 = vsel %vm1748, %v1740, %v1412
  %1750 = vst [vmem:[#allocation2] sm:$0x3] %v1749
  %v1751 = vld [vmem:[#allocation3] sm:$0x3]
  %v1752 = vsel %vm1748, %v1738, %v1751
  %1753 = vst [vmem:[#allocation3] sm:$0x3] %v1752
  %v1754 = vsel %vm1748, %v1740, 0.0
  %s1755 = scalar_lea.vmem %s3, 8
  %1756 = vst [vmem:[%s1755] sm:$0x3] %v1754
  %s1757 = scalar_lea.vmem %s0, 40
  %v1758 = vld [vmem:[%s1757] sm:$0xff]
  %v1759 = vld [vmem:[#allocation2] sm:$0x3]
  %v1760 = vpack.c.bf16 %v1759, %v1759
  %v1761 = vld [vmem:[%s2] sm:$0xff]
  %v1762 = vld [vmem:[%s2 + $0x8] sm:$0xff]
  %v1763 = vld [vmem:[%s2 + $0x10] sm:$0xff]
  %v1764 = vld [vmem:[%s2 + $0x18] sm:$0xff]
  %v1765 = vld [vmem:[%s2 + $0x20] sm:$0xff]
  %v1766 = vld [vmem:[%s2 + $0x28] sm:$0xff]
  %v1767 = vld [vmem:[%s2 + $0x30] sm:$0xff]
  %v1768 = vld [vmem:[%s2 + $0x38] sm:$0xff]
  %v1769 = vld [vmem:[%s2 + $0x40] sm:$0xff]
  %v1770 = vld [vmem:[%s2 + $0x48] sm:$0xff]
  %v1771 = vld [vmem:[%s2 + $0x50] sm:$0xff]
  %v1772 = vld [vmem:[%s2 + $0x58] sm:$0xff]
  %v1773 = vld [vmem:[%s2 + $0x60] sm:$0xff]
  %v1774 = vld [vmem:[%s2 + $0x68] sm:$0xff]
  %v1775 = vld [vmem:[%s2 + $0x70] sm:$0xff]
  %v1776 = vld [vmem:[%s2 + $0x78] sm:$0xff]
  %v1777 = vld [vmem:[%s2 + $0x80] sm:$0xff]
  %v1778 = vld [vmem:[%s2 + $0x88] sm:$0xff]
  %v1779 = vld [vmem:[%s2 + $0x90] sm:$0xff]
  %v1780 = vld [vmem:[%s2 + $0x98] sm:$0xff]
  %v1781 = vld [vmem:[%s2 + $0xa0] sm:$0xff]
  %v1782 = vld [vmem:[%s2 + $0xa8] sm:$0xff]
  %v1783 = vld [vmem:[%s2 + $0xb0] sm:$0xff]
  %v1784 = vld [vmem:[%s2 + $0xb8] sm:$0xff]
  %v1785 = vld [vmem:[%s2 + $0xc0] sm:$0xff]
  %v1786 = vld [vmem:[%s2 + $0xc8] sm:$0xff]
  %v1787 = vld [vmem:[%s2 + $0xd0] sm:$0xff]
  %v1788 = vld [vmem:[%s2 + $0xd8] sm:$0xff]
  %v1789 = vld [vmem:[%s2 + $0xe0] sm:$0xff]
  %v1790 = vld [vmem:[%s2 + $0xe8] sm:$0xff]
  %v1791 = vld [vmem:[%s2 + $0xf0] sm:$0xff]
  %v1792 = vld [vmem:[%s2 + $0xf8] sm:$0xff]
  %v1825 = vunpack.c.l.b16 %v1761
  %v1826 = vunpack.c.h.b16 %v1761
  %v1827 = vunpack.c.l.b16 %v1762
  %v1828 = vunpack.c.h.b16 %v1762
  %v1829 = vunpack.c.l.b16 %v1763
  %v1830 = vunpack.c.h.b16 %v1763
  %v1831 = vunpack.c.l.b16 %v1764
  %v1832 = vunpack.c.h.b16 %v1764
  %v1833 = vunpack.c.l.b16 %v1765
  %v1834 = vunpack.c.h.b16 %v1765
  %v1835 = vunpack.c.l.b16 %v1766
  %v1836 = vunpack.c.h.b16 %v1766
  %v1837 = vunpack.c.l.b16 %v1767
  %v1838 = vunpack.c.h.b16 %v1767
  %v1839 = vunpack.c.l.b16 %v1768
  %v1840 = vunpack.c.h.b16 %v1768
  %v1841 = vunpack.c.l.b16 %v1769
  %v1842 = vunpack.c.h.b16 %v1769
  %v1843 = vunpack.c.l.b16 %v1770
  %v1844 = vunpack.c.h.b16 %v1770
  %v1845 = vunpack.c.l.b16 %v1771
  %v1846 = vunpack.c.h.b16 %v1771
  %v1847 = vunpack.c.l.b16 %v1772
  %v1848 = vunpack.c.h.b16 %v1772
  %v1849 = vunpack.c.l.b16 %v1773
  %v1850 = vunpack.c.h.b16 %v1773
  %v1851 = vunpack.c.l.b16 %v1774
  %v1852 = vunpack.c.h.b16 %v1774
  %v1853 = vunpack.c.l.b16 %v1775
  %v1854 = vunpack.c.h.b16 %v1775
  %v1855 = vunpack.c.l.b16 %v1776
  %v1856 = vunpack.c.h.b16 %v1776
  %v1857 = vunpack.c.l.b16 %v1777
  %v1858 = vunpack.c.h.b16 %v1777
  %v1859 = vunpack.c.l.b16 %v1778
  %v1860 = vunpack.c.h.b16 %v1778
  %v1861 = vunpack.c.l.b16 %v1779
  %v1862 = vunpack.c.h.b16 %v1779
  %v1863 = vunpack.c.l.b16 %v1780
  %v1864 = vunpack.c.h.b16 %v1780
  %v1865 = vunpack.c.l.b16 %v1781
  %v1866 = vunpack.c.h.b16 %v1781
  %v1867 = vunpack.c.l.b16 %v1782
  %v1868 = vunpack.c.h.b16 %v1782
  %v1869 = vunpack.c.l.b16 %v1783
  %v1870 = vunpack.c.h.b16 %v1783
  %v1871 = vunpack.c.l.b16 %v1784
  %v1872 = vunpack.c.h.b16 %v1784
  %v1873 = vunpack.c.l.b16 %v1785
  %v1874 = vunpack.c.h.b16 %v1785
  %v1875 = vunpack.c.l.b16 %v1786
  %v1876 = vunpack.c.h.b16 %v1786
  %v1877 = vunpack.c.l.b16 %v1787
  %v1878 = vunpack.c.h.b16 %v1787
  %v1879 = vunpack.c.l.b16 %v1788
  %v1880 = vunpack.c.h.b16 %v1788
  %v1881 = vunpack.c.l.b16 %v1789
  %v1882 = vunpack.c.h.b16 %v1789
  %v1883 = vunpack.c.l.b16 %v1790
  %v1884 = vunpack.c.h.b16 %v1790
  %v1885 = vunpack.c.l.b16 %v1791
  %v1886 = vunpack.c.h.b16 %v1791
  %v1887 = vunpack.c.l.b16 %v1792
  %v1888 = vunpack.c.h.b16 %v1792
  %v1889 = vpack.c.b16 %v1829, %v1825
  %v1890 = vpack.c.b16 %v1830, %v1826
  %v1891 = vpack.c.b16 %v1831, %v1827
  %v1892 = vpack.c.b16 %v1832, %v1828
  %v1893 = vpack.c.b16 %v1837, %v1833
  %v1894 = vpack.c.b16 %v1838, %v1834
  %v1895 = vpack.c.b16 %v1839, %v1835
  %v1896 = vpack.c.b16 %v1840, %v1836
  %v1897 = vpack.c.b16 %v1845, %v1841
  %v1898 = vpack.c.b16 %v1846, %v1842
  %v1899 = vpack.c.b16 %v1847, %v1843
  %v1900 = vpack.c.b16 %v1848, %v1844
  %v1901 = vpack.c.b16 %v1853, %v1849
  %v1902 = vpack.c.b16 %v1854, %v1850
  %v1903 = vpack.c.b16 %v1855, %v1851
  %v1904 = vpack.c.b16 %v1856, %v1852
  %v1905 = vpack.c.b16 %v1861, %v1857
  %v1906 = vpack.c.b16 %v1862, %v1858
  %v1907 = vpack.c.b16 %v1863, %v1859
  %v1908 = vpack.c.b16 %v1864, %v1860
  %v1909 = vpack.c.b16 %v1869, %v1865
  %v1910 = vpack.c.b16 %v1870, %v1866
  %v1911 = vpack.c.b16 %v1871, %v1867
  %v1912 = vpack.c.b16 %v1872, %v1868
  %v1913 = vpack.c.b16 %v1877, %v1873
  %v1914 = vpack.c.b16 %v1878, %v1874
  %v1915 = vpack.c.b16 %v1879, %v1875
  %v1916 = vpack.c.b16 %v1880, %v1876
  %v1917 = vpack.c.b16 %v1885, %v1881
  %v1918 = vpack.c.b16 %v1886, %v1882
  %v1919 = vpack.c.b16 %v1887, %v1883
  %v1920 = vpack.c.b16 %v1888, %v1884
  %1953 = vmatpush.bf16.msra.mxu0 %v1917
  %1954 = vmatpush.bf16.msra.mxu0 %v1913
  %1955 = vmatpush.bf16.msra.mxu0 %v1909
  %1956 = vmatpush.bf16.msra.mxu0 %v1905
  %1957 = vmatpush.bf16.msra.mxu0 %v1901
  %1958 = vmatpush.bf16.msra.mxu0 %v1897
  %1959 = vmatpush.bf16.msra.mxu0 %v1893
  %1960 = vmatpush.bf16.msra.mxu0 %v1889
  %1961 = vmatmul.bf16.gmra.mxu0 %v1760
  %v1962 = vpop.f32.mrf.mxu0
  %v1963 = vadd.f32 0.0, %v1962
  %v1964 = vpop.f32.mrf.mxu0
  %1965 = vdwg.mxu0
  %1966 = vmatpush.bf16.msra.mxu0 %v1918
  %1967 = vmatpush.bf16.msra.mxu0 %v1914
  %1968 = vmatpush.bf16.msra.mxu0 %v1910
  %1969 = vmatpush.bf16.msra.mxu0 %v1906
  %1970 = vmatpush.bf16.msra.mxu0 %v1902
  %1971 = vmatpush.bf16.msra.mxu0 %v1898
  %1972 = vmatpush.bf16.msra.mxu0 %v1894
  %1973 = vmatpush.bf16.msra.mxu0 %v1890
  %1974 = vmatmul.bf16.gmra.mxu0 %v1760
  %v1975 = vpop.f32.mrf.mxu0
  %v1976 = vadd.f32 0.0, %v1975
  %v1977 = vpop.f32.mrf.mxu0
  %1978 = vdwg.mxu0
  %1979 = vmatpush.bf16.msra.mxu0 %v1919
  %1980 = vmatpush.bf16.msra.mxu0 %v1915
  %1981 = vmatpush.bf16.msra.mxu0 %v1911
  %1982 = vmatpush.bf16.msra.mxu0 %v1907
  %1983 = vmatpush.bf16.msra.mxu0 %v1903
  %1984 = vmatpush.bf16.msra.mxu0 %v1899
  %1985 = vmatpush.bf16.msra.mxu0 %v1895
  %1986 = vmatpush.bf16.msra.mxu0 %v1891
  %1987 = vmatmul.bf16.gmra.mxu0 %v1760
  %v1988 = vpop.f32.mrf.mxu0
  %v1989 = vadd.f32 0.0, %v1988
  %v1990 = vpop.f32.mrf.mxu0
  %1991 = vdwg.mxu0
  %1992 = vmatpush.bf16.msra.mxu0 %v1920
  %1993 = vmatpush.bf16.msra.mxu0 %v1916
  %1994 = vmatpush.bf16.msra.mxu0 %v1912
  %1995 = vmatpush.bf16.msra.mxu0 %v1908
  %1996 = vmatpush.bf16.msra.mxu0 %v1904
  %1997 = vmatpush.bf16.msra.mxu0 %v1900
  %1998 = vmatpush.bf16.msra.mxu0 %v1896
  %1999 = vmatpush.bf16.msra.mxu0 %v1892
  %2000 = vmatmul.bf16.gmra.mxu0 %v1760
  %v2001 = vpop.f32.mrf.mxu0
  %v2002 = vadd.f32 0.0, %v2001
  %v2003 = vpop.f32.mrf.mxu0
  %2004 = vdwg.mxu0
  %v2009 = vrot.slane %v1976, 6
  %v2010 = vrot.slane %v1989, 4
  %v2011 = vrot.slane %v2002, 2
  %v2012 = vsel %vm276, %v1963, %v2009
  %v2013 = vsel %vm278, %v2010, %v2011
  %v2014 = vsel %vm280, %v2012, %v2013
  %v2016 = vadd.f32 %v1758, %v2014
  %v2017 = vxor.u32 %v2016, 2147483648
  %v2018 = vmul.f32 %v2017, 1.442695
  %v2019 = vpow.pop %v2018
  %v2020 = vadd.f32 %v2019, 1.0
  %v2021 = vrcp.pop %v2020
  %v2022 = vmul.f32 %v2020, %v2021
  %v2023 = vsub.f32 1.0, %v2022
  %v2024 = vmul.f32 %v2021, %v2023
  %v2025 = vadd.f32 %v2021, %v2024
  %vm2026 = vweird.f32 %v2020
  %vm2027 = vweird.f32 %v2021
  %vm2028 = vmor %vm2026, %vm2027
  %v2029 = vsel %vm2028, %v2021, %v2025
  %v2030 = vand.u32 2147483647, %v2020
  %vm2031 = vcmp.eq.f32.partialorder %v2030, 8.507059e+37
  %v2032 = vand.u32 %v2020, 2147483648
  %v2033 = vor.u32 1.1754944e-38, %v2032
  %v2034 = vsel %vm2031, %v2033, %v2029
  %v2035 = vmul.f32 1.0, %v2034
  %v2037 = vrot.slane %v2016, 2
  %v2039 = vxor.u32 %v2037, 2147483648
  %v2040 = vmul.f32 %v2039, 1.442695
  %v2041 = vpow.pop %v2040
  %v2042 = vadd.f32 %v2041, 1.0
  %v2043 = vrcp.pop %v2042
  %v2044 = vmul.f32 %v2042, %v2043
  %v2045 = vsub.f32 1.0, %v2044
  %v2046 = vmul.f32 %v2043, %v2045
  %v2047 = vadd.f32 %v2043, %v2046
  %vm2048 = vweird.f32 %v2042
  %vm2049 = vweird.f32 %v2043
  %vm2050 = vmor %vm2048, %vm2049
  %v2051 = vsel %vm2050, %v2043, %v2047
  %v2052 = vand.u32 2147483647, %v2042
  %vm2053 = vcmp.eq.f32.partialorder %v2052, 8.507059e+37
  %v2054 = vand.u32 %v2042, 2147483648
  %v2055 = vor.u32 1.1754944e-38, %v2054
  %v2056 = vsel %vm2053, %v2055, %v2051
  %v2057 = vmul.f32 1.0, %v2056
  %v2058 = vrot.slane %v2016, 4
  %v2060 = vtanh.pop %v2058
  %v2061 = vrot.slane %v2016, 6
  %v2063 = vxor.u32 %v2061, 2147483648
  %v2064 = vmul.f32 %v2063, 1.442695
  %v2065 = vpow.pop %v2064
  %v2066 = vadd.f32 %v2065, 1.0
  %v2067 = vrcp.pop %v2066
  %v2068 = vmul.f32 %v2066, %v2067
  %v2069 = vsub.f32 1.0, %v2068
  %v2070 = vmul.f32 %v2067, %v2069
  %v2071 = vadd.f32 %v2067, %v2070
  %vm2072 = vweird.f32 %v2066
  %vm2073 = vweird.f32 %v2067
  %vm2074 = vmor %vm2072, %vm2073
  %v2075 = vsel %vm2074, %v2067, %v2071
  %v2076 = vand.u32 2147483647, %v2066
  %vm2077 = vcmp.eq.f32.partialorder %v2076, 8.507059e+37
  %v2078 = vand.u32 %v2066, 2147483648
  %v2079 = vor.u32 1.1754944e-38, %v2078
  %v2080 = vsel %vm2077, %v2079, %v2075
  %v2081 = vmul.f32 1.0, %v2080
  %v2082 = vld [vmem:[#allocation3] sm:$0x3]
  %v2083 = vmul.f32 %v2057, %v2082
  %v2084 = vmul.f32 %v2035, %v2060
  %v2085 = vadd.f32 %v2083, %v2084
  %v2086 = vtanh.pop %v2085
  %v2087 = vmul.f32 %v2081, %v2086
  %s2088 = sadd.s32 %s21, 5
  %v2089 = vstv %s2088
  %vm2090 = vcmp.lt.s32.totalorder %v2089, %v20
  %v2091 = vsel %vm2090, 1, 0
  %2092 = vset.pattern.permute.xlu0 0
  %2093 = vperm.xlu0 %2092, %v2091
  %v2094 = vpop.permute.xlu0 %2093
  %vm2095 = vcmp.eq.s32.totalorder %v2094, 1
  %v2096 = vsel %vm2095, %v2087, %v1759
  %2097 = vst [vmem:[#allocation2] sm:$0x3] %v2096
  %v2098 = vld [vmem:[#allocation3] sm:$0x3]
  %v2099 = vsel %vm2095, %v2085, %v2098
  %2100 = vst [vmem:[#allocation3] sm:$0x3] %v2099
  %v2101 = vsel %vm2095, %v2087, 0.0
  %s2102 = scalar_lea.vmem %s3, 10
  %2103 = vst [vmem:[%s2102] sm:$0x3] %v2101
  %s2104 = scalar_lea.vmem %s0, 48
  %v2105 = vld [vmem:[%s2104] sm:$0xff]
  %v2106 = vld [vmem:[#allocation2] sm:$0x3]
  %v2107 = vpack.c.bf16 %v2106, %v2106
  %v2108 = vld [vmem:[%s2] sm:$0xff]
  %v2109 = vld [vmem:[%s2 + $0x8] sm:$0xff]
  %v2110 = vld [vmem:[%s2 + $0x10] sm:$0xff]
  %v2111 = vld [vmem:[%s2 + $0x18] sm:$0xff]
  %v2112 = vld [vmem:[%s2 + $0x20] sm:$0xff]
  %v2113 = vld [vmem:[%s2 + $0x28] sm:$0xff]
  %v2114 = vld [vmem:[%s2 + $0x30] sm:$0xff]
  %v2115 = vld [vmem:[%s2 + $0x38] sm:$0xff]
  %v2116 = vld [vmem:[%s2 + $0x40] sm:$0xff]
  %v2117 = vld [vmem:[%s2 + $0x48] sm:$0xff]
  %v2118 = vld [vmem:[%s2 + $0x50] sm:$0xff]
  %v2119 = vld [vmem:[%s2 + $0x58] sm:$0xff]
  %v2120 = vld [vmem:[%s2 + $0x60] sm:$0xff]
  %v2121 = vld [vmem:[%s2 + $0x68] sm:$0xff]
  %v2122 = vld [vmem:[%s2 + $0x70] sm:$0xff]
  %v2123 = vld [vmem:[%s2 + $0x78] sm:$0xff]
  %v2124 = vld [vmem:[%s2 + $0x80] sm:$0xff]
  %v2125 = vld [vmem:[%s2 + $0x88] sm:$0xff]
  %v2126 = vld [vmem:[%s2 + $0x90] sm:$0xff]
  %v2127 = vld [vmem:[%s2 + $0x98] sm:$0xff]
  %v2128 = vld [vmem:[%s2 + $0xa0] sm:$0xff]
  %v2129 = vld [vmem:[%s2 + $0xa8] sm:$0xff]
  %v2130 = vld [vmem:[%s2 + $0xb0] sm:$0xff]
  %v2131 = vld [vmem:[%s2 + $0xb8] sm:$0xff]
  %v2132 = vld [vmem:[%s2 + $0xc0] sm:$0xff]
  %v2133 = vld [vmem:[%s2 + $0xc8] sm:$0xff]
  %v2134 = vld [vmem:[%s2 + $0xd0] sm:$0xff]
  %v2135 = vld [vmem:[%s2 + $0xd8] sm:$0xff]
  %v2136 = vld [vmem:[%s2 + $0xe0] sm:$0xff]
  %v2137 = vld [vmem:[%s2 + $0xe8] sm:$0xff]
  %v2138 = vld [vmem:[%s2 + $0xf0] sm:$0xff]
  %v2139 = vld [vmem:[%s2 + $0xf8] sm:$0xff]
  %v2172 = vunpack.c.l.b16 %v2108
  %v2173 = vunpack.c.h.b16 %v2108
  %v2174 = vunpack.c.l.b16 %v2109
  %v2175 = vunpack.c.h.b16 %v2109
  %v2176 = vunpack.c.l.b16 %v2110
  %v2177 = vunpack.c.h.b16 %v2110
  %v2178 = vunpack.c.l.b16 %v2111
  %v2179 = vunpack.c.h.b16 %v2111
  %v2180 = vunpack.c.l.b16 %v2112
  %v2181 = vunpack.c.h.b16 %v2112
  %v2182 = vunpack.c.l.b16 %v2113
  %v2183 = vunpack.c.h.b16 %v2113
  %v2184 = vunpack.c.l.b16 %v2114
  %v2185 = vunpack.c.h.b16 %v2114
  %v2186 = vunpack.c.l.b16 %v2115
  %v2187 = vunpack.c.h.b16 %v2115
  %v2188 = vunpack.c.l.b16 %v2116
  %v2189 = vunpack.c.h.b16 %v2116
  %v2190 = vunpack.c.l.b16 %v2117
  %v2191 = vunpack.c.h.b16 %v2117
  %v2192 = vunpack.c.l.b16 %v2118
  %v2193 = vunpack.c.h.b16 %v2118
  %v2194 = vunpack.c.l.b16 %v2119
  %v2195 = vunpack.c.h.b16 %v2119
  %v2196 = vunpack.c.l.b16 %v2120
  %v2197 = vunpack.c.h.b16 %v2120
  %v2198 = vunpack.c.l.b16 %v2121
  %v2199 = vunpack.c.h.b16 %v2121
  %v2200 = vunpack.c.l.b16 %v2122
  %v2201 = vunpack.c.h.b16 %v2122
  %v2202 = vunpack.c.l.b16 %v2123
  %v2203 = vunpack.c.h.b16 %v2123
  %v2204 = vunpack.c.l.b16 %v2124
  %v2205 = vunpack.c.h.b16 %v2124
  %v2206 = vunpack.c.l.b16 %v2125
  %v2207 = vunpack.c.h.b16 %v2125
  %v2208 = vunpack.c.l.b16 %v2126
  %v2209 = vunpack.c.h.b16 %v2126
  %v2210 = vunpack.c.l.b16 %v2127
  %v2211 = vunpack.c.h.b16 %v2127
  %v2212 = vunpack.c.l.b16 %v2128
  %v2213 = vunpack.c.h.b16 %v2128
  %v2214 = vunpack.c.l.b16 %v2129
  %v2215 = vunpack.c.h.b16 %v2129
  %v2216 = vunpack.c.l.b16 %v2130
  %v2217 = vunpack.c.h.b16 %v2130
  %v2218 = vunpack.c.l.b16 %v2131
  %v2219 = vunpack.c.h.b16 %v2131
  %v2220 = vunpack.c.l.b16 %v2132
  %v2221 = vunpack.c.h.b16 %v2132
  %v2222 = vunpack.c.l.b16 %v2133
  %v2223 = vunpack.c.h.b16 %v2133
  %v2224 = vunpack.c.l.b16 %v2134
  %v2225 = vunpack.c.h.b16 %v2134
  %v2226 = vunpack.c.l.b16 %v2135
  %v2227 = vunpack.c.h.b16 %v2135
  %v2228 = vunpack.c.l.b16 %v2136
  %v2229 = vunpack.c.h.b16 %v2136
  %v2230 = vunpack.c.l.b16 %v2137
  %v2231 = vunpack.c.h.b16 %v2137
  %v2232 = vunpack.c.l.b16 %v2138
  %v2233 = vunpack.c.h.b16 %v2138
  %v2234 = vunpack.c.l.b16 %v2139
  %v2235 = vunpack.c.h.b16 %v2139
  %v2236 = vpack.c.b16 %v2176, %v2172
  %v2237 = vpack.c.b16 %v2177, %v2173
  %v2238 = vpack.c.b16 %v2178, %v2174
  %v2239 = vpack.c.b16 %v2179, %v2175
  %v2240 = vpack.c.b16 %v2184, %v2180
  %v2241 = vpack.c.b16 %v2185, %v2181
  %v2242 = vpack.c.b16 %v2186, %v2182
  %v2243 = vpack.c.b16 %v2187, %v2183
  %v2244 = vpack.c.b16 %v2192, %v2188
  %v2245 = vpack.c.b16 %v2193, %v2189
  %v2246 = vpack.c.b16 %v2194, %v2190
  %v2247 = vpack.c.b16 %v2195, %v2191
  %v2248 = vpack.c.b16 %v2200, %v2196
  %v2249 = vpack.c.b16 %v2201, %v2197
  %v2250 = vpack.c.b16 %v2202, %v2198
  %v2251 = vpack.c.b16 %v2203, %v2199
  %v2252 = vpack.c.b16 %v2208, %v2204
  %v2253 = vpack.c.b16 %v2209, %v2205
  %v2254 = vpack.c.b16 %v2210, %v2206
  %v2255 = vpack.c.b16 %v2211, %v2207
  %v2256 = vpack.c.b16 %v2216, %v2212
  %v2257 = vpack.c.b16 %v2217, %v2213
  %v2258 = vpack.c.b16 %v2218, %v2214
  %v2259 = vpack.c.b16 %v2219, %v2215
  %v2260 = vpack.c.b16 %v2224, %v2220
  %v2261 = vpack.c.b16 %v2225, %v2221
  %v2262 = vpack.c.b16 %v2226, %v2222
  %v2263 = vpack.c.b16 %v2227, %v2223
  %v2264 = vpack.c.b16 %v2232, %v2228
  %v2265 = vpack.c.b16 %v2233, %v2229
  %v2266 = vpack.c.b16 %v2234, %v2230
  %v2267 = vpack.c.b16 %v2235, %v2231
  %2300 = vmatpush.bf16.msra.mxu0 %v2264
  %2301 = vmatpush.bf16.msra.mxu0 %v2260
  %2302 = vmatpush.bf16.msra.mxu0 %v2256
  %2303 = vmatpush.bf16.msra.mxu0 %v2252
  %2304 = vmatpush.bf16.msra.mxu0 %v2248
  %2305 = vmatpush.bf16.msra.mxu0 %v2244
  %2306 = vmatpush.bf16.msra.mxu0 %v2240
  %2307 = vmatpush.bf16.msra.mxu0 %v2236
  %2308 = vmatmul.bf16.gmra.mxu0 %v2107
  %v2309 = vpop.f32.mrf.mxu0
  %v2310 = vadd.f32 0.0, %v2309
  %v2311 = vpop.f32.mrf.mxu0
  %2312 = vdwg.mxu0
  %2313 = vmatpush.bf16.msra.mxu0 %v2265
  %2314 = vmatpush.bf16.msra.mxu0 %v2261
  %2315 = vmatpush.bf16.msra.mxu0 %v2257
  %2316 = vmatpush.bf16.msra.mxu0 %v2253
  %2317 = vmatpush.bf16.msra.mxu0 %v2249
  %2318 = vmatpush.bf16.msra.mxu0 %v2245
  %2319 = vmatpush.bf16.msra.mxu0 %v2241
  %2320 = vmatpush.bf16.msra.mxu0 %v2237
  %2321 = vmatmul.bf16.gmra.mxu0 %v2107
  %v2322 = vpop.f32.mrf.mxu0
  %v2323 = vadd.f32 0.0, %v2322
  %v2324 = vpop.f32.mrf.mxu0
  %2325 = vdwg.mxu0
  %2326 = vmatpush.bf16.msra.mxu0 %v2266
  %2327 = vmatpush.bf16.msra.mxu0 %v2262
  %2328 = vmatpush.bf16.msra.mxu0 %v2258
  %2329 = vmatpush.bf16.msra.mxu0 %v2254
  %2330 = vmatpush.bf16.msra.mxu0 %v2250
  %2331 = vmatpush.bf16.msra.mxu0 %v2246
  %2332 = vmatpush.bf16.msra.mxu0 %v2242
  %2333 = vmatpush.bf16.msra.mxu0 %v2238
  %2334 = vmatmul.bf16.gmra.mxu0 %v2107
  %v2335 = vpop.f32.mrf.mxu0
  %v2336 = vadd.f32 0.0, %v2335
  %v2337 = vpop.f32.mrf.mxu0
  %2338 = vdwg.mxu0
  %2339 = vmatpush.bf16.msra.mxu0 %v2267
  %2340 = vmatpush.bf16.msra.mxu0 %v2263
  %2341 = vmatpush.bf16.msra.mxu0 %v2259
  %2342 = vmatpush.bf16.msra.mxu0 %v2255
  %2343 = vmatpush.bf16.msra.mxu0 %v2251
  %2344 = vmatpush.bf16.msra.mxu0 %v2247
  %2345 = vmatpush.bf16.msra.mxu0 %v2243
  %2346 = vmatpush.bf16.msra.mxu0 %v2239
  %2347 = vmatmul.bf16.gmra.mxu0 %v2107
  %v2348 = vpop.f32.mrf.mxu0
  %v2349 = vadd.f32 0.0, %v2348
  %v2350 = vpop.f32.mrf.mxu0
  %2351 = vdwg.mxu0
  %v2356 = vrot.slane %v2323, 6
  %v2357 = vrot.slane %v2336, 4
  %v2358 = vrot.slane %v2349, 2
  %v2359 = vsel %vm276, %v2310, %v2356
  %v2360 = vsel %vm278, %v2357, %v2358
  %v2361 = vsel %vm280, %v2359, %v2360
  %v2363 = vadd.f32 %v2105, %v2361
  %v2364 = vxor.u32 %v2363, 2147483648
  %v2365 = vmul.f32 %v2364, 1.442695
  %v2366 = vpow.pop %v2365
  %v2367 = vadd.f32 %v2366, 1.0
  %v2368 = vrcp.pop %v2367
  %v2369 = vmul.f32 %v2367, %v2368
  %v2370 = vsub.f32 1.0, %v2369
  %v2371 = vmul.f32 %v2368, %v2370
  %v2372 = vadd.f32 %v2368, %v2371
  %vm2373 = vweird.f32 %v2367
  %vm2374 = vweird.f32 %v2368
  %vm2375 = vmor %vm2373, %vm2374
  %v2376 = vsel %vm2375, %v2368, %v2372
  %v2377 = vand.u32 2147483647, %v2367
  %vm2378 = vcmp.eq.f32.partialorder %v2377, 8.507059e+37
  %v2379 = vand.u32 %v2367, 2147483648
  %v2380 = vor.u32 1.1754944e-38, %v2379
  %v2381 = vsel %vm2378, %v2380, %v2376
  %v2382 = vmul.f32 1.0, %v2381
  %v2384 = vrot.slane %v2363, 2
  %v2386 = vxor.u32 %v2384, 2147483648
  %v2387 = vmul.f32 %v2386, 1.442695
  %v2388 = vpow.pop %v2387
  %v2389 = vadd.f32 %v2388, 1.0
  %v2390 = vrcp.pop %v2389
  %v2391 = vmul.f32 %v2389, %v2390
  %v2392 = vsub.f32 1.0, %v2391
  %v2393 = vmul.f32 %v2390, %v2392
  %v2394 = vadd.f32 %v2390, %v2393
  %vm2395 = vweird.f32 %v2389
  %vm2396 = vweird.f32 %v2390
  %vm2397 = vmor %vm2395, %vm2396
  %v2398 = vsel %vm2397, %v2390, %v2394
  %v2399 = vand.u32 2147483647, %v2389
  %vm2400 = vcmp.eq.f32.partialorder %v2399, 8.507059e+37
  %v2401 = vand.u32 %v2389, 2147483648
  %v2402 = vor.u32 1.1754944e-38, %v2401
  %v2403 = vsel %vm2400, %v2402, %v2398
  %v2404 = vmul.f32 1.0, %v2403
  %v2405 = vrot.slane %v2363, 4
  %v2407 = vtanh.pop %v2405
  %v2408 = vrot.slane %v2363, 6
  %v2410 = vxor.u32 %v2408, 2147483648
  %v2411 = vmul.f32 %v2410, 1.442695
  %v2412 = vpow.pop %v2411
  %v2413 = vadd.f32 %v2412, 1.0
  %v2414 = vrcp.pop %v2413
  %v2415 = vmul.f32 %v2413, %v2414
  %v2416 = vsub.f32 1.0, %v2415
  %v2417 = vmul.f32 %v2414, %v2416
  %v2418 = vadd.f32 %v2414, %v2417
  %vm2419 = vweird.f32 %v2413
  %vm2420 = vweird.f32 %v2414
  %vm2421 = vmor %vm2419, %vm2420
  %v2422 = vsel %vm2421, %v2414, %v2418
  %v2423 = vand.u32 2147483647, %v2413
  %vm2424 = vcmp.eq.f32.partialorder %v2423, 8.507059e+37
  %v2425 = vand.u32 %v2413, 2147483648
  %v2426 = vor.u32 1.1754944e-38, %v2425
  %v2427 = vsel %vm2424, %v2426, %v2422
  %v2428 = vmul.f32 1.0, %v2427
  %v2429 = vld [vmem:[#allocation3] sm:$0x3]
  %v2430 = vmul.f32 %v2404, %v2429
  %v2431 = vmul.f32 %v2382, %v2407
  %v2432 = vadd.f32 %v2430, %v2431
  %v2433 = vtanh.pop %v2432
  %v2434 = vmul.f32 %v2428, %v2433
  %s2435 = sadd.s32 %s21, 6
  %v2436 = vstv %s2435
  %vm2437 = vcmp.lt.s32.totalorder %v2436, %v20
  %v2438 = vsel %vm2437, 1, 0
  %2439 = vset.pattern.permute.xlu0 0
  %2440 = vperm.xlu0 %2439, %v2438
  %v2441 = vpop.permute.xlu0 %2440
  %vm2442 = vcmp.eq.s32.totalorder %v2441, 1
  %v2443 = vsel %vm2442, %v2434, %v2106
  %2444 = vst [vmem:[#allocation2] sm:$0x3] %v2443
  %v2445 = vld [vmem:[#allocation3] sm:$0x3]
  %v2446 = vsel %vm2442, %v2432, %v2445
  %2447 = vst [vmem:[#allocation3] sm:$0x3] %v2446
  %v2448 = vsel %vm2442, %v2434, 0.0
  %s2449 = scalar_lea.vmem %s3, 12
  %2450 = vst [vmem:[%s2449] sm:$0x3] %v2448
  %s2451 = scalar_lea.vmem %s0, 56
  %v2452 = vld [vmem:[%s2451] sm:$0xff]
  %v2453 = vld [vmem:[#allocation2] sm:$0x3]
  %v2454 = vpack.c.bf16 %v2453, %v2453
  %v2455 = vld [vmem:[%s2] sm:$0xff]
  %v2456 = vld [vmem:[%s2 + $0x8] sm:$0xff]
  %v2457 = vld [vmem:[%s2 + $0x10] sm:$0xff]
  %v2458 = vld [vmem:[%s2 + $0x18] sm:$0xff]
  %v2459 = vld [vmem:[%s2 + $0x20] sm:$0xff]
  %v2460 = vld [vmem:[%s2 + $0x28] sm:$0xff]
  %v2461 = vld [vmem:[%s2 + $0x30] sm:$0xff]
  %v2462 = vld [vmem:[%s2 + $0x38] sm:$0xff]
  %v2463 = vld [vmem:[%s2 + $0x40] sm:$0xff]
  %v2464 = vld [vmem:[%s2 + $0x48] sm:$0xff]
  %v2465 = vld [vmem:[%s2 + $0x50] sm:$0xff]
  %v2466 = vld [vmem:[%s2 + $0x58] sm:$0xff]
  %v2467 = vld [vmem:[%s2 + $0x60] sm:$0xff]
  %v2468 = vld [vmem:[%s2 + $0x68] sm:$0xff]
  %v2469 = vld [vmem:[%s2 + $0x70] sm:$0xff]
  %v2470 = vld [vmem:[%s2 + $0x78] sm:$0xff]
  %v2471 = vld [vmem:[%s2 + $0x80] sm:$0xff]
  %v2472 = vld [vmem:[%s2 + $0x88] sm:$0xff]
  %v2473 = vld [vmem:[%s2 + $0x90] sm:$0xff]
  %v2474 = vld [vmem:[%s2 + $0x98] sm:$0xff]
  %v2475 = vld [vmem:[%s2 + $0xa0] sm:$0xff]
  %v2476 = vld [vmem:[%s2 + $0xa8] sm:$0xff]
  %v2477 = vld [vmem:[%s2 + $0xb0] sm:$0xff]
  %v2478 = vld [vmem:[%s2 + $0xb8] sm:$0xff]
  %v2479 = vld [vmem:[%s2 + $0xc0] sm:$0xff]
  %v2480 = vld [vmem:[%s2 + $0xc8] sm:$0xff]
  %v2481 = vld [vmem:[%s2 + $0xd0] sm:$0xff]
  %v2482 = vld [vmem:[%s2 + $0xd8] sm:$0xff]
  %v2483 = vld [vmem:[%s2 + $0xe0] sm:$0xff]
  %v2484 = vld [vmem:[%s2 + $0xe8] sm:$0xff]
  %v2485 = vld [vmem:[%s2 + $0xf0] sm:$0xff]
  %v2486 = vld [vmem:[%s2 + $0xf8] sm:$0xff]
  %v2519 = vunpack.c.l.b16 %v2455
  %v2520 = vunpack.c.h.b16 %v2455
  %v2521 = vunpack.c.l.b16 %v2456
  %v2522 = vunpack.c.h.b16 %v2456
  %v2523 = vunpack.c.l.b16 %v2457
  %v2524 = vunpack.c.h.b16 %v2457
  %v2525 = vunpack.c.l.b16 %v2458
  %v2526 = vunpack.c.h.b16 %v2458
  %v2527 = vunpack.c.l.b16 %v2459
  %v2528 = vunpack.c.h.b16 %v2459
  %v2529 = vunpack.c.l.b16 %v2460
  %v2530 = vunpack.c.h.b16 %v2460
  %v2531 = vunpack.c.l.b16 %v2461
  %v2532 = vunpack.c.h.b16 %v2461
  %v2533 = vunpack.c.l.b16 %v2462
  %v2534 = vunpack.c.h.b16 %v2462
  %v2535 = vunpack.c.l.b16 %v2463
  %v2536 = vunpack.c.h.b16 %v2463
  %v2537 = vunpack.c.l.b16 %v2464
  %v2538 = vunpack.c.h.b16 %v2464
  %v2539 = vunpack.c.l.b16 %v2465
  %v2540 = vunpack.c.h.b16 %v2465
  %v2541 = vunpack.c.l.b16 %v2466
  %v2542 = vunpack.c.h.b16 %v2466
  %v2543 = vunpack.c.l.b16 %v2467
  %v2544 = vunpack.c.h.b16 %v2467
  %v2545 = vunpack.c.l.b16 %v2468
  %v2546 = vunpack.c.h.b16 %v2468
  %v2547 = vunpack.c.l.b16 %v2469
  %v2548 = vunpack.c.h.b16 %v2469
  %v2549 = vunpack.c.l.b16 %v2470
  %v2550 = vunpack.c.h.b16 %v2470
  %v2551 = vunpack.c.l.b16 %v2471
  %v2552 = vunpack.c.h.b16 %v2471
  %v2553 = vunpack.c.l.b16 %v2472
  %v2554 = vunpack.c.h.b16 %v2472
  %v2555 = vunpack.c.l.b16 %v2473
  %v2556 = vunpack.c.h.b16 %v2473
  %v2557 = vunpack.c.l.b16 %v2474
  %v2558 = vunpack.c.h.b16 %v2474
  %v2559 = vunpack.c.l.b16 %v2475
  %v2560 = vunpack.c.h.b16 %v2475
  %v2561 = vunpack.c.l.b16 %v2476
  %v2562 = vunpack.c.h.b16 %v2476
  %v2563 = vunpack.c.l.b16 %v2477
  %v2564 = vunpack.c.h.b16 %v2477
  %v2565 = vunpack.c.l.b16 %v2478
  %v2566 = vunpack.c.h.b16 %v2478
  %v2567 = vunpack.c.l.b16 %v2479
  %v2568 = vunpack.c.h.b16 %v2479
  %v2569 = vunpack.c.l.b16 %v2480
  %v2570 = vunpack.c.h.b16 %v2480
  %v2571 = vunpack.c.l.b16 %v2481
  %v2572 = vunpack.c.h.b16 %v2481
  %v2573 = vunpack.c.l.b16 %v2482
  %v2574 = vunpack.c.h.b16 %v2482
  %v2575 = vunpack.c.l.b16 %v2483
  %v2576 = vunpack.c.h.b16 %v2483
  %v2577 = vunpack.c.l.b16 %v2484
  %v2578 = vunpack.c.h.b16 %v2484
  %v2579 = vunpack.c.l.b16 %v2485
  %v2580 = vunpack.c.h.b16 %v2485
  %v2581 = vunpack.c.l.b16 %v2486
  %v2582 = vunpack.c.h.b16 %v2486
  %v2583 = vpack.c.b16 %v2523, %v2519
  %v2584 = vpack.c.b16 %v2524, %v2520
  %v2585 = vpack.c.b16 %v2525, %v2521
  %v2586 = vpack.c.b16 %v2526, %v2522
  %v2587 = vpack.c.b16 %v2531, %v2527
  %v2588 = vpack.c.b16 %v2532, %v2528
  %v2589 = vpack.c.b16 %v2533, %v2529
  %v2590 = vpack.c.b16 %v2534, %v2530
  %v2591 = vpack.c.b16 %v2539, %v2535
  %v2592 = vpack.c.b16 %v2540, %v2536
  %v2593 = vpack.c.b16 %v2541, %v2537
  %v2594 = vpack.c.b16 %v2542, %v2538
  %v2595 = vpack.c.b16 %v2547, %v2543
  %v2596 = vpack.c.b16 %v2548, %v2544
  %v2597 = vpack.c.b16 %v2549, %v2545
  %v2598 = vpack.c.b16 %v2550, %v2546
  %v2599 = vpack.c.b16 %v2555, %v2551
  %v2600 = vpack.c.b16 %v2556, %v2552
  %v2601 = vpack.c.b16 %v2557, %v2553
  %v2602 = vpack.c.b16 %v2558, %v2554
  %v2603 = vpack.c.b16 %v2563, %v2559
  %v2604 = vpack.c.b16 %v2564, %v2560
  %v2605 = vpack.c.b16 %v2565, %v2561
  %v2606 = vpack.c.b16 %v2566, %v2562
  %v2607 = vpack.c.b16 %v2571, %v2567
  %v2608 = vpack.c.b16 %v2572, %v2568
  %v2609 = vpack.c.b16 %v2573, %v2569
  %v2610 = vpack.c.b16 %v2574, %v2570
  %v2611 = vpack.c.b16 %v2579, %v2575
  %v2612 = vpack.c.b16 %v2580, %v2576
  %v2613 = vpack.c.b16 %v2581, %v2577
  %v2614 = vpack.c.b16 %v2582, %v2578
  %2647 = vmatpush.bf16.msra.mxu0 %v2611
  %2648 = vmatpush.bf16.msra.mxu0 %v2607
  %2649 = vmatpush.bf16.msra.mxu0 %v2603
  %2650 = vmatpush.bf16.msra.mxu0 %v2599
  %2651 = vmatpush.bf16.msra.mxu0 %v2595
  %2652 = vmatpush.bf16.msra.mxu0 %v2591
  %2653 = vmatpush.bf16.msra.mxu0 %v2587
  %2654 = vmatpush.bf16.msra.mxu0 %v2583
  %2655 = vmatmul.bf16.gmra.mxu0 %v2454
  %v2656 = vpop.f32.mrf.mxu0
  %v2657 = vadd.f32 0.0, %v2656
  %v2658 = vpop.f32.mrf.mxu0
  %2659 = vdwg.mxu0
  %2660 = vmatpush.bf16.msra.mxu0 %v2612
  %2661 = vmatpush.bf16.msra.mxu0 %v2608
  %2662 = vmatpush.bf16.msra.mxu0 %v2604
  %2663 = vmatpush.bf16.msra.mxu0 %v2600
  %2664 = vmatpush.bf16.msra.mxu0 %v2596
  %2665 = vmatpush.bf16.msra.mxu0 %v2592
  %2666 = vmatpush.bf16.msra.mxu0 %v2588
  %2667 = vmatpush.bf16.msra.mxu0 %v2584
  %2668 = vmatmul.bf16.gmra.mxu0 %v2454
  %v2669 = vpop.f32.mrf.mxu0
  %v2670 = vadd.f32 0.0, %v2669
  %v2671 = vpop.f32.mrf.mxu0
  %2672 = vdwg.mxu0
  %2673 = vmatpush.bf16.msra.mxu0 %v2613
  %2674 = vmatpush.bf16.msra.mxu0 %v2609
  %2675 = vmatpush.bf16.msra.mxu0 %v2605
  %2676 = vmatpush.bf16.msra.mxu0 %v2601
  %2677 = vmatpush.bf16.msra.mxu0 %v2597
  %2678 = vmatpush.bf16.msra.mxu0 %v2593
  %2679 = vmatpush.bf16.msra.mxu0 %v2589
  %2680 = vmatpush.bf16.msra.mxu0 %v2585
  %2681 = vmatmul.bf16.gmra.mxu0 %v2454
  %v2682 = vpop.f32.mrf.mxu0
  %v2683 = vadd.f32 0.0, %v2682
  %v2684 = vpop.f32.mrf.mxu0
  %2685 = vdwg.mxu0
  %2686 = vmatpush.bf16.msra.mxu0 %v2614
  %2687 = vmatpush.bf16.msra.mxu0 %v2610
  %2688 = vmatpush.bf16.msra.mxu0 %v2606
  %2689 = vmatpush.bf16.msra.mxu0 %v2602
  %2690 = vmatpush.bf16.msra.mxu0 %v2598
  %2691 = vmatpush.bf16.msra.mxu0 %v2594
  %2692 = vmatpush.bf16.msra.mxu0 %v2590
  %2693 = vmatpush.bf16.msra.mxu0 %v2586
  %2694 = vmatmul.bf16.gmra.mxu0 %v2454
  %v2695 = vpop.f32.mrf.mxu0
  %v2696 = vadd.f32 0.0, %v2695
  %v2697 = vpop.f32.mrf.mxu0
  %2698 = vdwg.mxu0
  %v2703 = vrot.slane %v2670, 6
  %v2704 = vrot.slane %v2683, 4
  %v2705 = vrot.slane %v2696, 2
  %v2706 = vsel %vm276, %v2657, %v2703
  %v2707 = vsel %vm278, %v2704, %v2705
  %v2708 = vsel %vm280, %v2706, %v2707
  %v2710 = vadd.f32 %v2452, %v2708
  %v2711 = vxor.u32 %v2710, 2147483648
  %v2712 = vmul.f32 %v2711, 1.442695
  %v2713 = vpow.pop %v2712
  %v2714 = vadd.f32 %v2713, 1.0
  %v2715 = vrcp.pop %v2714
  %v2716 = vmul.f32 %v2714, %v2715
  %v2717 = vsub.f32 1.0, %v2716
  %v2718 = vmul.f32 %v2715, %v2717
  %v2719 = vadd.f32 %v2715, %v2718
  %vm2720 = vweird.f32 %v2714
  %vm2721 = vweird.f32 %v2715
  %vm2722 = vmor %vm2720, %vm2721
  %v2723 = vsel %vm2722, %v2715, %v2719
  %v2724 = vand.u32 2147483647, %v2714
  %vm2725 = vcmp.eq.f32.partialorder %v2724, 8.507059e+37
  %v2726 = vand.u32 %v2714, 2147483648
  %v2727 = vor.u32 1.1754944e-38, %v2726
  %v2728 = vsel %vm2725, %v2727, %v2723
  %v2729 = vmul.f32 1.0, %v2728
  %v2731 = vrot.slane %v2710, 2
  %v2733 = vxor.u32 %v2731, 2147483648
  %v2734 = vmul.f32 %v2733, 1.442695
  %v2735 = vpow.pop %v2734
  %v2736 = vadd.f32 %v2735, 1.0
  %v2737 = vrcp.pop %v2736
  %v2738 = vmul.f32 %v2736, %v2737
  %v2739 = vsub.f32 1.0, %v2738
  %v2740 = vmul.f32 %v2737, %v2739
  %v2741 = vadd.f32 %v2737, %v2740
  %vm2742 = vweird.f32 %v2736
  %vm2743 = vweird.f32 %v2737
  %vm2744 = vmor %vm2742, %vm2743
  %v2745 = vsel %vm2744, %v2737, %v2741
  %v2746 = vand.u32 2147483647, %v2736
  %vm2747 = vcmp.eq.f32.partialorder %v2746, 8.507059e+37
  %v2748 = vand.u32 %v2736, 2147483648
  %v2749 = vor.u32 1.1754944e-38, %v2748
  %v2750 = vsel %vm2747, %v2749, %v2745
  %v2751 = vmul.f32 1.0, %v2750
  %v2752 = vrot.slane %v2710, 4
  %v2754 = vtanh.pop %v2752
  %v2755 = vrot.slane %v2710, 6
  %v2757 = vxor.u32 %v2755, 2147483648
  %v2758 = vmul.f32 %v2757, 1.442695
  %v2759 = vpow.pop %v2758
  %v2760 = vadd.f32 %v2759, 1.0
  %v2761 = vrcp.pop %v2760
  %v2762 = vmul.f32 %v2760, %v2761
  %v2763 = vsub.f32 1.0, %v2762
  %v2764 = vmul.f32 %v2761, %v2763
  %v2765 = vadd.f32 %v2761, %v2764
  %vm2766 = vweird.f32 %v2760
  %vm2767 = vweird.f32 %v2761
  %vm2768 = vmor %vm2766, %vm2767
  %v2769 = vsel %vm2768, %v2761, %v2765
  %v2770 = vand.u32 2147483647, %v2760
  %vm2771 = vcmp.eq.f32.partialorder %v2770, 8.507059e+37
  %v2772 = vand.u32 %v2760, 2147483648
  %v2773 = vor.u32 1.1754944e-38, %v2772
  %v2774 = vsel %vm2771, %v2773, %v2769
  %v2775 = vmul.f32 1.0, %v2774
  %v2776 = vld [vmem:[#allocation3] sm:$0x3]
  %v2777 = vmul.f32 %v2751, %v2776
  %v2778 = vmul.f32 %v2729, %v2754
  %v2779 = vadd.f32 %v2777, %v2778
  %v2780 = vtanh.pop %v2779
  %v2781 = vmul.f32 %v2775, %v2780
  %s2782 = sadd.s32 %s21, 7
  %v2783 = vstv %s2782
  %vm2784 = vcmp.lt.s32.totalorder %v2783, %v20
  %v2785 = vsel %vm2784, 1, 0
  %2786 = vset.pattern.permute.xlu0 0
  %2787 = vperm.xlu0 %2786, %v2785
  %v2788 = vpop.permute.xlu0 %2787
  %vm2789 = vcmp.eq.s32.totalorder %v2788, 1
  %v2790 = vsel %vm2789, %v2781, %v2453
  %2791 = vst [vmem:[#allocation2] sm:$0x3] %v2790
  %v2792 = vld [vmem:[#allocation3] sm:$0x3]
  %v2793 = vsel %vm2789, %v2779, %v2792
  %2794 = vst [vmem:[#allocation3] sm:$0x3] %v2793
  %v2795 = vsel %vm2789, %v2781, 0.0
  %s2796 = scalar_lea.vmem %s3, 14
  %2797 = vst [vmem:[%s2796] sm:$0x3] %v2795
  // Predicated region
  $region18: #{lstm_model_forward.3} parent=0 // pred_check
    _
  $region19: #{lstm_model_forward.3} parent=0 // pred_check_branch
    %2799 = sbr.rel (0) target = $region21
  $region20: #{lstm_model_forward.3} parent=0 // pred_region
    _
  $region21: #{lstm_model_forward.3} parent=0 // pred_fallthru
    _
  // Predicated region
  $region22: #{lstm_model_forward.3} parent=0 // pred_check
    _
  $region23: #{lstm_model_forward.3} parent=0 // pred_check_branch
    %2801 = sbr.rel (0) target = $region25
  $region24: #{lstm_model_forward.3} parent=0 // pred_region
    _
  $region25: #{lstm_model_forward.3} parent=0 // pred_fallthru
    _

</llo_original>
